<compile_context>
chip_gen: v7x
topology: tpu7x:2x2x1
jax: 0.10.0
libtpu: 0.0.40
codegen_flags: <defaults>
</compile_context>

<pallas_src>
import functools

import jax
import jax.numpy as jnp
from jax.experimental import pallas as pl
from jax.experimental.pallas import tpu as pltpu


# ----------------------------------------------------------------------------
# Stride-phase structure of ConvTranspose2d(k=3, stride=2, pad=1, out_pad=1):
#   out[2r+pr, 2c+pc] = sum over taps (dy,dx,ky,kx):  in[r+dy, c+dx] @ W[ky,kx]
# (out-of-range in[...] contributes zero; handled with a 1-px bottom/right pad)
# ----------------------------------------------------------------------------
_ROW_TAPS = {0: ((0, 1),), 1: ((1, 0), (0, 2))}   # parity -> ((offset, kidx),)
_PHASES = ((0, 0), (0, 1), (1, 0), (1, 1))


def _phase_taps(pr, pc):
    return tuple((dy, dx, ky, kx)
                 for (dy, ky) in _ROW_TAPS[pr]
                 for (dx, kx) in _ROW_TAPS[pc])


# ----------------------------------------------------------------------------
# Fused decoder kernel (one batch element per grid step)
# ----------------------------------------------------------------------------
def _decoder_kernel(x_ref,
                    w1p0, w1p1, w1p2, w1p3, b1_ref,
                    w2p0, w2p1, w2p2, w2p3, b2_ref,
                    out_ref,
                    xp_ref, y1p_ref, *, h, w):
    c_in = x_ref.shape[-1]          # 32
    c_mid = b1_ref.shape[-1]        # 16
    oh, ow = 2 * h, 2 * w           # layer-1 output spatial size

    # ---- stage 0: zero-pad the latent by 1 px (bottom/right) in VMEM -------
    xp_ref[...] = jnp.zeros_like(xp_ref)
    xp_ref[:, :h, :w, :] = x_ref[...]

    # ---- stage 1: ConvTranspose2d(32->16) + ReLU, phase decomposed ----------
    # Each phase: stack its taps along channels -> single matmul, K = T*32.
    w1_refs = (w1p0, w1p1, w1p2, w1p3)
    phase_out = {}
    for p_idx, (pr, pc) in enumerate(_PHASES):
        taps = _phase_taps(pr, pc)
        patches = [xp_ref[:, dy:dy + h, dx:dx + w, :].reshape(h * w, c_in)
                   for (dy, dx, _, _) in taps]
        patch = patches[0] if len(patches) == 1 else jnp.concatenate(patches, axis=1)
        acc = jnp.dot(patch, w1_refs[p_idx][...],
                      preferred_element_type=jnp.float32)
        acc = jnp.maximum(acc + b1_ref[...], 0.0)                 # bias + ReLU
        phase_out[(pr, pc)] = acc.reshape(1, h, w, c_mid)

    # Interleave the 4 phases into the (1, 2h, 2w, 16) layer-1 activation and
    # park it (zero-padded by 1 px) in VMEM scratch for layer 2.
    rows = []
    for pr in (0, 1):
        pair = jnp.stack([phase_out[(pr, 0)], phase_out[(pr, 1)]], axis=3)
        rows.append(pair.reshape(1, h, ow, c_mid))                # W interleave
    y1 = jnp.stack(rows, axis=2).reshape(1, oh, ow, c_mid)        # H interleave

    y1p_ref[...] = jnp.zeros_like(y1p_ref)
    y1p_ref[:, :oh, :ow, :] = y1

    # ---- stage 2: ConvTranspose2d(16->1) + Sigmoid, phase decomposed --------
    # Cout == 1: compute each phase as (1, K) @ (K, oh*ow) so the result is
    # lane-dense (oh*ow lanes) instead of a masked 1-lane-wide store.
    w2_refs = (w2p0, w2p1, w2p2, w2p3)
    out_rows = []
    for p_idx, (qr, qc) in enumerate(_PHASES):
        taps = _phase_taps(qr, qc)
        patches = [y1p_ref[:, dy:dy + oh, dx:dx + ow, :].reshape(oh * ow, c_mid)
                   for (dy, dx, _, _) in taps]
        patch = patches[0] if len(patches) == 1 else jnp.concatenate(patches, axis=1)
        acc = jnp.dot(w2_refs[p_idx][...], patch.T,
                      preferred_element_type=jnp.float32)         # (1, oh*ow)
        acc = acc + b2_ref[...]
        out_rows.append(pl.reciprocal(1.0 + jnp.exp(-acc)))       # sigmoid (EUP)

    out_ref[...] = jnp.concatenate(out_rows, axis=0).reshape(1, 4, oh * ow)


def _decoder_pallas(x_nhwc, w1_phases, b1_2d, w2_phases, b2_2d):
    n, h, w, c_in = x_nhwc.shape
    c_mid = b1_2d.shape[-1]
    oh, ow = 2 * h, 2 * w

    kernel = functools.partial(_decoder_kernel, h=h, w=w)
    vmem_full = pl.BlockSpec(memory_space=pltpu.MemorySpace.VMEM)  # whole array

    in_specs = ([pl.BlockSpec((1, h, w, c_in), lambda i: (i, 0, 0, 0))]
                + [vmem_full] * 5          # 4 layer-1 phase weights + bias
                + [vmem_full] * 5)         # 4 layer-2 phase weights + bias
    out_specs = pl.BlockSpec((1, 4, oh * ow), lambda i: (i, 0, 0))

    return pl.pallas_call(
        kernel,
        grid=(n,),
        in_specs=in_specs,
        out_specs=out_specs,
        out_shape=jax.ShapeDtypeStruct((n, 4, oh * ow), jnp.float32),
        scratch_shapes=[
            pltpu.VMEM((1, h + 1, w + 1, c_in), jnp.float32),      # padded x
            pltpu.VMEM((1, oh + 1, ow + 1, c_mid), jnp.float32),   # padded y1
        ],
        compiler_params=pltpu.CompilerParams(
            dimension_semantics=("parallel",)),
    )(x_nhwc, *w1_phases, b1_2d, *w2_phases, b2_2d)


# ----------------------------------------------------------------------------
# Decoder forward (NCHW in / NCHW out, matching the PyTorch module)
# ----------------------------------------------------------------------------
def decoder_forward(x_nchw, params):
    w1, b1, w2, b2 = params            # w1 (32,16,3,3), b1 (16,), w2 (16,1,3,3), b2 (1,)
    n, _, h, w = x_nchw.shape
    oh, ow = 2 * h, 2 * w

    x_nhwc = jnp.transpose(x_nchw, (0, 2, 3, 1))                  # tiny (16 KB)

    # Pre-stack per-phase im2col weights (tap order identical to the kernel's).
    w1_phases = tuple(
        jnp.concatenate([w1[:, :, ky, kx] for (_, _, ky, kx) in _phase_taps(pr, pc)],
                        axis=0)                                   # (T*32, 16)
        for (pr, pc) in _PHASES)
    w2_phases = tuple(
        jnp.concatenate([w2[:, :, ky, kx] for (_, _, ky, kx) in _phase_taps(pr, pc)],
                        axis=0).T                                 # (1, T*16)
        for (pr, pc) in _PHASES)

    out = _decoder_pallas(x_nhwc, w1_phases, b1.reshape(1, -1),
                          w2_phases, b2.reshape(1, 1))            # (N, 4, oh*ow)

    # Un-interleave the 4 output phases (free reshapes/transpose on ~8 KB).
    out = out.reshape(n, 2, 2, oh, ow)            # (n, qr, qc, s, t)
    out = out.transpose(0, 3, 1, 4, 2)            # (n, s, qr, t, qc)
    return out.reshape(n, 1, 2 * oh, 2 * ow)      # NCHW, Cout = 1


# ----------------------------------------------------------------------------
# Pure-JAX reference (ConvTranspose2d via input-dilated convolution)
# ----------------------------------------------------------------------------
def _conv_transpose_ref(x, w_pt, b):
    w = jnp.flip(w_pt, (2, 3)).transpose(1, 0, 2, 3)              # (O, I, kh, kw)
    y = jax.lax.conv_general_dilated(
        x, w, window_strides=(1, 1), padding=((1, 2), (1, 2)),
        lhs_dilation=(2, 2), dimension_numbers=("NCHW", "OIHW", "NCHW"))
    return y + b.reshape(1, -1, 1, 1)


def decoder_reference(x, params):
    w1, b1, w2, b2 = params
    y = jax.nn.relu(_conv_transpose_ref(x, w1, b1))
    return jax.nn.sigmoid(_conv_transpose_ref(y, w2, b2))


# ----------------------------------------------------------------------------
# Params (PyTorch ConvTranspose2d layout: (in_channels, out_channels, kH, kW))
# ----------------------------------------------------------------------------
def init_params(key):
    k1, k2, k3, k4 = jax.random.split(key, 4)
    bound1 = 1.0 / jnp.sqrt(32.0 * 3.0 * 3.0)
    bound2 = 1.0 / jnp.sqrt(16.0 * 3.0 * 3.0)
    w1 = jax.random.uniform(k1, (32, 16, 3, 3), jnp.float32, -bound1, bound1)
    b1 = jax.random.uniform(k2, (16,), jnp.float32, -bound1, bound1)
    w2 = jax.random.uniform(k3, (16, 1, 3, 3), jnp.float32, -bound2, bound2)
    b2 = jax.random.uniform(k4, (1,), jnp.float32, -bound2, bound2)
    return (w1, b1, w2, b2)


if __name__ == "__main__":
    key = jax.random.PRNGKey(0)
    pkey, xkey = jax.random.split(key)
    params = init_params(pkey)

    # Latent input: NCHW, 32 channels (fixed by the module), small spatial size.
    x = jax.random.normal(xkey, (2, 32, 8, 8), dtype=jnp.float32)

    out = jax.jit(decoder_forward)(x, params)
    out = jax.block_until_ready(out)

    assert out.shape == (2, 1, 32, 32), out.shape
    assert bool(jnp.all((out >= 0.0) & (out <= 1.0)))             # sigmoid range

    # Numerical check against the pure-JAX ConvTranspose reference.
    ref = decoder_reference(x, params)
    max_err = float(jnp.max(jnp.abs(out - ref)))
    assert max_err < 1e-3, f"max abs error vs reference: {max_err}"

    print("KERNEL_OK")
</pallas_src>

<mosaic_0001>
module attributes {stable_mosaic.version = 11 : i64} {
  func.func @_decoder_kernel(%arg0: i32, %arg1: memref<1x8x8x32xf32, #tpu.memory_space<vmem>>, %arg2: memref<32x16xf32, #tpu.memory_space<vmem>>, %arg3: memref<64x16xf32, #tpu.memory_space<vmem>>, %arg4: memref<64x16xf32, #tpu.memory_space<vmem>>, %arg5: memref<128x16xf32, #tpu.memory_space<vmem>>, %arg6: memref<1x16xf32, #tpu.memory_space<vmem>>, %arg7: memref<1x16xf32, #tpu.memory_space<vmem>>, %arg8: memref<1x32xf32, #tpu.memory_space<vmem>>, %arg9: memref<1x32xf32, #tpu.memory_space<vmem>>, %arg10: memref<1x64xf32, #tpu.memory_space<vmem>>, %arg11: memref<1x1xf32, #tpu.memory_space<vmem>>, %arg12: memref<1x4x256xf32, #tpu.memory_space<vmem>>, %arg13: memref<1x9x9x32xf32, #tpu.memory_space<vmem>>, %arg14: memref<1x17x17x16xf32, #tpu.memory_space<vmem>>) attributes {dimension_semantics = [#tpu.dimension_semantics<parallel>], iteration_bounds = array<i64: 2>, scalar_prefetch = 0 : i64, scratch_operands = 2 : i64, tpu.core_type = #tpu.core_type<tc>, window_params = [{transform_indices = @transform_0, window_bounds = array<i64: 1, 8, 8, 32>}, {pipeline_mode = #tpu.pipeline_mode<synchronous>, transform_indices = @transform_1, window_bounds = array<i64: 32, 16>}, {pipeline_mode = #tpu.pipeline_mode<synchronous>, transform_indices = @transform_2, window_bounds = array<i64: 64, 16>}, {pipeline_mode = #tpu.pipeline_mode<synchronous>, transform_indices = @transform_3, window_bounds = array<i64: 64, 16>}, {pipeline_mode = #tpu.pipeline_mode<synchronous>, transform_indices = @transform_4, window_bounds = array<i64: 128, 16>}, {pipeline_mode = #tpu.pipeline_mode<synchronous>, transform_indices = @transform_5, window_bounds = array<i64: 1, 16>}, {pipeline_mode = #tpu.pipeline_mode<synchronous>, transform_indices = @transform_6, window_bounds = array<i64: 1, 16>}, {pipeline_mode = #tpu.pipeline_mode<synchronous>, transform_indices = @transform_7, window_bounds = array<i64: 1, 32>}, {pipeline_mode = #tpu.pipeline_mode<synchronous>, transform_indices = @transform_8, window_bounds = array<i64: 1, 32>}, {pipeline_mode = #tpu.pipeline_mode<synchronous>, transform_indices = @transform_9, window_bounds = array<i64: 1, 64>}, {pipeline_mode = #tpu.pipeline_mode<synchronous>, transform_indices = @transform_10, window_bounds = array<i64: 1, 1>}, {transform_indices = @transform_11, window_bounds = array<i64: 1, 4, 256>}]} {
    %cst = arith.constant 0.000000e+00 : f32
    %0 = vector.broadcast %cst : f32 to vector<1x9x9x32xf32>
    %c0 = arith.constant 0 : index
    %c0_0 = arith.constant 0 : index
    %c0_1 = arith.constant 0 : index
    %c0_2 = arith.constant 0 : index
    %1 = vector.load %arg13[%c0, %c0_0, %c0_1, %c0_2] : memref<1x9x9x32xf32, #tpu.memory_space<vmem>>, vector<1x9x9x32xf32>
    tpu.vector_store %arg13[%c0, %c0_0, %c0_1, %c0_2], %0 {strides = array<i32>} : memref<1x9x9x32xf32, #tpu.memory_space<vmem>>, vector<1x9x9x32xf32>,
    %c0_3 = arith.constant 0 : index
    %c0_4 = arith.constant 0 : index
    %c0_5 = arith.constant 0 : index
    %c0_6 = arith.constant 0 : index
    %2 = vector.load %arg1[%c0_3, %c0_4, %c0_5, %c0_6] : memref<1x8x8x32xf32, #tpu.memory_space<vmem>>, vector<1x8x8x32xf32>
    %c0_7 = arith.constant 0 : index
    %c0_8 = arith.constant 0 : index
    %c0_9 = arith.constant 0 : index
    %c0_10 = arith.constant 0 : index
    %3 = vector.load %arg13[%c0_7, %c0_8, %c0_9, %c0_10] : memref<1x9x9x32xf32, #tpu.memory_space<vmem>>, vector<1x8x8x32xf32>
    tpu.vector_store %arg13[%c0_7, %c0_8, %c0_9, %c0_10], %2 {strides = array<i32>} : memref<1x9x9x32xf32, #tpu.memory_space<vmem>>, vector<1x8x8x32xf32>,
    %c0_11 = arith.constant 0 : index
    %c0_12 = arith.constant 0 : index
    %c0_13 = arith.constant 0 : index
    %c0_14 = arith.constant 0 : index
    %4 = vector.load %arg13[%c0_11, %c0_12, %c0_13, %c0_14] : memref<1x9x9x32xf32, #tpu.memory_space<vmem>>, vector<1x8x8x32xf32>
    %5 = vector.shape_cast %4 : vector<1x8x8x32xf32> to vector<64x32xf32>
    %c0_15 = arith.constant 0 : index
    %c0_16 = arith.constant 0 : index
    %6 = vector.load %arg2[%c0_15, %c0_16] : memref<32x16xf32, #tpu.memory_space<vmem>>, vector<32x16xf32>
    %cst_17 = arith.constant dense<0.000000e+00> : vector<64x16xf32>
    %7 = tpu.matmul %5, %6, %cst_17 {dimension_numbers = #tpu.dot_dimension_numbers<[1], [0], [0], [1], [0, 0, 1, 1], [], []>} : vector<64x32xf32>, vector<32x16xf32>, vector<64x16xf32> -> vector<64x16xf32>
    %c0_18 = arith.constant 0 : index
    %c0_19 = arith.constant 0 : index
    %8 = vector.load %arg6[%c0_18, %c0_19] : memref<1x16xf32, #tpu.memory_space<vmem>>, vector<1x16xf32>
    %9 = vector.broadcast %8 : vector<1x16xf32> to vector<64x16xf32>
    %10 = arith.addf %7, %9 : vector<64x16xf32>
    %cst_20 = arith.constant 0.000000e+00 : f32
    %11 = vector.broadcast %cst_20 : f32 to vector<64x16xf32>
    %12 = arith.maximumf %10, %11 : vector<64x16xf32>
    %13 = vector.shape_cast %12 : vector<64x16xf32> to vector<1x8x8x16xf32>
    %c0_21 = arith.constant 0 : index
    %c0_22 = arith.constant 0 : index
    %c1 = arith.constant 1 : index
    %c0_23 = arith.constant 0 : index
    %14 = vector.load %arg13[%c0_21, %c0_22, %c1, %c0_23] : memref<1x9x9x32xf32, #tpu.memory_space<vmem>>, vector<1x8x8x32xf32>
    %15 = vector.shape_cast %14 : vector<1x8x8x32xf32> to vector<64x32xf32>
    %c0_24 = arith.constant 0 : index
    %c0_25 = arith.constant 0 : index
    %c0_26 = arith.constant 0 : index
    %c0_27 = arith.constant 0 : index
    %16 = vector.load %arg13[%c0_24, %c0_25, %c0_26, %c0_27] : memref<1x9x9x32xf32, #tpu.memory_space<vmem>>, vector<1x8x8x32xf32>
    %17 = vector.shape_cast %16 : vector<1x8x8x32xf32> to vector<64x32xf32>
    %18 = tpu.concatenate %15, %17 in 1 : vector<64x32xf32>, vector<64x32xf32> -> vector<64x64xf32>
    %c0_28 = arith.constant 0 : index
    %c0_29 = arith.constant 0 : index
    %19 = vector.load %arg3[%c0_28, %c0_29] : memref<64x16xf32, #tpu.memory_space<vmem>>, vector<64x16xf32>
    %cst_30 = arith.constant dense<0.000000e+00> : vector<64x16xf32>
    %20 = tpu.matmul %18, %19, %cst_30 {dimension_numbers = #tpu.dot_dimension_numbers<[1], [0], [0], [1], [0, 0, 1, 1], [], []>} : vector<64x64xf32>, vector<64x16xf32>, vector<64x16xf32> -> vector<64x16xf32>
    %c0_31 = arith.constant 0 : index
    %c0_32 = arith.constant 0 : index
    %21 = vector.load %arg6[%c0_31, %c0_32] : memref<1x16xf32, #tpu.memory_space<vmem>>, vector<1x16xf32>
    %22 = vector.broadcast %21 : vector<1x16xf32> to vector<64x16xf32>
    %23 = arith.addf %20, %22 : vector<64x16xf32>
    %cst_33 = arith.constant 0.000000e+00 : f32
    %24 = vector.broadcast %cst_33 : f32 to vector<64x16xf32>
    %25 = arith.maximumf %23, %24 : vector<64x16xf32>
    %26 = vector.shape_cast %25 : vector<64x16xf32> to vector<1x8x8x16xf32>
    %c0_34 = arith.constant 0 : index
    %c1_35 = arith.constant 1 : index
    %c0_36 = arith.constant 0 : index
    %c0_37 = arith.constant 0 : index
    %27 = vector.load %arg13[%c0_34, %c1_35, %c0_36, %c0_37] : memref<1x9x9x32xf32, #tpu.memory_space<vmem>>, vector<1x8x8x32xf32>
    %28 = vector.shape_cast %27 : vector<1x8x8x32xf32> to vector<64x32xf32>
    %c0_38 = arith.constant 0 : index
    %c0_39 = arith.constant 0 : index
    %c0_40 = arith.constant 0 : index
    %c0_41 = arith.constant 0 : index
    %29 = vector.load %arg13[%c0_38, %c0_39, %c0_40, %c0_41] : memref<1x9x9x32xf32, #tpu.memory_space<vmem>>, vector<1x8x8x32xf32>
    %30 = vector.shape_cast %29 : vector<1x8x8x32xf32> to vector<64x32xf32>
    %31 = tpu.concatenate %28, %30 in 1 : vector<64x32xf32>, vector<64x32xf32> -> vector<64x64xf32>
    %c0_42 = arith.constant 0 : index
    %c0_43 = arith.constant 0 : index
    %32 = vector.load %arg4[%c0_42, %c0_43] : memref<64x16xf32, #tpu.memory_space<vmem>>, vector<64x16xf32>
    %cst_44 = arith.constant dense<0.000000e+00> : vector<64x16xf32>
    %33 = tpu.matmul %31, %32, %cst_44 {dimension_numbers = #tpu.dot_dimension_numbers<[1], [0], [0], [1], [0, 0, 1, 1], [], []>} : vector<64x64xf32>, vector<64x16xf32>, vector<64x16xf32> -> vector<64x16xf32>
    %c0_45 = arith.constant 0 : index
    %c0_46 = arith.constant 0 : index
    %34 = vector.load %arg6[%c0_45, %c0_46] : memref<1x16xf32, #tpu.memory_space<vmem>>, vector<1x16xf32>
    %35 = vector.broadcast %34 : vector<1x16xf32> to vector<64x16xf32>
    %36 = arith.addf %33, %35 : vector<64x16xf32>
    %cst_47 = arith.constant 0.000000e+00 : f32
    %37 = vector.broadcast %cst_47 : f32 to vector<64x16xf32>
    %38 = arith.maximumf %36, %37 : vector<64x16xf32>
    %39 = vector.shape_cast %38 : vector<64x16xf32> to vector<1x8x8x16xf32>
    %c0_48 = arith.constant 0 : index
    %c1_49 = arith.constant 1 : index
    %c1_50 = arith.constant 1 : index
    %c0_51 = arith.constant 0 : index
    %40 = vector.load %arg13[%c0_48, %c1_49, %c1_50, %c0_51] : memref<1x9x9x32xf32, #tpu.memory_space<vmem>>, vector<1x8x8x32xf32>
    %41 = vector.shape_cast %40 : vector<1x8x8x32xf32> to vector<64x32xf32>
    %c0_52 = arith.constant 0 : index
    %c1_53 = arith.constant 1 : index
    %c0_54 = arith.constant 0 : index
    %c0_55 = arith.constant 0 : index
    %42 = vector.load %arg13[%c0_52, %c1_53, %c0_54, %c0_55] : memref<1x9x9x32xf32, #tpu.memory_space<vmem>>, vector<1x8x8x32xf32>
    %43 = vector.shape_cast %42 : vector<1x8x8x32xf32> to vector<64x32xf32>
    %c0_56 = arith.constant 0 : index
    %c0_57 = arith.constant 0 : index
    %c1_58 = arith.constant 1 : index
    %c0_59 = arith.constant 0 : index
    %44 = vector.load %arg13[%c0_56, %c0_57, %c1_58, %c0_59] : memref<1x9x9x32xf32, #tpu.memory_space<vmem>>, vector<1x8x8x32xf32>
    %45 = vector.shape_cast %44 : vector<1x8x8x32xf32> to vector<64x32xf32>
    %c0_60 = arith.constant 0 : index
    %c0_61 = arith.constant 0 : index
    %c0_62 = arith.constant 0 : index
    %c0_63 = arith.constant 0 : index
    %46 = vector.load %arg13[%c0_60, %c0_61, %c0_62, %c0_63] : memref<1x9x9x32xf32, #tpu.memory_space<vmem>>, vector<1x8x8x32xf32>
    %47 = vector.shape_cast %46 : vector<1x8x8x32xf32> to vector<64x32xf32>
    %48 = tpu.concatenate %41, %43, %45, %47 in 1 : vector<64x32xf32>, vector<64x32xf32>, vector<64x32xf32>, vector<64x32xf32> -> vector<64x128xf32>
    %c0_64 = arith.constant 0 : index
    %c0_65 = arith.constant 0 : index
    %49 = vector.load %arg5[%c0_64, %c0_65] : memref<128x16xf32, #tpu.memory_space<vmem>>, vector<128x16xf32>
    %cst_66 = arith.constant dense<0.000000e+00> : vector<64x16xf32>
    %50 = tpu.matmul %48, %49, %cst_66 {dimension_numbers = #tpu.dot_dimension_numbers<[1], [0], [0], [1], [0, 0, 1, 1], [], []>} : vector<64x128xf32>, vector<128x16xf32>, vector<64x16xf32> -> vector<64x16xf32>
    %c0_67 = arith.constant 0 : index
    %c0_68 = arith.constant 0 : index
    %51 = vector.load %arg6[%c0_67, %c0_68] : memref<1x16xf32, #tpu.memory_space<vmem>>, vector<1x16xf32>
    %52 = vector.broadcast %51 : vector<1x16xf32> to vector<64x16xf32>
    %53 = arith.addf %50, %52 : vector<64x16xf32>
    %cst_69 = arith.constant 0.000000e+00 : f32
    %54 = vector.broadcast %cst_69 : f32 to vector<64x16xf32>
    %55 = arith.maximumf %53, %54 : vector<64x16xf32>
    %56 = vector.shape_cast %55 : vector<64x16xf32> to vector<1x8x8x16xf32>
    %57 = vector.shape_cast %13 : vector<1x8x8x16xf32> to vector<1x8x8x1x16xf32>
    %58 = vector.shape_cast %26 : vector<1x8x8x16xf32> to vector<1x8x8x1x16xf32>
    %59 = tpu.concatenate %57, %58 in 3 : vector<1x8x8x1x16xf32>, vector<1x8x8x1x16xf32> -> vector<1x8x8x2x16xf32>
    %60 = vector.shape_cast %59 : vector<1x8x8x2x16xf32> to vector<1x8x16x16xf32>
    %61 = vector.shape_cast %39 : vector<1x8x8x16xf32> to vector<1x8x8x1x16xf32>
    %62 = vector.shape_cast %56 : vector<1x8x8x16xf32> to vector<1x8x8x1x16xf32>
    %63 = tpu.concatenate %61, %62 in 3 : vector<1x8x8x1x16xf32>, vector<1x8x8x1x16xf32> -> vector<1x8x8x2x16xf32>
    %64 = vector.shape_cast %63 : vector<1x8x8x2x16xf32> to vector<1x8x16x16xf32>
    %65 = vector.shape_cast %60 : vector<1x8x16x16xf32> to vector<1x8x1x16x16xf32>
    %66 = vector.shape_cast %64 : vector<1x8x16x16xf32> to vector<1x8x1x16x16xf32>
    %67 = tpu.concatenate %65, %66 in 2 : vector<1x8x1x16x16xf32>, vector<1x8x1x16x16xf32> -> vector<1x8x2x16x16xf32>
    %68 = vector.shape_cast %67 : vector<1x8x2x16x16xf32> to vector<1x16x16x16xf32>
    %cst_70 = arith.constant 0.000000e+00 : f32
    %69 = vector.broadcast %cst_70 : f32 to vector<1x17x17x16xf32>
    %c0_71 = arith.constant 0 : index
    %c0_72 = arith.constant 0 : index
    %c0_73 = arith.constant 0 : index
    %c0_74 = arith.constant 0 : index
    %70 = vector.load %arg14[%c0_71, %c0_72, %c0_73, %c0_74] : memref<1x17x17x16xf32, #tpu.memory_space<vmem>>, vector<1x17x17x16xf32>
    tpu.vector_store %arg14[%c0_71, %c0_72, %c0_73, %c0_74], %69 {strides = array<i32>} : memref<1x17x17x16xf32, #tpu.memory_space<vmem>>, vector<1x17x17x16xf32>,
    %c0_75 = arith.constant 0 : index
    %c0_76 = arith.constant 0 : index
    %c0_77 = arith.constant 0 : index
    %c0_78 = arith.constant 0 : index
    %71 = vector.load %arg14[%c0_75, %c0_76, %c0_77, %c0_78] : memref<1x17x17x16xf32, #tpu.memory_space<vmem>>, vector<1x16x16x16xf32>
    tpu.vector_store %arg14[%c0_75, %c0_76, %c0_77, %c0_78], %68 {strides = array<i32>} : memref<1x17x17x16xf32, #tpu.memory_space<vmem>>, vector<1x16x16x16xf32>,
    %c0_79 = arith.constant 0 : index
    %c0_80 = arith.constant 0 : index
    %c0_81 = arith.constant 0 : index
    %c0_82 = arith.constant 0 : index
    %72 = vector.load %arg14[%c0_79, %c0_80, %c0_81, %c0_82] : memref<1x17x17x16xf32, #tpu.memory_space<vmem>>, vector<1x16x16x16xf32>
    %73 = vector.shape_cast %72 : vector<1x16x16x16xf32> to vector<256x16xf32>
    %c0_83 = arith.constant 0 : index
    %c0_84 = arith.constant 0 : index
    %74 = vector.load %arg7[%c0_83, %c0_84] : memref<1x16xf32, #tpu.memory_space<vmem>>, vector<1x16xf32>
    %75 = tpu.transpose %73, [1, 0] : vector<256x16xf32> -> vector<16x256xf32>
    %cst_85 = arith.constant dense<0.000000e+00> : vector<1x256xf32>
    %76 = tpu.matmul %74, %75, %cst_85 {dimension_numbers = #tpu.dot_dimension_numbers<[1], [0], [0], [1], [0, 0, 1, 1], [], []>} : vector<1x16xf32>, vector<16x256xf32>, vector<1x256xf32> -> vector<1x256xf32>
    %c0_86 = arith.constant 0 : index
    %c0_87 = arith.constant 0 : index
    %77 = vector.load %arg11[%c0_86, %c0_87] : memref<1x1xf32, #tpu.memory_space<vmem>>, vector<1x1xf32>
    %78 = vector.broadcast %77 : vector<1x1xf32> to vector<1x256xf32>
    %79 = arith.addf %76, %78 : vector<1x256xf32>
    %cst_88 = arith.constant 0.000000e+00 : f32
    %80 = vector.broadcast %cst_88 : f32 to vector<1x256xf32>
    %81 = arith.subf %80, %79 : vector<1x256xf32>
    %82 = math.exp %81 : vector<1x256xf32>
    %cst_89 = arith.constant 1.000000e+00 : f32
    %83 = vector.broadcast %cst_89 : f32 to vector<1x256xf32>
    %84 = arith.addf %83, %82 : vector<1x256xf32>
    %85 = tpu.reciprocal %84 : vector<1x256xf32> -> vector<1x256xf32>
    %c0_90 = arith.constant 0 : index
    %c0_91 = arith.constant 0 : index
    %c1_92 = arith.constant 1 : index
    %c0_93 = arith.constant 0 : index
    %86 = vector.load %arg14[%c0_90, %c0_91, %c1_92, %c0_93] : memref<1x17x17x16xf32, #tpu.memory_space<vmem>>, vector<1x16x16x16xf32>
    %87 = vector.shape_cast %86 : vector<1x16x16x16xf32> to vector<256x16xf32>
    %c0_94 = arith.constant 0 : index
    %c0_95 = arith.constant 0 : index
    %c0_96 = arith.constant 0 : index
    %c0_97 = arith.constant 0 : index
    %88 = vector.load %arg14[%c0_94, %c0_95, %c0_96, %c0_97] : memref<1x17x17x16xf32, #tpu.memory_space<vmem>>, vector<1x16x16x16xf32>
    %89 = vector.shape_cast %88 : vector<1x16x16x16xf32> to vector<256x16xf32>
    %90 = tpu.concatenate %87, %89 in 1 : vector<256x16xf32>, vector<256x16xf32> -> vector<256x32xf32>
    %c0_98 = arith.constant 0 : index
    %c0_99 = arith.constant 0 : index
    %91 = vector.load %arg8[%c0_98, %c0_99] : memref<1x32xf32, #tpu.memory_space<vmem>>, vector<1x32xf32>
    %92 = tpu.transpose %90, [1, 0] : vector<256x32xf32> -> vector<32x256xf32>
    %cst_100 = arith.constant dense<0.000000e+00> : vector<1x256xf32>
    %93 = tpu.matmul %91, %92, %cst_100 {dimension_numbers = #tpu.dot_dimension_numbers<[1], [0], [0], [1], [0, 0, 1, 1], [], []>} : vector<1x32xf32>, vector<32x256xf32>, vector<1x256xf32> -> vector<1x256xf32>
    %c0_101 = arith.constant 0 : index
    %c0_102 = arith.constant 0 : index
    %94 = vector.load %arg11[%c0_101, %c0_102] : memref<1x1xf32, #tpu.memory_space<vmem>>, vector<1x1xf32>
    %95 = vector.broadcast %94 : vector<1x1xf32> to vector<1x256xf32>
    %96 = arith.addf %93, %95 : vector<1x256xf32>
    %cst_103 = arith.constant 0.000000e+00 : f32
    %97 = vector.broadcast %cst_103 : f32 to vector<1x256xf32>
    %98 = arith.subf %97, %96 : vector<1x256xf32>
    %99 = math.exp %98 : vector<1x256xf32>
    %cst_104 = arith.constant 1.000000e+00 : f32
    %100 = vector.broadcast %cst_104 : f32 to vector<1x256xf32>
    %101 = arith.addf %100, %99 : vector<1x256xf32>
    %102 = tpu.reciprocal %101 : vector<1x256xf32> -> vector<1x256xf32>
    %c0_105 = arith.constant 0 : index
    %c1_106 = arith.constant 1 : index
    %c0_107 = arith.constant 0 : index
    %c0_108 = arith.constant 0 : index
    %103 = vector.load %arg14[%c0_105, %c1_106, %c0_107, %c0_108] : memref<1x17x17x16xf32, #tpu.memory_space<vmem>>, vector<1x16x16x16xf32>
    %104 = vector.shape_cast %103 : vector<1x16x16x16xf32> to vector<256x16xf32>
    %c0_109 = arith.constant 0 : index
    %c0_110 = arith.constant 0 : index
    %c0_111 = arith.constant 0 : index
    %c0_112 = arith.constant 0 : index
    %105 = vector.load %arg14[%c0_109, %c0_110, %c0_111, %c0_112] : memref<1x17x17x16xf32, #tpu.memory_space<vmem>>, vector<1x16x16x16xf32>
    %106 = vector.shape_cast %105 : vector<1x16x16x16xf32> to vector<256x16xf32>
    %107 = tpu.concatenate %104, %106 in 1 : vector<256x16xf32>, vector<256x16xf32> -> vector<256x32xf32>
    %c0_113 = arith.constant 0 : index
    %c0_114 = arith.constant 0 : index
    %108 = vector.load %arg9[%c0_113, %c0_114] : memref<1x32xf32, #tpu.memory_space<vmem>>, vector<1x32xf32>
    %109 = tpu.transpose %107, [1, 0] : vector<256x32xf32> -> vector<32x256xf32>
    %cst_115 = arith.constant dense<0.000000e+00> : vector<1x256xf32>
    %110 = tpu.matmul %108, %109, %cst_115 {dimension_numbers = #tpu.dot_dimension_numbers<[1], [0], [0], [1], [0, 0, 1, 1], [], []>} : vector<1x32xf32>, vector<32x256xf32>, vector<1x256xf32> -> vector<1x256xf32>
    %c0_116 = arith.constant 0 : index
    %c0_117 = arith.constant 0 : index
    %111 = vector.load %arg11[%c0_116, %c0_117] : memref<1x1xf32, #tpu.memory_space<vmem>>, vector<1x1xf32>
    %112 = vector.broadcast %111 : vector<1x1xf32> to vector<1x256xf32>
    %113 = arith.addf %110, %112 : vector<1x256xf32>
    %cst_118 = arith.constant 0.000000e+00 : f32
    %114 = vector.broadcast %cst_118 : f32 to vector<1x256xf32>
    %115 = arith.subf %114, %113 : vector<1x256xf32>
    %116 = math.exp %115 : vector<1x256xf32>
    %cst_119 = arith.constant 1.000000e+00 : f32
    %117 = vector.broadcast %cst_119 : f32 to vector<1x256xf32>
    %118 = arith.addf %117, %116 : vector<1x256xf32>
    %119 = tpu.reciprocal %118 : vector<1x256xf32> -> vector<1x256xf32>
    %c0_120 = arith.constant 0 : index
    %c1_121 = arith.constant 1 : index
    %c1_122 = arith.constant 1 : index
    %c0_123 = arith.constant 0 : index
    %120 = vector.load %arg14[%c0_120, %c1_121, %c1_122, %c0_123] : memref<1x17x17x16xf32, #tpu.memory_space<vmem>>, vector<1x16x16x16xf32>
    %121 = vector.shape_cast %120 : vector<1x16x16x16xf32> to vector<256x16xf32>
    %c0_124 = arith.constant 0 : index
    %c1_125 = arith.constant 1 : index
    %c0_126 = arith.constant 0 : index
    %c0_127 = arith.constant 0 : index
    %122 = vector.load %arg14[%c0_124, %c1_125, %c0_126, %c0_127] : memref<1x17x17x16xf32, #tpu.memory_space<vmem>>, vector<1x16x16x16xf32>
    %123 = vector.shape_cast %122 : vector<1x16x16x16xf32> to vector<256x16xf32>
    %c0_128 = arith.constant 0 : index
    %c0_129 = arith.constant 0 : index
    %c1_130 = arith.constant 1 : index
    %c0_131 = arith.constant 0 : index
    %124 = vector.load %arg14[%c0_128, %c0_129, %c1_130, %c0_131] : memref<1x17x17x16xf32, #tpu.memory_space<vmem>>, vector<1x16x16x16xf32>
    %125 = vector.shape_cast %124 : vector<1x16x16x16xf32> to vector<256x16xf32>
    %c0_132 = arith.constant 0 : index
    %c0_133 = arith.constant 0 : index
    %c0_134 = arith.constant 0 : index
    %c0_135 = arith.constant 0 : index
    %126 = vector.load %arg14[%c0_132, %c0_133, %c0_134, %c0_135] : memref<1x17x17x16xf32, #tpu.memory_space<vmem>>, vector<1x16x16x16xf32>
    %127 = vector.shape_cast %126 : vector<1x16x16x16xf32> to vector<256x16xf32>
    %128 = tpu.concatenate %121, %123, %125, %127 in 1 : vector<256x16xf32>, vector<256x16xf32>, vector<256x16xf32>, vector<256x16xf32> -> vector<256x64xf32>
    %c0_136 = arith.constant 0 : index
    %c0_137 = arith.constant 0 : index
    %129 = vector.load %arg10[%c0_136, %c0_137] : memref<1x64xf32, #tpu.memory_space<vmem>>, vector<1x64xf32>
    %130 = tpu.transpose %128, [1, 0] : vector<256x64xf32> -> vector<64x256xf32>
    %cst_138 = arith.constant dense<0.000000e+00> : vector<1x256xf32>
    %131 = tpu.matmul %129, %130, %cst_138 {dimension_numbers = #tpu.dot_dimension_numbers<[1], [0], [0], [1], [0, 0, 1, 1], [], []>} : vector<1x64xf32>, vector<64x256xf32>, vector<1x256xf32> -> vector<1x256xf32>
    %c0_139 = arith.constant 0 : index
    %c0_140 = arith.constant 0 : index
    %132 = vector.load %arg11[%c0_139, %c0_140] : memref<1x1xf32, #tpu.memory_space<vmem>>, vector<1x1xf32>
    %133 = vector.broadcast %132 : vector<1x1xf32> to vector<1x256xf32>
    %134 = arith.addf %131, %133 : vector<1x256xf32>
    %cst_141 = arith.constant 0.000000e+00 : f32
    %135 = vector.broadcast %cst_141 : f32 to vector<1x256xf32>
    %136 = arith.subf %135, %134 : vector<1x256xf32>
    %137 = math.exp %136 : vector<1x256xf32>
    %cst_142 = arith.constant 1.000000e+00 : f32
    %138 = vector.broadcast %cst_142 : f32 to vector<1x256xf32>
    %139 = arith.addf %138, %137 : vector<1x256xf32>
    %140 = tpu.reciprocal %139 : vector<1x256xf32> -> vector<1x256xf32>
    %141 = tpu.concatenate %85, %102, %119, %140 in 0 : vector<1x256xf32>, vector<1x256xf32>, vector<1x256xf32>, vector<1x256xf32> -> vector<4x256xf32>
    %142 = vector.shape_cast %141 : vector<4x256xf32> to vector<1x4x256xf32>
    %c0_143 = arith.constant 0 : index
    %c0_144 = arith.constant 0 : index
    %c0_145 = arith.constant 0 : index
    %143 = vector.load %arg12[%c0_143, %c0_144, %c0_145] : memref<1x4x256xf32, #tpu.memory_space<vmem>>, vector<1x4x256xf32>
    tpu.vector_store %arg12[%c0_143, %c0_144, %c0_145], %142 {strides = array<i32>} : memref<1x4x256xf32, #tpu.memory_space<vmem>>, vector<1x4x256xf32>,
    return
  }
  func.func @transform_0(%arg0: i32) -> (i32, i32, i32, i32) {
    %c0_i32 = arith.constant 0 : i32
    %c0_i32_0 = arith.constant 0 : i32
    %c0_i32_1 = arith.constant 0 : i32
    %c0_i32_2 = arith.constant 0 : i32
    return %arg0, %c0_i32, %c0_i32_0, %c0_i32_1 : i32, i32, i32, i32
  }
  func.func @transform_1(%arg0: i32) -> (i32, i32) {
    %c0_i32 = arith.constant 0 : i32
    %c0_i32_0 = arith.constant 0 : i32
    %c0_i32_1 = arith.constant 0 : i32
    return %c0_i32, %c0_i32_0 : i32, i32
  }
  func.func @transform_2(%arg0: i32) -> (i32, i32) {
    %c0_i32 = arith.constant 0 : i32
    %c0_i32_0 = arith.constant 0 : i32
    %c0_i32_1 = arith.constant 0 : i32
    return %c0_i32, %c0_i32_0 : i32, i32
  }
  func.func @transform_3(%arg0: i32) -> (i32, i32) {
    %c0_i32 = arith.constant 0 : i32
    %c0_i32_0 = arith.constant 0 : i32
    %c0_i32_1 = arith.constant 0 : i32
    return %c0_i32, %c0_i32_0 : i32, i32
  }
  func.func @transform_4(%arg0: i32) -> (i32, i32) {
    %c0_i32 = arith.constant 0 : i32
    %c0_i32_0 = arith.constant 0 : i32
    %c0_i32_1 = arith.constant 0 : i32
    return %c0_i32, %c0_i32_0 : i32, i32
  }
  func.func @transform_5(%arg0: i32) -> (i32, i32) {
    %c0_i32 = arith.constant 0 : i32
    %c0_i32_0 = arith.constant 0 : i32
    %c0_i32_1 = arith.constant 0 : i32
    return %c0_i32, %c0_i32_0 : i32, i32
  }
  func.func @transform_6(%arg0: i32) -> (i32, i32) {
    %c0_i32 = arith.constant 0 : i32
    %c0_i32_0 = arith.constant 0 : i32
    %c0_i32_1 = arith.constant 0 : i32
    return %c0_i32, %c0_i32_0 : i32, i32
  }
  func.func @transform_7(%arg0: i32) -> (i32, i32) {
    %c0_i32 = arith.constant 0 : i32
    %c0_i32_0 = arith.constant 0 : i32
    %c0_i32_1 = arith.constant 0 : i32
    return %c0_i32, %c0_i32_0 : i32, i32
  }
  func.func @transform_8(%arg0: i32) -> (i32, i32) {
    %c0_i32 = arith.constant 0 : i32
    %c0_i32_0 = arith.constant 0 : i32
    %c0_i32_1 = arith.constant 0 : i32
    return %c0_i32, %c0_i32_0 : i32, i32
  }
  func.func @transform_9(%arg0: i32) -> (i32, i32) {
    %c0_i32 = arith.constant 0 : i32
    %c0_i32_0 = arith.constant 0 : i32
    %c0_i32_1 = arith.constant 0 : i32
    return %c0_i32, %c0_i32_0 : i32, i32
  }
  func.func @transform_10(%arg0: i32) -> (i32, i32) {
    %c0_i32 = arith.constant 0 : i32
    %c0_i32_0 = arith.constant 0 : i32
    %c0_i32_1 = arith.constant 0 : i32
    return %c0_i32, %c0_i32_0 : i32, i32
  }
  func.func @transform_11(%arg0: i32) -> (i32, i32, i32) {
    %c0_i32 = arith.constant 0 : i32
    %c0_i32_0 = arith.constant 0 : i32
    %c0_i32_1 = arith.constant 0 : i32
    return %arg0, %c0_i32, %c0_i32_0 : i32, i32, i32
  }
}

</mosaic_0001>

<llo_original>
// kernel: decoder_forward.1
$region0: #{decoder_forward.1}
  #allocation0 [shape = 'u32[]', space=smem, size = 0x4, offset = 0x4, fixed_abs, tag = 'smem constant byte address 0x4 - core index']
  #allocation1 [shape = 'u32[144,128]{1,0:T(1,128)}', space=vmem, size = 0x12000, scoped, tag = 'internal scratch']
  #allocation2 [shape = 'f32[1,9,9,32]{3,2,1,0:T(8,128)}', space=vmem, size = 0x12000, scoped, tag = 'scratch operand']
  #allocation3 [shape = 'f32[1,17,17,16]{3,2,1,0:T(8,128)}', space=vmem, size = 0x33000, scoped, tag = 'scratch operand']
  #allocation4 [shape = 'f32[1,1]{1,0:T(1,128)S(1)}', space=vmem, size = 0x200, scoped, tag = 'scoped memory for decoder_forward.1']
  %s0 = inlined_call_operand.vmem [shape: f32[2,8,8,32], index: 0, kind: input, shape index: {}]
  %s1 = inlined_call_operand.vmem [shape: f32[32,16], index: 1, kind: input, shape index: {}]
  %s2 = inlined_call_operand.vmem [shape: f32[64,16], index: 2, kind: input, shape index: {}]
  %s3 = inlined_call_operand.vmem [shape: f32[64,16], index: 3, kind: input, shape index: {}]
  %s4 = inlined_call_operand.vmem [shape: f32[128,16], index: 4, kind: input, shape index: {}]
  %s5 = inlined_call_operand.vmem [shape: f32[1,16], index: 5, kind: input, shape index: {}]
  %s6 = inlined_call_operand.vmem [shape: f32[1,16], index: 6, kind: input, shape index: {}]
  %s7 = inlined_call_operand.vmem [shape: f32[1,32], index: 7, kind: input, shape index: {}]
  %s8 = inlined_call_operand.vmem [shape: f32[1,32], index: 8, kind: input, shape index: {}]
  %s9 = inlined_call_operand.vmem [shape: f32[1,64], index: 9, kind: input, shape index: {}]
  %s10 = inlined_call_operand.<no memory space> [shape: f32[1,1], index: 10, kind: input, shape index: {}]
  %s11 = inlined_call_operand.vmem [shape: f32[2,4,256], index: 11, kind: output, shape index: {}]
  %s12 = sld [smem:[#allocation0]]
  $region77: #{decoder_forward.1} parent=0
    _
  %s14 = ssub.s32 1, %s12
  %s15 = scalar_select 0, %s14, %s12
  %v16 = vstv %s10
  %17 = vst [vmem:[#allocation4] sm:$0x1] %v16
  loop: start=0, step=1, limit=4
  $region2: #{decoder_forward.1} parent=0 // loop_pre_header
    _
  $region3: #{decoder_forward.1} parent=0 // loop_header
    %s19 = sphi 0, %s23
    %p20 = scmp.ge.s32.totalorder %s19, 4
    %s29 = sphi 0, %s31
    %s32 = sphi 0, %s29
    %s33 = sphi 0, %s32
    %s49 = sphi 0, %s33
    %s53 = sphi 0, %s53
    %s55 = sphi 0, %s53
    %s56 = sphi 0, %s55
    %s70 = sphi 0, %s56
    %s74 = sphi 0, %s74
    %s76 = sphi 0, %s74
    %s77 = sphi 0, %s76
    %s91 = sphi 0, %s77
    %s95 = sphi 0, %s95
    %s97 = sphi 0, %s95
    %s98 = sphi 0, %s97
    %s112 = sphi 0, %s98
    %s116 = sphi 0, %s116
    %s118 = sphi 0, %s116
    %s119 = sphi 0, %s118
    %s133 = sphi 0, %s119
    %s137 = sphi 0, %s137
    %s139 = sphi 0, %s137
    %s140 = sphi 0, %s139
    %s154 = sphi 0, %s140
    %s158 = sphi 0, %s158
    %s160 = sphi 0, %s158
    %s161 = sphi 0, %s160
    %s175 = sphi 0, %s161
    %s179 = sphi 0, %s179
    %s181 = sphi 0, %s179
    %s182 = sphi 0, %s181
    %s196 = sphi 0, %s182
    %s200 = sphi 0, %s200
    %s202 = sphi 0, %s200
    %s203 = sphi 0, %s202
    %s217 = sphi 0, %s203
    %s221 = sphi 0, %s221
    %s223 = sphi 0, %s221
    %s224 = sphi 0, %s223
    %s238 = sphi 0, %s224
    %s242 = sphi 0, %s242
    %s244 = sphi 0, %s242
    %s245 = sphi 0, %s244
    %s259 = sphi 0, %s245
    %s265 = sphi 0, %s267
    %s268 = sphi 0, %s265
    %s269 = sphi 0, %s268
    %s285 = sphi 0, %s269
  $region4: #{decoder_forward.1} parent=0 // loop_header_branch
    %22 = sbr.rel (%p20) target = $region8
  $region5: #{decoder_forward.1} parent=0 // loop_body
    %s24 = ssub.s32 %s19, 1
    %s25 = ssub.s32 %s19, 2
    %s26 = sadd.s32 %s19, 1
    %s27 = ssub.s32 %s19, %s26
    %p28 = scmp.eq.s32.totalorder %s27, 0
    %s30 = sadd.s32 %s29, 1
    %s31 = scalar_select %p28, %s29, %s30
    %p34 = pneg %p28
    %p35 = scmp.eq.s32.totalorder %s19, 1
    %p36 = por %p34, %p35
    %p37 = scmp.ne.s32.totalorder %s29, %s32
    %p38 = scmp.eq.s32.totalorder %s19, 0
    %p39 = por %p37, %p38
    %p40 = scmp.ne.s32.totalorder %s29, %s32
    %p41 = scmp.eq.s32.totalorder %s24, 1
    %p42 = por %p40, %p41
    %p43 = scmp.ne.s32.totalorder %s32, %s33
    %p44 = scmp.eq.s32.totalorder %s24, 0
    %p45 = por %p43, %p44
    %p46 = scmp.ne.s32.totalorder %s32, %s33
    %p47 = scmp.eq.s32.totalorder %s25, 1
    %p48 = por %p46, %p47
    %p50 = scmp.ne.s32.totalorder %s33, %s49
    %p51 = scmp.eq.s32.totalorder %s25, 0
    %p52 = por %p50, %p51
    %s54 = sadd.s32 %s53, 1
    %p57 = scmp.eq.s32.totalorder %s19, 1
    %p58 = scmp.ne.s32.totalorder %s53, %s55
    %p59 = scmp.eq.s32.totalorder %s19, 0
    %p60 = por %p58, %p59
    %p61 = scmp.ne.s32.totalorder %s53, %s55
    %p62 = scmp.eq.s32.totalorder %s24, 1
    %p63 = por %p61, %p62
    %p64 = scmp.ne.s32.totalorder %s55, %s56
    %p65 = scmp.eq.s32.totalorder %s24, 0
    %p66 = por %p64, %p65
    %p67 = scmp.ne.s32.totalorder %s55, %s56
    %p68 = scmp.eq.s32.totalorder %s25, 1
    %p69 = por %p67, %p68
    %p71 = scmp.ne.s32.totalorder %s56, %s70
    %p72 = scmp.eq.s32.totalorder %s25, 0
    %p73 = por %p71, %p72
    %s75 = sadd.s32 %s74, 1
    %p78 = scmp.eq.s32.totalorder %s19, 1
    %p79 = scmp.ne.s32.totalorder %s74, %s76
    %p80 = scmp.eq.s32.totalorder %s19, 0
    %p81 = por %p79, %p80
    %p82 = scmp.ne.s32.totalorder %s74, %s76
    %p83 = scmp.eq.s32.totalorder %s24, 1
    %p84 = por %p82, %p83
    %p85 = scmp.ne.s32.totalorder %s76, %s77
    %p86 = scmp.eq.s32.totalorder %s24, 0
    %p87 = por %p85, %p86
    %p88 = scmp.ne.s32.totalorder %s76, %s77
    %p89 = scmp.eq.s32.totalorder %s25, 1
    %p90 = por %p88, %p89
    %p92 = scmp.ne.s32.totalorder %s77, %s91
    %p93 = scmp.eq.s32.totalorder %s25, 0
    %p94 = por %p92, %p93
    %s96 = sadd.s32 %s95, 1
    %p99 = scmp.eq.s32.totalorder %s19, 1
    %p100 = scmp.ne.s32.totalorder %s95, %s97
    %p101 = scmp.eq.s32.totalorder %s19, 0
    %p102 = por %p100, %p101
    %p103 = scmp.ne.s32.totalorder %s95, %s97
    %p104 = scmp.eq.s32.totalorder %s24, 1
    %p105 = por %p103, %p104
    %p106 = scmp.ne.s32.totalorder %s97, %s98
    %p107 = scmp.eq.s32.totalorder %s24, 0
    %p108 = por %p106, %p107
    %p109 = scmp.ne.s32.totalorder %s97, %s98
    %p110 = scmp.eq.s32.totalorder %s25, 1
    %p111 = por %p109, %p110
    %p113 = scmp.ne.s32.totalorder %s98, %s112
    %p114 = scmp.eq.s32.totalorder %s25, 0
    %p115 = por %p113, %p114
    %s117 = sadd.s32 %s116, 1
    %p120 = scmp.eq.s32.totalorder %s19, 1
    %p121 = scmp.ne.s32.totalorder %s116, %s118
    %p122 = scmp.eq.s32.totalorder %s19, 0
    %p123 = por %p121, %p122
    %p124 = scmp.ne.s32.totalorder %s116, %s118
    %p125 = scmp.eq.s32.totalorder %s24, 1
    %p126 = por %p124, %p125
    %p127 = scmp.ne.s32.totalorder %s118, %s119
    %p128 = scmp.eq.s32.totalorder %s24, 0
    %p129 = por %p127, %p128
    %p130 = scmp.ne.s32.totalorder %s118, %s119
    %p131 = scmp.eq.s32.totalorder %s25, 1
    %p132 = por %p130, %p131
    %p134 = scmp.ne.s32.totalorder %s119, %s133
    %p135 = scmp.eq.s32.totalorder %s25, 0
    %p136 = por %p134, %p135
    %s138 = sadd.s32 %s137, 1
    %p141 = scmp.eq.s32.totalorder %s19, 1
    %p142 = scmp.ne.s32.totalorder %s137, %s139
    %p143 = scmp.eq.s32.totalorder %s19, 0
    %p144 = por %p142, %p143
    %p145 = scmp.ne.s32.totalorder %s137, %s139
    %p146 = scmp.eq.s32.totalorder %s24, 1
    %p147 = por %p145, %p146
    %p148 = scmp.ne.s32.totalorder %s139, %s140
    %p149 = scmp.eq.s32.totalorder %s24, 0
    %p150 = por %p148, %p149
    %p151 = scmp.ne.s32.totalorder %s139, %s140
    %p152 = scmp.eq.s32.totalorder %s25, 1
    %p153 = por %p151, %p152
    %p155 = scmp.ne.s32.totalorder %s140, %s154
    %p156 = scmp.eq.s32.totalorder %s25, 0
    %p157 = por %p155, %p156
    %s159 = sadd.s32 %s158, 1
    %p162 = scmp.eq.s32.totalorder %s19, 1
    %p163 = scmp.ne.s32.totalorder %s158, %s160
    %p164 = scmp.eq.s32.totalorder %s19, 0
    %p165 = por %p163, %p164
    %p166 = scmp.ne.s32.totalorder %s158, %s160
    %p167 = scmp.eq.s32.totalorder %s24, 1
    %p168 = por %p166, %p167
    %p169 = scmp.ne.s32.totalorder %s160, %s161
    %p170 = scmp.eq.s32.totalorder %s24, 0
    %p171 = por %p169, %p170
    %p172 = scmp.ne.s32.totalorder %s160, %s161
    %p173 = scmp.eq.s32.totalorder %s25, 1
    %p174 = por %p172, %p173
    %p176 = scmp.ne.s32.totalorder %s161, %s175
    %p177 = scmp.eq.s32.totalorder %s25, 0
    %p178 = por %p176, %p177
    %s180 = sadd.s32 %s179, 1
    %p183 = scmp.eq.s32.totalorder %s19, 1
    %p184 = scmp.ne.s32.totalorder %s179, %s181
    %p185 = scmp.eq.s32.totalorder %s19, 0
    %p186 = por %p184, %p185
    %p187 = scmp.ne.s32.totalorder %s179, %s181
    %p188 = scmp.eq.s32.totalorder %s24, 1
    %p189 = por %p187, %p188
    %p190 = scmp.ne.s32.totalorder %s181, %s182
    %p191 = scmp.eq.s32.totalorder %s24, 0
    %p192 = por %p190, %p191
    %p193 = scmp.ne.s32.totalorder %s181, %s182
    %p194 = scmp.eq.s32.totalorder %s25, 1
    %p195 = por %p193, %p194
    %p197 = scmp.ne.s32.totalorder %s182, %s196
    %p198 = scmp.eq.s32.totalorder %s25, 0
    %p199 = por %p197, %p198
    %s201 = sadd.s32 %s200, 1
    %p204 = scmp.eq.s32.totalorder %s19, 1
    %p205 = scmp.ne.s32.totalorder %s200, %s202
    %p206 = scmp.eq.s32.totalorder %s19, 0
    %p207 = por %p205, %p206
    %p208 = scmp.ne.s32.totalorder %s200, %s202
    %p209 = scmp.eq.s32.totalorder %s24, 1
    %p210 = por %p208, %p209
    %p211 = scmp.ne.s32.totalorder %s202, %s203
    %p212 = scmp.eq.s32.totalorder %s24, 0
    %p213 = por %p211, %p212
    %p214 = scmp.ne.s32.totalorder %s202, %s203
    %p215 = scmp.eq.s32.totalorder %s25, 1
    %p216 = por %p214, %p215
    %p218 = scmp.ne.s32.totalorder %s203, %s217
    %p219 = scmp.eq.s32.totalorder %s25, 0
    %p220 = por %p218, %p219
    %s222 = sadd.s32 %s221, 1
    %p225 = scmp.eq.s32.totalorder %s19, 1
    %p226 = scmp.ne.s32.totalorder %s221, %s223
    %p227 = scmp.eq.s32.totalorder %s19, 0
    %p228 = por %p226, %p227
    %p229 = scmp.ne.s32.totalorder %s221, %s223
    %p230 = scmp.eq.s32.totalorder %s24, 1
    %p231 = por %p229, %p230
    %p232 = scmp.ne.s32.totalorder %s223, %s224
    %p233 = scmp.eq.s32.totalorder %s24, 0
    %p234 = por %p232, %p233
    %p235 = scmp.ne.s32.totalorder %s223, %s224
    %p236 = scmp.eq.s32.totalorder %s25, 1
    %p237 = por %p235, %p236
    %p239 = scmp.ne.s32.totalorder %s224, %s238
    %p240 = scmp.eq.s32.totalorder %s25, 0
    %p241 = por %p239, %p240
    %s243 = sadd.s32 %s242, 1
    %p246 = scmp.eq.s32.totalorder %s19, 1
    %p247 = scmp.ne.s32.totalorder %s242, %s244
    %p248 = scmp.eq.s32.totalorder %s19, 0
    %p249 = por %p247, %p248
    %p250 = scmp.ne.s32.totalorder %s242, %s244
    %p251 = scmp.eq.s32.totalorder %s24, 1
    %p252 = por %p250, %p251
    %p253 = scmp.ne.s32.totalorder %s244, %s245
    %p254 = scmp.eq.s32.totalorder %s24, 0
    %p255 = por %p253, %p254
    %p256 = scmp.ne.s32.totalorder %s244, %s245
    %p257 = scmp.eq.s32.totalorder %s25, 1
    %p258 = por %p256, %p257
    %p260 = scmp.ne.s32.totalorder %s245, %s259
    %p261 = scmp.eq.s32.totalorder %s25, 0
    %p262 = por %p260, %p261
    %s263 = ssub.s32 %s19, %s26
    %p264 = scmp.eq.s32.totalorder %s263, 0
    %s266 = sadd.s32 %s265, 1
    %s267 = scalar_select %p264, %s265, %s266
    %p270 = pneg %p264
    %p271 = scmp.eq.s32.totalorder %s19, 1
    %p272 = por %p270, %p271
    %p273 = scmp.ne.s32.totalorder %s265, %s268
    %p274 = scmp.eq.s32.totalorder %s19, 0
    %p275 = por %p273, %p274
    %p276 = scmp.ne.s32.totalorder %s265, %s268
    %p277 = scmp.eq.s32.totalorder %s24, 1
    %p278 = por %p276, %p277
    %p279 = scmp.ne.s32.totalorder %s268, %s269
    %p280 = scmp.eq.s32.totalorder %s24, 0
    %p281 = por %p279, %p280
    %p282 = scmp.ne.s32.totalorder %s268, %s269
    %p283 = scmp.eq.s32.totalorder %s25, 1
    %p284 = por %p282, %p283
    %p286 = scmp.ne.s32.totalorder %s269, %s285
    %p287 = scmp.eq.s32.totalorder %s25, 0
    %p288 = por %p286, %p287
    %p289 = scmp.le.s32.totalorder 1, %s19
    %p290 = scmp.lt.s32.totalorder %s19, 3
    %p291 = pnand %p289, %p290
    %p292 = pneg %p291
    // Predicated region
    $region9: #{decoder_forward.1} parent=5 // pred_check
      _
    $region10: #{decoder_forward.1} parent=5 // pred_check_branch
      %294 = sbr.rel (%p291) target = $region12
    $region11: #{decoder_forward.1} parent=5 // pred_region
      %s295 = ssub.s32 %s19, 1
      // Predicated region
      $region13: #{decoder_forward.1} parent=11 // pred_check
        %p296 = pneg %p66
      $region14: #{decoder_forward.1} parent=11 // pred_check_branch
        %298 = sbr.rel (%p296) target = $region16
      $region15: #{decoder_forward.1} parent=11 // pred_region
        _
      $region16: #{decoder_forward.1} parent=11 // pred_fallthru
        _
      // Predicated region
      $region17: #{decoder_forward.1} parent=11 // pred_check
        %p299 = pneg %p87
      $region18: #{decoder_forward.1} parent=11 // pred_check_branch
        %301 = sbr.rel (%p299) target = $region20
      $region19: #{decoder_forward.1} parent=11 // pred_region
        _
      $region20: #{decoder_forward.1} parent=11 // pred_fallthru
        _
      // Predicated region
      $region21: #{decoder_forward.1} parent=11 // pred_check
        %p302 = pneg %p108
      $region22: #{decoder_forward.1} parent=11 // pred_check_branch
        %304 = sbr.rel (%p302) target = $region24
      $region23: #{decoder_forward.1} parent=11 // pred_region
        _
      $region24: #{decoder_forward.1} parent=11 // pred_fallthru
        _
      // Predicated region
      $region25: #{decoder_forward.1} parent=11 // pred_check
        %p305 = pneg %p129
      $region26: #{decoder_forward.1} parent=11 // pred_check_branch
        %307 = sbr.rel (%p305) target = $region28
      $region27: #{decoder_forward.1} parent=11 // pred_region
        _
      $region28: #{decoder_forward.1} parent=11 // pred_fallthru
        _
      // Predicated region
      $region29: #{decoder_forward.1} parent=11 // pred_check
        %p308 = pneg %p150
      $region30: #{decoder_forward.1} parent=11 // pred_check_branch
        %310 = sbr.rel (%p308) target = $region32
      $region31: #{decoder_forward.1} parent=11 // pred_region
        _
      $region32: #{decoder_forward.1} parent=11 // pred_fallthru
        _
      // Predicated region
      $region33: #{decoder_forward.1} parent=11 // pred_check
        %p311 = pneg %p171
      $region34: #{decoder_forward.1} parent=11 // pred_check_branch
        %313 = sbr.rel (%p311) target = $region36
      $region35: #{decoder_forward.1} parent=11 // pred_region
        _
      $region36: #{decoder_forward.1} parent=11 // pred_fallthru
        _
      // Predicated region
      $region37: #{decoder_forward.1} parent=11 // pred_check
        %p314 = pneg %p192
      $region38: #{decoder_forward.1} parent=11 // pred_check_branch
        %316 = sbr.rel (%p314) target = $region40
      $region39: #{decoder_forward.1} parent=11 // pred_region
        _
      $region40: #{decoder_forward.1} parent=11 // pred_fallthru
        _
      // Predicated region
      $region41: #{decoder_forward.1} parent=11 // pred_check
        %p317 = pneg %p213
      $region42: #{decoder_forward.1} parent=11 // pred_check_branch
        %319 = sbr.rel (%p317) target = $region44
      $region43: #{decoder_forward.1} parent=11 // pred_region
        _
      $region44: #{decoder_forward.1} parent=11 // pred_fallthru
        _
      // Predicated region
      $region45: #{decoder_forward.1} parent=11 // pred_check
        %p320 = pneg %p234
      $region46: #{decoder_forward.1} parent=11 // pred_check_branch
        %322 = sbr.rel (%p320) target = $region48
      $region47: #{decoder_forward.1} parent=11 // pred_region
        _
      $region48: #{decoder_forward.1} parent=11 // pred_fallthru
        _
      // Predicated region
      $region49: #{decoder_forward.1} parent=11 // pred_check
        %p323 = pneg %p255
      $region50: #{decoder_forward.1} parent=11 // pred_check_branch
        %325 = sbr.rel (%p323) target = $region52
      $region51: #{decoder_forward.1} parent=11 // pred_region
        _
      $region52: #{decoder_forward.1} parent=11 // pred_fallthru
        _
    $region12: #{decoder_forward.1} parent=5 // pred_fallthru
      _
    %p326 = scmp.lt.s32.totalorder %s19, 2
    // Predicated region
    $region53: #{decoder_forward.1} parent=5 // pred_check
      %p327 = pneg %p326
    $region54: #{decoder_forward.1} parent=5 // pred_check_branch
      %329 = sbr.rel (%p327) target = $region56
    $region55: #{decoder_forward.1} parent=5 // pred_region
      // Predicated region
      $region57: #{decoder_forward.1} parent=55 // pred_check
        %p330 = pneg %p39
      $region58: #{decoder_forward.1} parent=55 // pred_check_branch
        %332 = sbr.rel (%p330) target = $region60
      $region59: #{decoder_forward.1} parent=55 // pred_region
        %p333 = scmp.lt.s32.totalorder %s19, 1
        %s334 = scalar_select %p333, %s19, 1
        %s335 = smul.addr %s334, 8
        %s336 = smul.addr %s335, 8
        %s337 = scalar_lea.vmem %s0, %s336
      $region60: #{decoder_forward.1} parent=55 // pred_fallthru
        _
    $region56: #{decoder_forward.1} parent=5 // pred_fallthru
      _
    %p338 = scmp.le.s32.totalorder 1, %s19
    %p339 = scmp.lt.s32.totalorder %s19, 3
    %p340 = pnand %p338, %p339
    %p341 = pneg %p340
    // Predicated region
    $region61: #{decoder_forward.1} parent=5 // pred_check
      _
    $region62: #{decoder_forward.1} parent=5 // pred_check_branch
      %343 = sbr.rel (%p340) target = $region64
    $region63: #{decoder_forward.1} parent=5 // pred_region
      %s344 = ssub.s32 %s19, 1
      %p345 = scmp.lt.s32.totalorder %s24, 1
      %s346 = scalar_select %p345, %s24, 1
      %s347 = smul.addr %s346, 8
      %s348 = smul.addr %s347, 8
      %s349 = scalar_lea.vmem %s0, %s348
      %p350 = pneg %p45
      %p351 = pneg %p42
      %p352 = pneg %p66
      %p353 = pneg %p63
      %p354 = pneg %p87
      %p355 = pneg %p84
      %p356 = pneg %p108
      %p357 = pneg %p105
      %p358 = pneg %p129
      %p359 = pneg %p126
      %p360 = pneg %p150
      %p361 = pneg %p147
      %p362 = pneg %p171
      %p363 = pneg %p168
      %p364 = pneg %p192
      %p365 = pneg %p189
      %p366 = pneg %p213
      %p367 = pneg %p210
      %p368 = pneg %p234
      %p369 = pneg %p231
      %p370 = pneg %p255
      %p371 = pneg %p252
      %p372 = pneg %p281
      %p373 = pneg %p278
      %p374 = scmp.lt.s32.totalorder %s24, 1
      %s375 = scalar_select %p374, %s24, 1
      %s376 = smul.addr %s375, 2
      %s377 = smul.addr %s376, 4
      %s378 = scalar_lea.vmem %s11, %s377
      %p379 = scmp.lt.s32.totalorder %s24, 1
      %s380 = scalar_select %p379, %s24, 1
      %s381 = smul.addr %s380, 8
      %s382 = smul.addr %s381, 8
      %s383 = scalar_lea.vmem %s0, %s382
      %p384 = scmp.lt.s32.totalorder %s24, 1
      %s385 = scalar_select %p384, %s24, 1
      %s386 = smul.addr %s385, 2
      %s387 = smul.addr %s386, 4
      %s388 = scalar_lea.vmem %s11, %s387
      %vm389 = vcmask 261120
      %390 = vst.msk [vmem:[#allocation2] sm:$0xff] %vm389, 0.0
      %vm391 = vcmask 253952
      %392 = vst.msk [vmem:[#allocation2 + $0x8] sm:$0x1] %vm391, 0.0
      %393 = vst.msk [vmem:[#allocation2 + $0x10] sm:$0xff] %vm389, 0.0
      %394 = vst.msk [vmem:[#allocation2 + $0x18] sm:$0x1] %vm391, 0.0
      %395 = vst.msk [vmem:[#allocation2 + $0x20] sm:$0xff] %vm389, 0.0
      %396 = vst.msk [vmem:[#allocation2 + $0x28] sm:$0x1] %vm391, 0.0
      %397 = vst.msk [vmem:[#allocation2 + $0x30] sm:$0xff] %vm389, 0.0
      %398 = vst.msk [vmem:[#allocation2 + $0x38] sm:$0x1] %vm391, 0.0
      %399 = vst.msk [vmem:[#allocation2 + $0x40] sm:$0xff] %vm389, 0.0
      %400 = vst.msk [vmem:[#allocation2 + $0x48] sm:$0x1] %vm391, 0.0
      %401 = vst.msk [vmem:[#allocation2 + $0x50] sm:$0xff] %vm389, 0.0
      %402 = vst.msk [vmem:[#allocation2 + $0x58] sm:$0x1] %vm391, 0.0
      %403 = vst.msk [vmem:[#allocation2 + $0x60] sm:$0xff] %vm389, 0.0
      %404 = vst.msk [vmem:[#allocation2 + $0x68] sm:$0x1] %vm391, 0.0
      %405 = vst.msk [vmem:[#allocation2 + $0x70] sm:$0xff] %vm389, 0.0
      %406 = vst.msk [vmem:[#allocation2 + $0x78] sm:$0x1] %vm391, 0.0
      %407 = vst.msk [vmem:[#allocation2 + $0x80] sm:$0xff] %vm389, 0.0
      %408 = vst.msk [vmem:[#allocation2 + $0x88] sm:$0x1] %vm391, 0.0
      %v409 = vld [vmem:[%s383] sm:$0xff]
      %v410 = vld [vmem:[%s383 + $0x8] sm:$0xff]
      %v411 = vld [vmem:[%s383 + $0x10] sm:$0xff]
      %v412 = vld [vmem:[%s383 + $0x18] sm:$0xff]
      %v413 = vld [vmem:[%s383 + $0x20] sm:$0xff]
      %v414 = vld [vmem:[%s383 + $0x28] sm:$0xff]
      %v415 = vld [vmem:[%s383 + $0x30] sm:$0xff]
      %v416 = vld [vmem:[%s383 + $0x38] sm:$0xff]
      %417 = vst.msk [vmem:[#allocation2] sm:$0xff] %vm389, %v409
      %418 = vst.msk [vmem:[#allocation2 + $0x10] sm:$0xff] %vm389, %v410
      %419 = vst.msk [vmem:[#allocation2 + $0x20] sm:$0xff] %vm389, %v411
      %420 = vst.msk [vmem:[#allocation2 + $0x30] sm:$0xff] %vm389, %v412
      %421 = vst.msk [vmem:[#allocation2 + $0x40] sm:$0xff] %vm389, %v413
      %422 = vst.msk [vmem:[#allocation2 + $0x50] sm:$0xff] %vm389, %v414
      %423 = vst.msk [vmem:[#allocation2 + $0x60] sm:$0xff] %vm389, %v415
      %424 = vst.msk [vmem:[#allocation2 + $0x70] sm:$0xff] %vm389, %v416
      %v425 = vld [vmem:[#allocation2] sm:$0xff]
      %v426 = vld [vmem:[#allocation2 + $0x10] sm:$0xff]
      %v427 = vld [vmem:[#allocation2 + $0x20] sm:$0xff]
      %v428 = vld [vmem:[#allocation2 + $0x30] sm:$0xff]
      %v429 = vld [vmem:[#allocation2 + $0x40] sm:$0xff]
      %v430 = vld [vmem:[#allocation2 + $0x50] sm:$0xff]
      %v431 = vld [vmem:[#allocation2 + $0x60] sm:$0xff]
      %v432 = vld [vmem:[#allocation2 + $0x70] sm:$0xff]
      %v433 = vld [vmem:[%s1] sm:$0xff]
      %v434 = vld [vmem:[%s1 + $0x8] sm:$0xff]
      %v435 = vld [vmem:[%s1 + $0x10] sm:$0xff]
      %v436 = vld [vmem:[%s1 + $0x18] sm:$0xff]
      %v437 = vld [vmem:[%s5] sm:$0x1]
      %v439 = vlaneseq
      %v440 = vshrl.u32 %v439, 7
      %v441 = vsub.s32 0, %v440
      %v442 = vrot.slane %v437, %v441
      %v445 = vsel %vm389, %v425, 0
      %v448 = vsel %vm389, %v426, 0
      %v451 = vsel %vm389, %v427, 0
      %v454 = vsel %vm389, %v428, 0
      %v457 = vsel %vm389, %v429, 0
      %v460 = vsel %vm389, %v430, 0
      %v463 = vsel %vm389, %v431, 0
      %v466 = vsel %vm389, %v432, 0
      %468 = vmatprep.subr.mxu0 0.0
      %469 = vmatpush1.msra.mxu0 %v433
      %470 = vmatprep.subr.mxu0 0.0
      %471 = vmatpush1.msra.mxu0 %v434
      %472 = vmatprep.subr.mxu0 0.0
      %473 = vmatpush1.msra.mxu0 %v435
      %474 = vmatprep.subr.mxu0 0.0
      %475 = vmatpush1.msra.mxu0 %v436
      %476 = vmatprep.subr.mxu0 0.0
      %477 = vmatpush1.msra.mxu0 0.0
      %478 = vmatprep.subr.mxu0 0.0
      %479 = vmatpush1.msra.mxu0 0.0
      %480 = vmatprep.subr.mxu0 0.0
      %481 = vmatpush1.msra.mxu0 0.0
      %482 = vmatprep.subr.mxu0 0.0
      %483 = vmatpush1.msra.mxu0 0.0
      %484 = vmatprep.subr.mxu0 0.0
      %485 = vmatpush1.msra.mxu0 0.0
      %486 = vmatprep.subr.mxu0 0.0
      %487 = vmatpush1.msra.mxu0 0.0
      %488 = vmatprep.subr.mxu0 0.0
      %489 = vmatpush1.msra.mxu0 0.0
      %490 = vmatprep.subr.mxu0 0.0
      %491 = vmatpush1.msra.mxu0 0.0
      %492 = vmatprep.subr.mxu0 0.0
      %493 = vmatpush1.msra.mxu0 0.0
      %494 = vmatprep.subr.mxu0 0.0
      %495 = vmatpush1.msra.mxu0 0.0
      %496 = vmatprep.subr.mxu0 0.0
      %497 = vmatpush1.msra.mxu0 0.0
      %498 = vmatprep.subr.mxu0 0.0
      %499 = vmatpush1.msra.mxu0 0.0
      %500 = vmatprep.subr.mxu0 0.0
      %501 = vmatpush1.msra.mxu0 0.0
      %502 = vmatprep.subr.mxu0 0.0
      %503 = vmatpush1.msra.mxu0 0.0
      %504 = vmatprep.subr.mxu0 0.0
      %505 = vmatpush1.msra.mxu0 0.0
      %506 = vmatprep.subr.mxu0 0.0
      %507 = vmatpush1.msra.mxu0 0.0
      %508 = vmatprep.subr.mxu0 0.0
      %509 = vmatpush1.msra.mxu0 0.0
      %510 = vmatprep.subr.mxu0 0.0
      %511 = vmatpush1.msra.mxu0 0.0
      %512 = vmatprep.subr.mxu0 0.0
      %513 = vmatpush1.msra.mxu0 0.0
      %514 = vmatprep.subr.mxu0 0.0
      %515 = vmatpush1.msra.mxu0 0.0
      %516 = vmatprep.subr.mxu0 0.0
      %517 = vmatpush1.msra.mxu0 0.0
      %518 = vmatprep.subr.mxu0 0.0
      %519 = vmatpush1.msra.mxu0 0.0
      %520 = vmatprep.subr.mxu0 0.0
      %521 = vmatpush1.msra.mxu0 0.0
      %522 = vmatprep.subr.mxu0 0.0
      %523 = vmatpush1.msra.mxu0 0.0
      %524 = vmatprep.subr.mxu0 0.0
      %525 = vmatpush1.msra.mxu0 0.0
      %526 = vmatprep.subr.mxu0 0.0
      %527 = vmatpush1.msra.mxu0 0.0
      %528 = vmatprep.subr.mxu0 0.0
      %529 = vmatpush1.msra.mxu0 0.0
      %530 = vmatprep.subr.mxu0 0.0
      %531 = vmatpush1.msra.mxu0 0.0
      %532 = vmatprep.mubr.f32.mxu0 0.0
      %533 = vmatmul.mubr.f32.gmra.mrb[0].mxu0 %v445
      %v534 = vpop.f32.mrb[0].mxu0
      %v535 = vadd.f32 %v442, %v534
      %v536 = vpop.f32.mrb[0].mxu0
      %537 = vmatprep.mubr.f32.mxu0 0.0
      %538 = vmatmul.mubr.f32.gmra.mrb[0].mxu0 %v448
      %v539 = vpop.f32.mrb[0].mxu0
      %v540 = vadd.f32 %v442, %v539
      %v541 = vpop.f32.mrb[0].mxu0
      %542 = vmatprep.mubr.f32.mxu0 0.0
      %543 = vmatmul.mubr.f32.gmra.mrb[0].mxu0 %v451
      %v544 = vpop.f32.mrb[0].mxu0
      %v545 = vadd.f32 %v442, %v544
      %v546 = vpop.f32.mrb[0].mxu0
      %547 = vmatprep.mubr.f32.mxu0 0.0
      %548 = vmatmul.mubr.f32.gmra.mrb[0].mxu0 %v454
      %v549 = vpop.f32.mrb[0].mxu0
      %v550 = vadd.f32 %v442, %v549
      %v551 = vpop.f32.mrb[0].mxu0
      %552 = vmatprep.mubr.f32.mxu0 0.0
      %553 = vmatmul.mubr.f32.gmra.mrb[0].mxu0 %v457
      %v554 = vpop.f32.mrb[0].mxu0
      %v555 = vadd.f32 %v442, %v554
      %v556 = vpop.f32.mrb[0].mxu0
      %557 = vmatprep.mubr.f32.mxu0 0.0
      %558 = vmatmul.mubr.f32.gmra.mrb[0].mxu0 %v460
      %v559 = vpop.f32.mrb[0].mxu0
      %v560 = vadd.f32 %v442, %v559
      %v561 = vpop.f32.mrb[0].mxu0
      %562 = vmatprep.mubr.f32.mxu0 0.0
      %563 = vmatmul.mubr.f32.gmra.mrb[0].mxu0 %v463
      %v564 = vpop.f32.mrb[0].mxu0
      %v565 = vadd.f32 %v442, %v564
      %v566 = vpop.f32.mrb[0].mxu0
      %567 = vmatprep.mubr.f32.mxu0 0.0
      %568 = vmatmul.mubr.f32.gmra.mrb[0].mxu0 %v466
      %v569 = vpop.f32.mrb[0].mxu0
      %v570 = vadd.f32 %v442, %v569
      %v571 = vpop.f32.mrb[0].mxu0
      %572 = vdwg.mxu0
      %v573 = vmax.f32 %v535, 0.0
      %v574 = vmax.f32 %v540, 0.0
      %v575 = vmax.f32 %v545, 0.0
      %v576 = vmax.f32 %v550, 0.0
      %v577 = vmax.f32 %v555, 0.0
      %v578 = vmax.f32 %v560, 0.0
      %v579 = vmax.f32 %v565, 0.0
      %v580 = vmax.f32 %v570, 0.0
      %v581 = vld [vmem:[#allocation2 + $0x1] sm:$0xff]
      %v582 = vld [vmem:[#allocation2 + $0x11] sm:$0xff]
      %v583 = vld [vmem:[#allocation2 + $0x21] sm:$0xff]
      %v584 = vld [vmem:[#allocation2 + $0x31] sm:$0xff]
      %v585 = vld [vmem:[#allocation2 + $0x41] sm:$0xff]
      %v586 = vld [vmem:[#allocation2 + $0x51] sm:$0xff]
      %v587 = vld [vmem:[#allocation2 + $0x61] sm:$0xff]
      %v588 = vld [vmem:[#allocation2 + $0x71] sm:$0xff]
      %589 = vrot.lane.b32.xlu0 %v425, 32
      %v590 = vpop.permute.xlu0 %589
      %591 = vrot.lane.b32.xlu0 %v426, 32
      %v592 = vpop.permute.xlu0 %591
      %593 = vrot.lane.b32.xlu0 %v427, 32
      %v594 = vpop.permute.xlu0 %593
      %595 = vrot.lane.b32.xlu0 %v428, 32
      %v596 = vpop.permute.xlu0 %595
      %597 = vrot.lane.b32.xlu0 %v429, 32
      %v598 = vpop.permute.xlu0 %597
      %599 = vrot.lane.b32.xlu0 %v430, 32
      %v600 = vpop.permute.xlu0 %599
      %601 = vrot.lane.b32.xlu0 %v431, 32
      %v602 = vpop.permute.xlu0 %601
      %603 = vrot.lane.b32.xlu0 %v432, 32
      %v604 = vpop.permute.xlu0 %603
      %v613 = vsel %vm389, %v581, %v590
      %v614 = vsel %vm389, %v582, %v592
      %v615 = vsel %vm389, %v583, %v594
      %v616 = vsel %vm389, %v584, %v596
      %v617 = vsel %vm389, %v585, %v598
      %v618 = vsel %vm389, %v586, %v600
      %v619 = vsel %vm389, %v587, %v602
      %v620 = vsel %vm389, %v588, %v604
      %v621 = vld [vmem:[%s2] sm:$0xff]
      %v622 = vld [vmem:[%s2 + $0x8] sm:$0xff]
      %v623 = vld [vmem:[%s2 + $0x10] sm:$0xff]
      %v624 = vld [vmem:[%s2 + $0x18] sm:$0xff]
      %v625 = vld [vmem:[%s2 + $0x20] sm:$0xff]
      %v626 = vld [vmem:[%s2 + $0x28] sm:$0xff]
      %v627 = vld [vmem:[%s2 + $0x30] sm:$0xff]
      %v628 = vld [vmem:[%s2 + $0x38] sm:$0xff]
      %vm629 = vcmask 523264
      %v631 = vsel %vm629, %v613, 0
      %v634 = vsel %vm629, %v614, 0
      %v637 = vsel %vm629, %v615, 0
      %v640 = vsel %vm629, %v616, 0
      %v643 = vsel %vm629, %v617, 0
      %v646 = vsel %vm629, %v618, 0
      %v649 = vsel %vm629, %v619, 0
      %v652 = vsel %vm629, %v620, 0
      %654 = vmatprep.subr.mxu0 0.0
      %655 = vmatpush1.msra.mxu0 %v621
      %656 = vmatprep.subr.mxu0 0.0
      %657 = vmatpush1.msra.mxu0 %v622
      %658 = vmatprep.subr.mxu0 0.0
      %659 = vmatpush1.msra.mxu0 %v623
      %660 = vmatprep.subr.mxu0 0.0
      %661 = vmatpush1.msra.mxu0 %v624
      %662 = vmatprep.subr.mxu0 0.0
      %663 = vmatpush1.msra.mxu0 %v625
      %664 = vmatprep.subr.mxu0 0.0
      %665 = vmatpush1.msra.mxu0 %v626
      %666 = vmatprep.subr.mxu0 0.0
      %667 = vmatpush1.msra.mxu0 %v627
      %668 = vmatprep.subr.mxu0 0.0
      %669 = vmatpush1.msra.mxu0 %v628
      %670 = vmatprep.subr.mxu0 0.0
      %671 = vmatpush1.msra.mxu0 0.0
      %672 = vmatprep.subr.mxu0 0.0
      %673 = vmatpush1.msra.mxu0 0.0
      %674 = vmatprep.subr.mxu0 0.0
      %675 = vmatpush1.msra.mxu0 0.0
      %676 = vmatprep.subr.mxu0 0.0
      %677 = vmatpush1.msra.mxu0 0.0
      %678 = vmatprep.subr.mxu0 0.0
      %679 = vmatpush1.msra.mxu0 0.0
      %680 = vmatprep.subr.mxu0 0.0
      %681 = vmatpush1.msra.mxu0 0.0
      %682 = vmatprep.subr.mxu0 0.0
      %683 = vmatpush1.msra.mxu0 0.0
      %684 = vmatprep.subr.mxu0 0.0
      %685 = vmatpush1.msra.mxu0 0.0
      %686 = vmatprep.subr.mxu0 0.0
      %687 = vmatpush1.msra.mxu0 0.0
      %688 = vmatprep.subr.mxu0 0.0
      %689 = vmatpush1.msra.mxu0 0.0
      %690 = vmatprep.subr.mxu0 0.0
      %691 = vmatpush1.msra.mxu0 0.0
      %692 = vmatprep.subr.mxu0 0.0
      %693 = vmatpush1.msra.mxu0 0.0
      %694 = vmatprep.subr.mxu0 0.0
      %695 = vmatpush1.msra.mxu0 0.0
      %696 = vmatprep.subr.mxu0 0.0
      %697 = vmatpush1.msra.mxu0 0.0
      %698 = vmatprep.subr.mxu0 0.0
      %699 = vmatpush1.msra.mxu0 0.0
      %700 = vmatprep.subr.mxu0 0.0
      %701 = vmatpush1.msra.mxu0 0.0
      %702 = vmatprep.subr.mxu0 0.0
      %703 = vmatpush1.msra.mxu0 0.0
      %704 = vmatprep.subr.mxu0 0.0
      %705 = vmatpush1.msra.mxu0 0.0
      %706 = vmatprep.subr.mxu0 0.0
      %707 = vmatpush1.msra.mxu0 0.0
      %708 = vmatprep.subr.mxu0 0.0
      %709 = vmatpush1.msra.mxu0 0.0
      %710 = vmatprep.subr.mxu0 0.0
      %711 = vmatpush1.msra.mxu0 0.0
      %712 = vmatprep.subr.mxu0 0.0
      %713 = vmatpush1.msra.mxu0 0.0
      %714 = vmatprep.subr.mxu0 0.0
      %715 = vmatpush1.msra.mxu0 0.0
      %716 = vmatprep.subr.mxu0 0.0
      %717 = vmatpush1.msra.mxu0 0.0
      %718 = vmatprep.mubr.f32.mxu0 0.0
      %719 = vmatmul.mubr.f32.gmra.mrb[0].mxu0 %v631
      %v720 = vpop.f32.mrb[0].mxu0
      %v721 = vadd.f32 %v442, %v720
      %v722 = vpop.f32.mrb[0].mxu0
      %723 = vmatprep.mubr.f32.mxu0 0.0
      %724 = vmatmul.mubr.f32.gmra.mrb[0].mxu0 %v634
      %v725 = vpop.f32.mrb[0].mxu0
      %v726 = vadd.f32 %v442, %v725
      %v727 = vpop.f32.mrb[0].mxu0
      %728 = vmatprep.mubr.f32.mxu0 0.0
      %729 = vmatmul.mubr.f32.gmra.mrb[0].mxu0 %v637
      %v730 = vpop.f32.mrb[0].mxu0
      %v731 = vadd.f32 %v442, %v730
      %v732 = vpop.f32.mrb[0].mxu0
      %733 = vmatprep.mubr.f32.mxu0 0.0
      %734 = vmatmul.mubr.f32.gmra.mrb[0].mxu0 %v640
      %v735 = vpop.f32.mrb[0].mxu0
      %v736 = vadd.f32 %v442, %v735
      %v737 = vpop.f32.mrb[0].mxu0
      %738 = vmatprep.mubr.f32.mxu0 0.0
      %739 = vmatmul.mubr.f32.gmra.mrb[0].mxu0 %v643
      %v740 = vpop.f32.mrb[0].mxu0
      %v741 = vadd.f32 %v442, %v740
      %v742 = vpop.f32.mrb[0].mxu0
      %743 = vmatprep.mubr.f32.mxu0 0.0
      %744 = vmatmul.mubr.f32.gmra.mrb[0].mxu0 %v646
      %v745 = vpop.f32.mrb[0].mxu0
      %v746 = vadd.f32 %v442, %v745
      %v747 = vpop.f32.mrb[0].mxu0
      %748 = vmatprep.mubr.f32.mxu0 0.0
      %749 = vmatmul.mubr.f32.gmra.mrb[0].mxu0 %v649
      %v750 = vpop.f32.mrb[0].mxu0
      %v751 = vadd.f32 %v442, %v750
      %v752 = vpop.f32.mrb[0].mxu0
      %753 = vmatprep.mubr.f32.mxu0 0.0
      %754 = vmatmul.mubr.f32.gmra.mrb[0].mxu0 %v652
      %v755 = vpop.f32.mrb[0].mxu0
      %v756 = vadd.f32 %v442, %v755
      %v757 = vpop.f32.mrb[0].mxu0
      %758 = vdwg.mxu0
      %v759 = vmax.f32 %v721, 0.0
      %v760 = vmax.f32 %v726, 0.0
      %v761 = vmax.f32 %v731, 0.0
      %v762 = vmax.f32 %v736, 0.0
      %v763 = vmax.f32 %v741, 0.0
      %v764 = vmax.f32 %v746, 0.0
      %v765 = vmax.f32 %v751, 0.0
      %v766 = vmax.f32 %v756, 0.0
      %s767 = scalar_lea.vmem [#allocation2], 16
      %v768 = vld [vmem:[%s767] sm:$0xff]
      %v769 = vld [vmem:[%s767 + $0x10] sm:$0xff]
      %v770 = vld [vmem:[%s767 + $0x20] sm:$0xff]
      %v771 = vld [vmem:[%s767 + $0x30] sm:$0xff]
      %v772 = vld [vmem:[%s767 + $0x40] sm:$0xff]
      %v773 = vld [vmem:[%s767 + $0x50] sm:$0xff]
      %v774 = vld [vmem:[%s767 + $0x60] sm:$0xff]
      %v775 = vld [vmem:[%s767 + $0x70] sm:$0xff]
      %v776 = vsel %vm389, %v768, %v590
      %v777 = vsel %vm389, %v769, %v592
      %v778 = vsel %vm389, %v770, %v594
      %v779 = vsel %vm389, %v771, %v596
      %v780 = vsel %vm389, %v772, %v598
      %v781 = vsel %vm389, %v773, %v600
      %v782 = vsel %vm389, %v774, %v602
      %v783 = vsel %vm389, %v775, %v604
      %v784 = vld [vmem:[%s3] sm:$0xff]
      %v785 = vld [vmem:[%s3 + $0x8] sm:$0xff]
      %v786 = vld [vmem:[%s3 + $0x10] sm:$0xff]
      %v787 = vld [vmem:[%s3 + $0x18] sm:$0xff]
      %v788 = vld [vmem:[%s3 + $0x20] sm:$0xff]
      %v789 = vld [vmem:[%s3 + $0x28] sm:$0xff]
      %v790 = vld [vmem:[%s3 + $0x30] sm:$0xff]
      %v791 = vld [vmem:[%s3 + $0x38] sm:$0xff]
      %v793 = vsel %vm629, %v776, 0
      %v796 = vsel %vm629, %v777, 0
      %v799 = vsel %vm629, %v778, 0
      %v802 = vsel %vm629, %v779, 0
      %v805 = vsel %vm629, %v780, 0
      %v808 = vsel %vm629, %v781, 0
      %v811 = vsel %vm629, %v782, 0
      %v814 = vsel %vm629, %v783, 0
      %816 = vmatprep.subr.mxu0 0.0
      %817 = vmatpush1.msra.mxu0 %v784
      %818 = vmatprep.subr.mxu0 0.0
      %819 = vmatpush1.msra.mxu0 %v785
      %820 = vmatprep.subr.mxu0 0.0
      %821 = vmatpush1.msra.mxu0 %v786
      %822 = vmatprep.subr.mxu0 0.0
      %823 = vmatpush1.msra.mxu0 %v787
      %824 = vmatprep.subr.mxu0 0.0
      %825 = vmatpush1.msra.mxu0 %v788
      %826 = vmatprep.subr.mxu0 0.0
      %827 = vmatpush1.msra.mxu0 %v789
      %828 = vmatprep.subr.mxu0 0.0
      %829 = vmatpush1.msra.mxu0 %v790
      %830 = vmatprep.subr.mxu0 0.0
      %831 = vmatpush1.msra.mxu0 %v791
      %832 = vmatprep.subr.mxu0 0.0
      %833 = vmatpush1.msra.mxu0 0.0
      %834 = vmatprep.subr.mxu0 0.0
      %835 = vmatpush1.msra.mxu0 0.0
      %836 = vmatprep.subr.mxu0 0.0
      %837 = vmatpush1.msra.mxu0 0.0
      %838 = vmatprep.subr.mxu0 0.0
      %839 = vmatpush1.msra.mxu0 0.0
      %840 = vmatprep.subr.mxu0 0.0
      %841 = vmatpush1.msra.mxu0 0.0
      %842 = vmatprep.subr.mxu0 0.0
      %843 = vmatpush1.msra.mxu0 0.0
      %844 = vmatprep.subr.mxu0 0.0
      %845 = vmatpush1.msra.mxu0 0.0
      %846 = vmatprep.subr.mxu0 0.0
      %847 = vmatpush1.msra.mxu0 0.0
      %848 = vmatprep.subr.mxu0 0.0
      %849 = vmatpush1.msra.mxu0 0.0
      %850 = vmatprep.subr.mxu0 0.0
      %851 = vmatpush1.msra.mxu0 0.0
      %852 = vmatprep.subr.mxu0 0.0
      %853 = vmatpush1.msra.mxu0 0.0
      %854 = vmatprep.subr.mxu0 0.0
      %855 = vmatpush1.msra.mxu0 0.0
      %856 = vmatprep.subr.mxu0 0.0
      %857 = vmatpush1.msra.mxu0 0.0
      %858 = vmatprep.subr.mxu0 0.0
      %859 = vmatpush1.msra.mxu0 0.0
      %860 = vmatprep.subr.mxu0 0.0
      %861 = vmatpush1.msra.mxu0 0.0
      %862 = vmatprep.subr.mxu0 0.0
      %863 = vmatpush1.msra.mxu0 0.0
      %864 = vmatprep.subr.mxu0 0.0
      %865 = vmatpush1.msra.mxu0 0.0
      %866 = vmatprep.subr.mxu0 0.0
      %867 = vmatpush1.msra.mxu0 0.0
      %868 = vmatprep.subr.mxu0 0.0
      %869 = vmatpush1.msra.mxu0 0.0
      %870 = vmatprep.subr.mxu0 0.0
      %871 = vmatpush1.msra.mxu0 0.0
      %872 = vmatprep.subr.mxu0 0.0
      %873 = vmatpush1.msra.mxu0 0.0
      %874 = vmatprep.subr.mxu0 0.0
      %875 = vmatpush1.msra.mxu0 0.0
      %876 = vmatprep.subr.mxu0 0.0
      %877 = vmatpush1.msra.mxu0 0.0
      %878 = vmatprep.subr.mxu0 0.0
      %879 = vmatpush1.msra.mxu0 0.0
      %880 = vmatprep.mubr.f32.mxu0 0.0
      %881 = vmatmul.mubr.f32.gmra.mrb[0].mxu0 %v793
      %v882 = vpop.f32.mrb[0].mxu0
      %v883 = vadd.f32 %v442, %v882
      %v884 = vpop.f32.mrb[0].mxu0
      %885 = vmatprep.mubr.f32.mxu0 0.0
      %886 = vmatmul.mubr.f32.gmra.mrb[0].mxu0 %v796
      %v887 = vpop.f32.mrb[0].mxu0
      %v888 = vadd.f32 %v442, %v887
      %v889 = vpop.f32.mrb[0].mxu0
      %890 = vmatprep.mubr.f32.mxu0 0.0
      %891 = vmatmul.mubr.f32.gmra.mrb[0].mxu0 %v799
      %v892 = vpop.f32.mrb[0].mxu0
      %v893 = vadd.f32 %v442, %v892
      %v894 = vpop.f32.mrb[0].mxu0
      %895 = vmatprep.mubr.f32.mxu0 0.0
      %896 = vmatmul.mubr.f32.gmra.mrb[0].mxu0 %v802
      %v897 = vpop.f32.mrb[0].mxu0
      %v898 = vadd.f32 %v442, %v897
      %v899 = vpop.f32.mrb[0].mxu0
      %900 = vmatprep.mubr.f32.mxu0 0.0
      %901 = vmatmul.mubr.f32.gmra.mrb[0].mxu0 %v805
      %v902 = vpop.f32.mrb[0].mxu0
      %v903 = vadd.f32 %v442, %v902
      %v904 = vpop.f32.mrb[0].mxu0
      %905 = vmatprep.mubr.f32.mxu0 0.0
      %906 = vmatmul.mubr.f32.gmra.mrb[0].mxu0 %v808
      %v907 = vpop.f32.mrb[0].mxu0
      %v908 = vadd.f32 %v442, %v907
      %v909 = vpop.f32.mrb[0].mxu0
      %910 = vmatprep.mubr.f32.mxu0 0.0
      %911 = vmatmul.mubr.f32.gmra.mrb[0].mxu0 %v811
      %v912 = vpop.f32.mrb[0].mxu0
      %v913 = vadd.f32 %v442, %v912
      %v914 = vpop.f32.mrb[0].mxu0
      %915 = vmatprep.mubr.f32.mxu0 0.0
      %916 = vmatmul.mubr.f32.gmra.mrb[0].mxu0 %v814
      %v917 = vpop.f32.mrb[0].mxu0
      %v918 = vadd.f32 %v442, %v917
      %v919 = vpop.f32.mrb[0].mxu0
      %920 = vdwg.mxu0
      %v921 = vmax.f32 %v883, 0.0
      %v922 = vmax.f32 %v888, 0.0
      %v923 = vmax.f32 %v893, 0.0
      %v924 = vmax.f32 %v898, 0.0
      %v925 = vmax.f32 %v903, 0.0
      %v926 = vmax.f32 %v908, 0.0
      %v927 = vmax.f32 %v913, 0.0
      %v928 = vmax.f32 %v918, 0.0
      %v929 = vld [vmem:[%s767 + $0x1] sm:$0xff]
      %v930 = vld [vmem:[%s767 + $0x11] sm:$0xff]
      %v931 = vld [vmem:[%s767 + $0x21] sm:$0xff]
      %v932 = vld [vmem:[%s767 + $0x31] sm:$0xff]
      %v933 = vld [vmem:[%s767 + $0x41] sm:$0xff]
      %v934 = vld [vmem:[%s767 + $0x51] sm:$0xff]
      %v935 = vld [vmem:[%s767 + $0x61] sm:$0xff]
      %v936 = vld [vmem:[%s767 + $0x71] sm:$0xff]
      %945 = vrot.lane.b32.xlu0 %v768, 32
      %v946 = vpop.permute.xlu0 %945
      %947 = vrot.lane.b32.xlu0 %v769, 32
      %v948 = vpop.permute.xlu0 %947
      %949 = vrot.lane.b32.xlu0 %v770, 32
      %v950 = vpop.permute.xlu0 %949
      %951 = vrot.lane.b32.xlu0 %v771, 32
      %v952 = vpop.permute.xlu0 %951
      %953 = vrot.lane.b32.xlu0 %v772, 32
      %v954 = vpop.permute.xlu0 %953
      %955 = vrot.lane.b32.xlu0 %v773, 32
      %v956 = vpop.permute.xlu0 %955
      %957 = vrot.lane.b32.xlu0 %v774, 32
      %v958 = vpop.permute.xlu0 %957
      %959 = vrot.lane.b32.xlu0 %v775, 32
      %v960 = vpop.permute.xlu0 %959
      %977 = vrot.lane.b32.xlu0 %v581, 64
      %v978 = vpop.permute.xlu0 %977
      %979 = vrot.lane.b32.xlu0 %v582, 64
      %v980 = vpop.permute.xlu0 %979
      %981 = vrot.lane.b32.xlu0 %v583, 64
      %v982 = vpop.permute.xlu0 %981
      %983 = vrot.lane.b32.xlu0 %v584, 64
      %v984 = vpop.permute.xlu0 %983
      %985 = vrot.lane.b32.xlu0 %v585, 64
      %v986 = vpop.permute.xlu0 %985
      %987 = vrot.lane.b32.xlu0 %v586, 64
      %v988 = vpop.permute.xlu0 %987
      %989 = vrot.lane.b32.xlu0 %v587, 64
      %v990 = vpop.permute.xlu0 %989
      %991 = vrot.lane.b32.xlu0 %v588, 64
      %v992 = vpop.permute.xlu0 %991
      %1001 = vrot.lane.b32.xlu0 %v425, 96
      %v1002 = vpop.permute.xlu0 %1001
      %1003 = vrot.lane.b32.xlu0 %v426, 96
      %v1004 = vpop.permute.xlu0 %1003
      %1005 = vrot.lane.b32.xlu0 %v427, 96
      %v1006 = vpop.permute.xlu0 %1005
      %1007 = vrot.lane.b32.xlu0 %v428, 96
      %v1008 = vpop.permute.xlu0 %1007
      %1009 = vrot.lane.b32.xlu0 %v429, 96
      %v1010 = vpop.permute.xlu0 %1009
      %1011 = vrot.lane.b32.xlu0 %v430, 96
      %v1012 = vpop.permute.xlu0 %1011
      %1013 = vrot.lane.b32.xlu0 %v431, 96
      %v1014 = vpop.permute.xlu0 %1013
      %1015 = vrot.lane.b32.xlu0 %v432, 96
      %v1016 = vpop.permute.xlu0 %1015
      %v1025 = vsel %vm389, %v929, %v946
      %v1026 = vsel %vm389, %v930, %v948
      %v1027 = vsel %vm389, %v931, %v950
      %v1028 = vsel %vm389, %v932, %v952
      %v1029 = vsel %vm389, %v933, %v954
      %v1030 = vsel %vm389, %v934, %v956
      %v1031 = vsel %vm389, %v935, %v958
      %v1032 = vsel %vm389, %v936, %v960
      %v1033 = vsel %vm629, %v1025, %v978
      %v1034 = vsel %vm629, %v1026, %v980
      %v1035 = vsel %vm629, %v1027, %v982
      %v1036 = vsel %vm629, %v1028, %v984
      %v1037 = vsel %vm629, %v1029, %v986
      %v1038 = vsel %vm629, %v1030, %v988
      %v1039 = vsel %vm629, %v1031, %v990
      %v1040 = vsel %vm629, %v1032, %v992
      %vm1041 = vcmask 785408
      %v1042 = vsel %vm1041, %v1033, %v1002
      %v1043 = vsel %vm1041, %v1034, %v1004
      %v1044 = vsel %vm1041, %v1035, %v1006
      %v1045 = vsel %vm1041, %v1036, %v1008
      %v1046 = vsel %vm1041, %v1037, %v1010
      %v1047 = vsel %vm1041, %v1038, %v1012
      %v1048 = vsel %vm1041, %v1039, %v1014
      %v1049 = vsel %vm1041, %v1040, %v1016
      %v1050 = vld [vmem:[%s4] sm:$0xff]
      %v1051 = vld [vmem:[%s4 + $0x8] sm:$0xff]
      %v1052 = vld [vmem:[%s4 + $0x10] sm:$0xff]
      %v1053 = vld [vmem:[%s4 + $0x18] sm:$0xff]
      %v1054 = vld [vmem:[%s4 + $0x20] sm:$0xff]
      %v1055 = vld [vmem:[%s4 + $0x28] sm:$0xff]
      %v1056 = vld [vmem:[%s4 + $0x30] sm:$0xff]
      %v1057 = vld [vmem:[%s4 + $0x38] sm:$0xff]
      %v1058 = vld [vmem:[%s4 + $0x40] sm:$0xff]
      %v1059 = vld [vmem:[%s4 + $0x48] sm:$0xff]
      %v1060 = vld [vmem:[%s4 + $0x50] sm:$0xff]
      %v1061 = vld [vmem:[%s4 + $0x58] sm:$0xff]
      %v1062 = vld [vmem:[%s4 + $0x60] sm:$0xff]
      %v1063 = vld [vmem:[%s4 + $0x68] sm:$0xff]
      %v1064 = vld [vmem:[%s4 + $0x70] sm:$0xff]
      %v1065 = vld [vmem:[%s4 + $0x78] sm:$0xff]
      %1066 = vmatprep.subr.mxu0 0.0
      %1067 = vmatpush1.msra.mxu0 %v1050
      %1068 = vmatprep.subr.mxu0 0.0
      %1069 = vmatpush1.msra.mxu0 %v1051
      %1070 = vmatprep.subr.mxu0 0.0
      %1071 = vmatpush1.msra.mxu0 %v1052
      %1072 = vmatprep.subr.mxu0 0.0
      %1073 = vmatpush1.msra.mxu0 %v1053
      %1074 = vmatprep.subr.mxu0 0.0
      %1075 = vmatpush1.msra.mxu0 %v1054
      %1076 = vmatprep.subr.mxu0 0.0
      %1077 = vmatpush1.msra.mxu0 %v1055
      %1078 = vmatprep.subr.mxu0 0.0
      %1079 = vmatpush1.msra.mxu0 %v1056
      %1080 = vmatprep.subr.mxu0 0.0
      %1081 = vmatpush1.msra.mxu0 %v1057
      %1082 = vmatprep.subr.mxu0 0.0
      %1083 = vmatpush1.msra.mxu0 %v1058
      %1084 = vmatprep.subr.mxu0 0.0
      %1085 = vmatpush1.msra.mxu0 %v1059
      %1086 = vmatprep.subr.mxu0 0.0
      %1087 = vmatpush1.msra.mxu0 %v1060
      %1088 = vmatprep.subr.mxu0 0.0
      %1089 = vmatpush1.msra.mxu0 %v1061
      %1090 = vmatprep.subr.mxu0 0.0
      %1091 = vmatpush1.msra.mxu0 %v1062
      %1092 = vmatprep.subr.mxu0 0.0
      %1093 = vmatpush1.msra.mxu0 %v1063
      %1094 = vmatprep.subr.mxu0 0.0
      %1095 = vmatpush1.msra.mxu0 %v1064
      %1096 = vmatprep.subr.mxu0 0.0
      %1097 = vmatpush1.msra.mxu0 %v1065
      %1098 = vmatprep.subr.mxu0 0.0
      %1099 = vmatpush1.msra.mxu0 0.0
      %1100 = vmatprep.subr.mxu0 0.0
      %1101 = vmatpush1.msra.mxu0 0.0
      %1102 = vmatprep.subr.mxu0 0.0
      %1103 = vmatpush1.msra.mxu0 0.0
      %1104 = vmatprep.subr.mxu0 0.0
      %1105 = vmatpush1.msra.mxu0 0.0
      %1106 = vmatprep.subr.mxu0 0.0
      %1107 = vmatpush1.msra.mxu0 0.0
      %1108 = vmatprep.subr.mxu0 0.0
      %1109 = vmatpush1.msra.mxu0 0.0
      %1110 = vmatprep.subr.mxu0 0.0
      %1111 = vmatpush1.msra.mxu0 0.0
      %1112 = vmatprep.subr.mxu0 0.0
      %1113 = vmatpush1.msra.mxu0 0.0
      %1114 = vmatprep.subr.mxu0 0.0
      %1115 = vmatpush1.msra.mxu0 0.0
      %1116 = vmatprep.subr.mxu0 0.0
      %1117 = vmatpush1.msra.mxu0 0.0
      %1118 = vmatprep.subr.mxu0 0.0
      %1119 = vmatpush1.msra.mxu0 0.0
      %1120 = vmatprep.subr.mxu0 0.0
      %1121 = vmatpush1.msra.mxu0 0.0
      %1122 = vmatprep.subr.mxu0 0.0
      %1123 = vmatpush1.msra.mxu0 0.0
      %1124 = vmatprep.subr.mxu0 0.0
      %1125 = vmatpush1.msra.mxu0 0.0
      %1126 = vmatprep.subr.mxu0 0.0
      %1127 = vmatpush1.msra.mxu0 0.0
      %1128 = vmatprep.subr.mxu0 0.0
      %1129 = vmatpush1.msra.mxu0 0.0
      %1130 = vmatprep.mubr.f32.mxu0 0.0
      %1131 = vmatmul.mubr.f32.gmra.mrb[0].mxu0 %v1042
      %v1132 = vpop.f32.mrb[0].mxu0
      %v1133 = vadd.f32 %v442, %v1132
      %v1134 = vpop.f32.mrb[0].mxu0
      %1135 = vmatprep.mubr.f32.mxu0 0.0
      %1136 = vmatmul.mubr.f32.gmra.mrb[0].mxu0 %v1043
      %v1137 = vpop.f32.mrb[0].mxu0
      %v1138 = vadd.f32 %v442, %v1137
      %v1139 = vpop.f32.mrb[0].mxu0
      %1140 = vmatprep.mubr.f32.mxu0 0.0
      %1141 = vmatmul.mubr.f32.gmra.mrb[0].mxu0 %v1044
      %v1142 = vpop.f32.mrb[0].mxu0
      %v1143 = vadd.f32 %v442, %v1142
      %v1144 = vpop.f32.mrb[0].mxu0
      %1145 = vmatprep.mubr.f32.mxu0 0.0
      %1146 = vmatmul.mubr.f32.gmra.mrb[0].mxu0 %v1045
      %v1147 = vpop.f32.mrb[0].mxu0
      %v1148 = vadd.f32 %v442, %v1147
      %v1149 = vpop.f32.mrb[0].mxu0
      %1150 = vmatprep.mubr.f32.mxu0 0.0
      %1151 = vmatmul.mubr.f32.gmra.mrb[0].mxu0 %v1046
      %v1152 = vpop.f32.mrb[0].mxu0
      %v1153 = vadd.f32 %v442, %v1152
      %v1154 = vpop.f32.mrb[0].mxu0
      %1155 = vmatprep.mubr.f32.mxu0 0.0
      %1156 = vmatmul.mubr.f32.gmra.mrb[0].mxu0 %v1047
      %v1157 = vpop.f32.mrb[0].mxu0
      %v1158 = vadd.f32 %v442, %v1157
      %v1159 = vpop.f32.mrb[0].mxu0
      %1160 = vmatprep.mubr.f32.mxu0 0.0
      %1161 = vmatmul.mubr.f32.gmra.mrb[0].mxu0 %v1048
      %v1162 = vpop.f32.mrb[0].mxu0
      %v1163 = vadd.f32 %v442, %v1162
      %v1164 = vpop.f32.mrb[0].mxu0
      %1165 = vmatprep.mubr.f32.mxu0 0.0
      %1166 = vmatmul.mubr.f32.gmra.mrb[0].mxu0 %v1049
      %v1167 = vpop.f32.mrb[0].mxu0
      %v1168 = vadd.f32 %v442, %v1167
      %v1169 = vpop.f32.mrb[0].mxu0
      %1170 = vdwg.mxu0
      %v1171 = vmax.f32 %v1133, 0.0
      %v1172 = vmax.f32 %v1138, 0.0
      %v1173 = vmax.f32 %v1143, 0.0
      %v1174 = vmax.f32 %v1148, 0.0
      %v1175 = vmax.f32 %v1153, 0.0
      %v1176 = vmax.f32 %v1158, 0.0
      %v1177 = vmax.f32 %v1163, 0.0
      %v1178 = vmax.f32 %v1168, 0.0
      %v1187 = vcombine.high %v573, %v573
      %v1189 = vunpack.c.l.s4 1966171168
      %v1190 = vunpack.c.0.s8 %v1189
      %v1191 = vlaneseq
      %v1192 = vshrl.u32 %v1191, 7
      %v1193 = vsub.s32 %v1190, %v1192
      %v1194 = vrot.slane %v573, %v1193
      %v1196 = vunpack.c.l.s4 1966171168
      %v1197 = vunpack.c.0.s8 %v1196
      %v1198 = vlaneseq
      %v1199 = vshrl.u32 %v1198, 7
      %v1200 = vsub.s32 %v1197, %v1199
      %v1201 = vrot.slane %v1187, %v1200
      %v1202 = vcombine.high %v1194, %v1194
      %v1203 = vcombine.high %v1201, %v1201
      %v1205 = vunpack.c.l.s4 1966171168
      %v1206 = vunpack.c.0.s8 %v1205
      %v1207 = vlaneseq
      %v1208 = vshrl.u32 %v1207, 7
      %v1209 = vsub.s32 %v1206, %v1208
      %v1210 = vrot.slane %v1194, %v1209
      %v1212 = vunpack.c.l.s4 1966171168
      %v1213 = vunpack.c.0.s8 %v1212
      %v1214 = vlaneseq
      %v1215 = vshrl.u32 %v1214, 7
      %v1216 = vsub.s32 %v1213, %v1215
      %v1217 = vrot.slane %v1201, %v1216
      %v1219 = vunpack.c.l.s4 1966171168
      %v1220 = vunpack.c.0.s8 %v1219
      %v1221 = vlaneseq
      %v1222 = vshrl.u32 %v1221, 7
      %v1223 = vsub.s32 %v1220, %v1222
      %v1224 = vrot.slane %v1202, %v1223
      %v1226 = vunpack.c.l.s4 1966171168
      %v1227 = vunpack.c.0.s8 %v1226
      %v1228 = vlaneseq
      %v1229 = vshrl.u32 %v1228, 7
      %v1230 = vsub.s32 %v1227, %v1229
      %v1231 = vrot.slane %v1203, %v1230
      %v1232 = vcombine.high %v1210, %v1210
      %v1233 = vcombine.high %v1217, %v1217
      %v1234 = vcombine.high %v1224, %v1224
      %v1235 = vcombine.high %v1231, %v1231
      %v1236 = vcombine.high %v574, %v574
      %v1238 = vunpack.c.l.s4 1966171168
      %v1239 = vunpack.c.0.s8 %v1238
      %v1240 = vlaneseq
      %v1241 = vshrl.u32 %v1240, 7
      %v1242 = vsub.s32 %v1239, %v1241
      %v1243 = vrot.slane %v574, %v1242
      %v1245 = vunpack.c.l.s4 1966171168
      %v1246 = vunpack.c.0.s8 %v1245
      %v1247 = vlaneseq
      %v1248 = vshrl.u32 %v1247, 7
      %v1249 = vsub.s32 %v1246, %v1248
      %v1250 = vrot.slane %v1236, %v1249
      %v1251 = vcombine.high %v1243, %v1243
      %v1252 = vcombine.high %v1250, %v1250
      %v1254 = vunpack.c.l.s4 1966171168
      %v1255 = vunpack.c.0.s8 %v1254
      %v1256 = vlaneseq
      %v1257 = vshrl.u32 %v1256, 7
      %v1258 = vsub.s32 %v1255, %v1257
      %v1259 = vrot.slane %v1243, %v1258
      %v1261 = vunpack.c.l.s4 1966171168
      %v1262 = vunpack.c.0.s8 %v1261
      %v1263 = vlaneseq
      %v1264 = vshrl.u32 %v1263, 7
      %v1265 = vsub.s32 %v1262, %v1264
      %v1266 = vrot.slane %v1250, %v1265
      %v1268 = vunpack.c.l.s4 1966171168
      %v1269 = vunpack.c.0.s8 %v1268
      %v1270 = vlaneseq
      %v1271 = vshrl.u32 %v1270, 7
      %v1272 = vsub.s32 %v1269, %v1271
      %v1273 = vrot.slane %v1251, %v1272
      %v1275 = vunpack.c.l.s4 1966171168
      %v1276 = vunpack.c.0.s8 %v1275
      %v1277 = vlaneseq
      %v1278 = vshrl.u32 %v1277, 7
      %v1279 = vsub.s32 %v1276, %v1278
      %v1280 = vrot.slane %v1252, %v1279
      %v1281 = vcombine.high %v1259, %v1259
      %v1282 = vcombine.high %v1266, %v1266
      %v1283 = vcombine.high %v1273, %v1273
      %v1284 = vcombine.high %v1280, %v1280
      %v1285 = vcombine.high %v575, %v575
      %v1287 = vunpack.c.l.s4 1966171168
      %v1288 = vunpack.c.0.s8 %v1287
      %v1289 = vlaneseq
      %v1290 = vshrl.u32 %v1289, 7
      %v1291 = vsub.s32 %v1288, %v1290
      %v1292 = vrot.slane %v575, %v1291
      %v1294 = vunpack.c.l.s4 1966171168
      %v1295 = vunpack.c.0.s8 %v1294
      %v1296 = vlaneseq
      %v1297 = vshrl.u32 %v1296, 7
      %v1298 = vsub.s32 %v1295, %v1297
      %v1299 = vrot.slane %v1285, %v1298
      %v1300 = vcombine.high %v1292, %v1292
      %v1301 = vcombine.high %v1299, %v1299
      %v1303 = vunpack.c.l.s4 1966171168
      %v1304 = vunpack.c.0.s8 %v1303
      %v1305 = vlaneseq
      %v1306 = vshrl.u32 %v1305, 7
      %v1307 = vsub.s32 %v1304, %v1306
      %v1308 = vrot.slane %v1292, %v1307
      %v1310 = vunpack.c.l.s4 1966171168
      %v1311 = vunpack.c.0.s8 %v1310
      %v1312 = vlaneseq
      %v1313 = vshrl.u32 %v1312, 7
      %v1314 = vsub.s32 %v1311, %v1313
      %v1315 = vrot.slane %v1299, %v1314
      %v1317 = vunpack.c.l.s4 1966171168
      %v1318 = vunpack.c.0.s8 %v1317
      %v1319 = vlaneseq
      %v1320 = vshrl.u32 %v1319, 7
      %v1321 = vsub.s32 %v1318, %v1320
      %v1322 = vrot.slane %v1300, %v1321
      %v1324 = vunpack.c.l.s4 1966171168
      %v1325 = vunpack.c.0.s8 %v1324
      %v1326 = vlaneseq
      %v1327 = vshrl.u32 %v1326, 7
      %v1328 = vsub.s32 %v1325, %v1327
      %v1329 = vrot.slane %v1301, %v1328
      %v1330 = vcombine.high %v1308, %v1308
      %v1331 = vcombine.high %v1315, %v1315
      %v1332 = vcombine.high %v1322, %v1322
      %v1333 = vcombine.high %v1329, %v1329
      %v1334 = vcombine.high %v576, %v576
      %v1336 = vunpack.c.l.s4 1966171168
      %v1337 = vunpack.c.0.s8 %v1336
      %v1338 = vlaneseq
      %v1339 = vshrl.u32 %v1338, 7
      %v1340 = vsub.s32 %v1337, %v1339
      %v1341 = vrot.slane %v576, %v1340
      %v1343 = vunpack.c.l.s4 1966171168
      %v1344 = vunpack.c.0.s8 %v1343
      %v1345 = vlaneseq
      %v1346 = vshrl.u32 %v1345, 7
      %v1347 = vsub.s32 %v1344, %v1346
      %v1348 = vrot.slane %v1334, %v1347
      %v1349 = vcombine.high %v1341, %v1341
      %v1350 = vcombine.high %v1348, %v1348
      %v1352 = vunpack.c.l.s4 1966171168
      %v1353 = vunpack.c.0.s8 %v1352
      %v1354 = vlaneseq
      %v1355 = vshrl.u32 %v1354, 7
      %v1356 = vsub.s32 %v1353, %v1355
      %v1357 = vrot.slane %v1341, %v1356
      %v1359 = vunpack.c.l.s4 1966171168
      %v1360 = vunpack.c.0.s8 %v1359
      %v1361 = vlaneseq
      %v1362 = vshrl.u32 %v1361, 7
      %v1363 = vsub.s32 %v1360, %v1362
      %v1364 = vrot.slane %v1348, %v1363
      %v1366 = vunpack.c.l.s4 1966171168
      %v1367 = vunpack.c.0.s8 %v1366
      %v1368 = vlaneseq
      %v1369 = vshrl.u32 %v1368, 7
      %v1370 = vsub.s32 %v1367, %v1369
      %v1371 = vrot.slane %v1349, %v1370
      %v1373 = vunpack.c.l.s4 1966171168
      %v1374 = vunpack.c.0.s8 %v1373
      %v1375 = vlaneseq
      %v1376 = vshrl.u32 %v1375, 7
      %v1377 = vsub.s32 %v1374, %v1376
      %v1378 = vrot.slane %v1350, %v1377
      %v1379 = vcombine.high %v1357, %v1357
      %v1380 = vcombine.high %v1364, %v1364
      %v1381 = vcombine.high %v1371, %v1371
      %v1382 = vcombine.high %v1378, %v1378
      %v1383 = vcombine.high %v577, %v577
      %v1385 = vunpack.c.l.s4 1966171168
      %v1386 = vunpack.c.0.s8 %v1385
      %v1387 = vlaneseq
      %v1388 = vshrl.u32 %v1387, 7
      %v1389 = vsub.s32 %v1386, %v1388
      %v1390 = vrot.slane %v577, %v1389
      %v1392 = vunpack.c.l.s4 1966171168
      %v1393 = vunpack.c.0.s8 %v1392
      %v1394 = vlaneseq
      %v1395 = vshrl.u32 %v1394, 7
      %v1396 = vsub.s32 %v1393, %v1395
      %v1397 = vrot.slane %v1383, %v1396
      %v1398 = vcombine.high %v1390, %v1390
      %v1399 = vcombine.high %v1397, %v1397
      %v1401 = vunpack.c.l.s4 1966171168
      %v1402 = vunpack.c.0.s8 %v1401
      %v1403 = vlaneseq
      %v1404 = vshrl.u32 %v1403, 7
      %v1405 = vsub.s32 %v1402, %v1404
      %v1406 = vrot.slane %v1390, %v1405
      %v1408 = vunpack.c.l.s4 1966171168
      %v1409 = vunpack.c.0.s8 %v1408
      %v1410 = vlaneseq
      %v1411 = vshrl.u32 %v1410, 7
      %v1412 = vsub.s32 %v1409, %v1411
      %v1413 = vrot.slane %v1397, %v1412
      %v1415 = vunpack.c.l.s4 1966171168
      %v1416 = vunpack.c.0.s8 %v1415
      %v1417 = vlaneseq
      %v1418 = vshrl.u32 %v1417, 7
      %v1419 = vsub.s32 %v1416, %v1418
      %v1420 = vrot.slane %v1398, %v1419
      %v1422 = vunpack.c.l.s4 1966171168
      %v1423 = vunpack.c.0.s8 %v1422
      %v1424 = vlaneseq
      %v1425 = vshrl.u32 %v1424, 7
      %v1426 = vsub.s32 %v1423, %v1425
      %v1427 = vrot.slane %v1399, %v1426
      %v1428 = vcombine.high %v1406, %v1406
      %v1429 = vcombine.high %v1413, %v1413
      %v1430 = vcombine.high %v1420, %v1420
      %v1431 = vcombine.high %v1427, %v1427
      %v1432 = vcombine.high %v578, %v578
      %v1434 = vunpack.c.l.s4 1966171168
      %v1435 = vunpack.c.0.s8 %v1434
      %v1436 = vlaneseq
      %v1437 = vshrl.u32 %v1436, 7
      %v1438 = vsub.s32 %v1435, %v1437
      %v1439 = vrot.slane %v578, %v1438
      %v1441 = vunpack.c.l.s4 1966171168
      %v1442 = vunpack.c.0.s8 %v1441
      %v1443 = vlaneseq
      %v1444 = vshrl.u32 %v1443, 7
      %v1445 = vsub.s32 %v1442, %v1444
      %v1446 = vrot.slane %v1432, %v1445
      %v1447 = vcombine.high %v1439, %v1439
      %v1448 = vcombine.high %v1446, %v1446
      %v1450 = vunpack.c.l.s4 1966171168
      %v1451 = vunpack.c.0.s8 %v1450
      %v1452 = vlaneseq
      %v1453 = vshrl.u32 %v1452, 7
      %v1454 = vsub.s32 %v1451, %v1453
      %v1455 = vrot.slane %v1439, %v1454
      %v1457 = vunpack.c.l.s4 1966171168
      %v1458 = vunpack.c.0.s8 %v1457
      %v1459 = vlaneseq
      %v1460 = vshrl.u32 %v1459, 7
      %v1461 = vsub.s32 %v1458, %v1460
      %v1462 = vrot.slane %v1446, %v1461
      %v1464 = vunpack.c.l.s4 1966171168
      %v1465 = vunpack.c.0.s8 %v1464
      %v1466 = vlaneseq
      %v1467 = vshrl.u32 %v1466, 7
      %v1468 = vsub.s32 %v1465, %v1467
      %v1469 = vrot.slane %v1447, %v1468
      %v1471 = vunpack.c.l.s4 1966171168
      %v1472 = vunpack.c.0.s8 %v1471
      %v1473 = vlaneseq
      %v1474 = vshrl.u32 %v1473, 7
      %v1475 = vsub.s32 %v1472, %v1474
      %v1476 = vrot.slane %v1448, %v1475
      %v1477 = vcombine.high %v1455, %v1455
      %v1478 = vcombine.high %v1462, %v1462
      %v1479 = vcombine.high %v1469, %v1469
      %v1480 = vcombine.high %v1476, %v1476
      %v1481 = vcombine.high %v579, %v579
      %v1483 = vunpack.c.l.s4 1966171168
      %v1484 = vunpack.c.0.s8 %v1483
      %v1485 = vlaneseq
      %v1486 = vshrl.u32 %v1485, 7
      %v1487 = vsub.s32 %v1484, %v1486
      %v1488 = vrot.slane %v579, %v1487
      %v1490 = vunpack.c.l.s4 1966171168
      %v1491 = vunpack.c.0.s8 %v1490
      %v1492 = vlaneseq
      %v1493 = vshrl.u32 %v1492, 7
      %v1494 = vsub.s32 %v1491, %v1493
      %v1495 = vrot.slane %v1481, %v1494
      %v1496 = vcombine.high %v1488, %v1488
      %v1497 = vcombine.high %v1495, %v1495
      %v1499 = vunpack.c.l.s4 1966171168
      %v1500 = vunpack.c.0.s8 %v1499
      %v1501 = vlaneseq
      %v1502 = vshrl.u32 %v1501, 7
      %v1503 = vsub.s32 %v1500, %v1502
      %v1504 = vrot.slane %v1488, %v1503
      %v1506 = vunpack.c.l.s4 1966171168
      %v1507 = vunpack.c.0.s8 %v1506
      %v1508 = vlaneseq
      %v1509 = vshrl.u32 %v1508, 7
      %v1510 = vsub.s32 %v1507, %v1509
      %v1511 = vrot.slane %v1495, %v1510
      %v1513 = vunpack.c.l.s4 1966171168
      %v1514 = vunpack.c.0.s8 %v1513
      %v1515 = vlaneseq
      %v1516 = vshrl.u32 %v1515, 7
      %v1517 = vsub.s32 %v1514, %v1516
      %v1518 = vrot.slane %v1496, %v1517
      %v1520 = vunpack.c.l.s4 1966171168
      %v1521 = vunpack.c.0.s8 %v1520
      %v1522 = vlaneseq
      %v1523 = vshrl.u32 %v1522, 7
      %v1524 = vsub.s32 %v1521, %v1523
      %v1525 = vrot.slane %v1497, %v1524
      %v1526 = vcombine.high %v1504, %v1504
      %v1527 = vcombine.high %v1511, %v1511
      %v1528 = vcombine.high %v1518, %v1518
      %v1529 = vcombine.high %v1525, %v1525
      %v1530 = vcombine.high %v580, %v580
      %v1532 = vunpack.c.l.s4 1966171168
      %v1533 = vunpack.c.0.s8 %v1532
      %v1534 = vlaneseq
      %v1535 = vshrl.u32 %v1534, 7
      %v1536 = vsub.s32 %v1533, %v1535
      %v1537 = vrot.slane %v580, %v1536
      %v1539 = vunpack.c.l.s4 1966171168
      %v1540 = vunpack.c.0.s8 %v1539
      %v1541 = vlaneseq
      %v1542 = vshrl.u32 %v1541, 7
      %v1543 = vsub.s32 %v1540, %v1542
      %v1544 = vrot.slane %v1530, %v1543
      %v1545 = vcombine.high %v1537, %v1537
      %v1546 = vcombine.high %v1544, %v1544
      %v1548 = vunpack.c.l.s4 1966171168
      %v1549 = vunpack.c.0.s8 %v1548
      %v1550 = vlaneseq
      %v1551 = vshrl.u32 %v1550, 7
      %v1552 = vsub.s32 %v1549, %v1551
      %v1553 = vrot.slane %v1537, %v1552
      %v1555 = vunpack.c.l.s4 1966171168
      %v1556 = vunpack.c.0.s8 %v1555
      %v1557 = vlaneseq
      %v1558 = vshrl.u32 %v1557, 7
      %v1559 = vsub.s32 %v1556, %v1558
      %v1560 = vrot.slane %v1544, %v1559
      %v1562 = vunpack.c.l.s4 1966171168
      %v1563 = vunpack.c.0.s8 %v1562
      %v1564 = vlaneseq
      %v1565 = vshrl.u32 %v1564, 7
      %v1566 = vsub.s32 %v1563, %v1565
      %v1567 = vrot.slane %v1545, %v1566
      %v1569 = vunpack.c.l.s4 1966171168
      %v1570 = vunpack.c.0.s8 %v1569
      %v1571 = vlaneseq
      %v1572 = vshrl.u32 %v1571, 7
      %v1573 = vsub.s32 %v1570, %v1572
      %v1574 = vrot.slane %v1546, %v1573
      %v1575 = vcombine.high %v1553, %v1553
      %v1576 = vcombine.high %v1560, %v1560
      %v1577 = vcombine.high %v1567, %v1567
      %v1578 = vcombine.high %v1574, %v1574
      %v1651 = vcombine.high %v759, %v759
      %v1653 = vunpack.c.l.s4 1966171168
      %v1654 = vunpack.c.0.s8 %v1653
      %v1655 = vlaneseq
      %v1656 = vshrl.u32 %v1655, 7
      %v1657 = vsub.s32 %v1654, %v1656
      %v1658 = vrot.slane %v759, %v1657
      %v1660 = vunpack.c.l.s4 1966171168
      %v1661 = vunpack.c.0.s8 %v1660
      %v1662 = vlaneseq
      %v1663 = vshrl.u32 %v1662, 7
      %v1664 = vsub.s32 %v1661, %v1663
      %v1665 = vrot.slane %v1651, %v1664
      %v1666 = vcombine.high %v1658, %v1658
      %v1667 = vcombine.high %v1665, %v1665
      %v1669 = vunpack.c.l.s4 1966171168
      %v1670 = vunpack.c.0.s8 %v1669
      %v1671 = vlaneseq
      %v1672 = vshrl.u32 %v1671, 7
      %v1673 = vsub.s32 %v1670, %v1672
      %v1674 = vrot.slane %v1658, %v1673
      %v1676 = vunpack.c.l.s4 1966171168
      %v1677 = vunpack.c.0.s8 %v1676
      %v1678 = vlaneseq
      %v1679 = vshrl.u32 %v1678, 7
      %v1680 = vsub.s32 %v1677, %v1679
      %v1681 = vrot.slane %v1665, %v1680
      %v1683 = vunpack.c.l.s4 1966171168
      %v1684 = vunpack.c.0.s8 %v1683
      %v1685 = vlaneseq
      %v1686 = vshrl.u32 %v1685, 7
      %v1687 = vsub.s32 %v1684, %v1686
      %v1688 = vrot.slane %v1666, %v1687
      %v1690 = vunpack.c.l.s4 1966171168
      %v1691 = vunpack.c.0.s8 %v1690
      %v1692 = vlaneseq
      %v1693 = vshrl.u32 %v1692, 7
      %v1694 = vsub.s32 %v1691, %v1693
      %v1695 = vrot.slane %v1667, %v1694
      %v1696 = vcombine.high %v1674, %v1674
      %v1697 = vcombine.high %v1681, %v1681
      %v1698 = vcombine.high %v1688, %v1688
      %v1699 = vcombine.high %v1695, %v1695
      %v1700 = vcombine.high %v760, %v760
      %v1702 = vunpack.c.l.s4 1966171168
      %v1703 = vunpack.c.0.s8 %v1702
      %v1704 = vlaneseq
      %v1705 = vshrl.u32 %v1704, 7
      %v1706 = vsub.s32 %v1703, %v1705
      %v1707 = vrot.slane %v760, %v1706
      %v1709 = vunpack.c.l.s4 1966171168
      %v1710 = vunpack.c.0.s8 %v1709
      %v1711 = vlaneseq
      %v1712 = vshrl.u32 %v1711, 7
      %v1713 = vsub.s32 %v1710, %v1712
      %v1714 = vrot.slane %v1700, %v1713
      %v1715 = vcombine.high %v1707, %v1707
      %v1716 = vcombine.high %v1714, %v1714
      %v1718 = vunpack.c.l.s4 1966171168
      %v1719 = vunpack.c.0.s8 %v1718
      %v1720 = vlaneseq
      %v1721 = vshrl.u32 %v1720, 7
      %v1722 = vsub.s32 %v1719, %v1721
      %v1723 = vrot.slane %v1707, %v1722
      %v1725 = vunpack.c.l.s4 1966171168
      %v1726 = vunpack.c.0.s8 %v1725
      %v1727 = vlaneseq
      %v1728 = vshrl.u32 %v1727, 7
      %v1729 = vsub.s32 %v1726, %v1728
      %v1730 = vrot.slane %v1714, %v1729
      %v1732 = vunpack.c.l.s4 1966171168
      %v1733 = vunpack.c.0.s8 %v1732
      %v1734 = vlaneseq
      %v1735 = vshrl.u32 %v1734, 7
      %v1736 = vsub.s32 %v1733, %v1735
      %v1737 = vrot.slane %v1715, %v1736
      %v1739 = vunpack.c.l.s4 1966171168
      %v1740 = vunpack.c.0.s8 %v1739
      %v1741 = vlaneseq
      %v1742 = vshrl.u32 %v1741, 7
      %v1743 = vsub.s32 %v1740, %v1742
      %v1744 = vrot.slane %v1716, %v1743
      %v1745 = vcombine.high %v1723, %v1723
      %v1746 = vcombine.high %v1730, %v1730
      %v1747 = vcombine.high %v1737, %v1737
      %v1748 = vcombine.high %v1744, %v1744
      %v1749 = vcombine.high %v761, %v761
      %v1751 = vunpack.c.l.s4 1966171168
      %v1752 = vunpack.c.0.s8 %v1751
      %v1753 = vlaneseq
      %v1754 = vshrl.u32 %v1753, 7
      %v1755 = vsub.s32 %v1752, %v1754
      %v1756 = vrot.slane %v761, %v1755
      %v1758 = vunpack.c.l.s4 1966171168
      %v1759 = vunpack.c.0.s8 %v1758
      %v1760 = vlaneseq
      %v1761 = vshrl.u32 %v1760, 7
      %v1762 = vsub.s32 %v1759, %v1761
      %v1763 = vrot.slane %v1749, %v1762
      %v1764 = vcombine.high %v1756, %v1756
      %v1765 = vcombine.high %v1763, %v1763
      %v1767 = vunpack.c.l.s4 1966171168
      %v1768 = vunpack.c.0.s8 %v1767
      %v1769 = vlaneseq
      %v1770 = vshrl.u32 %v1769, 7
      %v1771 = vsub.s32 %v1768, %v1770
      %v1772 = vrot.slane %v1756, %v1771
      %v1774 = vunpack.c.l.s4 1966171168
      %v1775 = vunpack.c.0.s8 %v1774
      %v1776 = vlaneseq
      %v1777 = vshrl.u32 %v1776, 7
      %v1778 = vsub.s32 %v1775, %v1777
      %v1779 = vrot.slane %v1763, %v1778
      %v1781 = vunpack.c.l.s4 1966171168
      %v1782 = vunpack.c.0.s8 %v1781
      %v1783 = vlaneseq
      %v1784 = vshrl.u32 %v1783, 7
      %v1785 = vsub.s32 %v1782, %v1784
      %v1786 = vrot.slane %v1764, %v1785
      %v1788 = vunpack.c.l.s4 1966171168
      %v1789 = vunpack.c.0.s8 %v1788
      %v1790 = vlaneseq
      %v1791 = vshrl.u32 %v1790, 7
      %v1792 = vsub.s32 %v1789, %v1791
      %v1793 = vrot.slane %v1765, %v1792
      %v1794 = vcombine.high %v1772, %v1772
      %v1795 = vcombine.high %v1779, %v1779
      %v1796 = vcombine.high %v1786, %v1786
      %v1797 = vcombine.high %v1793, %v1793
      %v1798 = vcombine.high %v762, %v762
      %v1800 = vunpack.c.l.s4 1966171168
      %v1801 = vunpack.c.0.s8 %v1800
      %v1802 = vlaneseq
      %v1803 = vshrl.u32 %v1802, 7
      %v1804 = vsub.s32 %v1801, %v1803
      %v1805 = vrot.slane %v762, %v1804
      %v1807 = vunpack.c.l.s4 1966171168
      %v1808 = vunpack.c.0.s8 %v1807
      %v1809 = vlaneseq
      %v1810 = vshrl.u32 %v1809, 7
      %v1811 = vsub.s32 %v1808, %v1810
      %v1812 = vrot.slane %v1798, %v1811
      %v1813 = vcombine.high %v1805, %v1805
      %v1814 = vcombine.high %v1812, %v1812
      %v1816 = vunpack.c.l.s4 1966171168
      %v1817 = vunpack.c.0.s8 %v1816
      %v1818 = vlaneseq
      %v1819 = vshrl.u32 %v1818, 7
      %v1820 = vsub.s32 %v1817, %v1819
      %v1821 = vrot.slane %v1805, %v1820
      %v1823 = vunpack.c.l.s4 1966171168
      %v1824 = vunpack.c.0.s8 %v1823
      %v1825 = vlaneseq
      %v1826 = vshrl.u32 %v1825, 7
      %v1827 = vsub.s32 %v1824, %v1826
      %v1828 = vrot.slane %v1812, %v1827
      %v1830 = vunpack.c.l.s4 1966171168
      %v1831 = vunpack.c.0.s8 %v1830
      %v1832 = vlaneseq
      %v1833 = vshrl.u32 %v1832, 7
      %v1834 = vsub.s32 %v1831, %v1833
      %v1835 = vrot.slane %v1813, %v1834
      %v1837 = vunpack.c.l.s4 1966171168
      %v1838 = vunpack.c.0.s8 %v1837
      %v1839 = vlaneseq
      %v1840 = vshrl.u32 %v1839, 7
      %v1841 = vsub.s32 %v1838, %v1840
      %v1842 = vrot.slane %v1814, %v1841
      %v1843 = vcombine.high %v1821, %v1821
      %v1844 = vcombine.high %v1828, %v1828
      %v1845 = vcombine.high %v1835, %v1835
      %v1846 = vcombine.high %v1842, %v1842
      %v1847 = vcombine.high %v763, %v763
      %v1849 = vunpack.c.l.s4 1966171168
      %v1850 = vunpack.c.0.s8 %v1849
      %v1851 = vlaneseq
      %v1852 = vshrl.u32 %v1851, 7
      %v1853 = vsub.s32 %v1850, %v1852
      %v1854 = vrot.slane %v763, %v1853
      %v1856 = vunpack.c.l.s4 1966171168
      %v1857 = vunpack.c.0.s8 %v1856
      %v1858 = vlaneseq
      %v1859 = vshrl.u32 %v1858, 7
      %v1860 = vsub.s32 %v1857, %v1859
      %v1861 = vrot.slane %v1847, %v1860
      %v1862 = vcombine.high %v1854, %v1854
      %v1863 = vcombine.high %v1861, %v1861
      %v1865 = vunpack.c.l.s4 1966171168
      %v1866 = vunpack.c.0.s8 %v1865
      %v1867 = vlaneseq
      %v1868 = vshrl.u32 %v1867, 7
      %v1869 = vsub.s32 %v1866, %v1868
      %v1870 = vrot.slane %v1854, %v1869
      %v1872 = vunpack.c.l.s4 1966171168
      %v1873 = vunpack.c.0.s8 %v1872
      %v1874 = vlaneseq
      %v1875 = vshrl.u32 %v1874, 7
      %v1876 = vsub.s32 %v1873, %v1875
      %v1877 = vrot.slane %v1861, %v1876
      %v1879 = vunpack.c.l.s4 1966171168
      %v1880 = vunpack.c.0.s8 %v1879
      %v1881 = vlaneseq
      %v1882 = vshrl.u32 %v1881, 7
      %v1883 = vsub.s32 %v1880, %v1882
      %v1884 = vrot.slane %v1862, %v1883
      %v1886 = vunpack.c.l.s4 1966171168
      %v1887 = vunpack.c.0.s8 %v1886
      %v1888 = vlaneseq
      %v1889 = vshrl.u32 %v1888, 7
      %v1890 = vsub.s32 %v1887, %v1889
      %v1891 = vrot.slane %v1863, %v1890
      %v1892 = vcombine.high %v1870, %v1870
      %v1893 = vcombine.high %v1877, %v1877
      %v1894 = vcombine.high %v1884, %v1884
      %v1895 = vcombine.high %v1891, %v1891
      %v1896 = vcombine.high %v764, %v764
      %v1898 = vunpack.c.l.s4 1966171168
      %v1899 = vunpack.c.0.s8 %v1898
      %v1900 = vlaneseq
      %v1901 = vshrl.u32 %v1900, 7
      %v1902 = vsub.s32 %v1899, %v1901
      %v1903 = vrot.slane %v764, %v1902
      %v1905 = vunpack.c.l.s4 1966171168
      %v1906 = vunpack.c.0.s8 %v1905
      %v1907 = vlaneseq
      %v1908 = vshrl.u32 %v1907, 7
      %v1909 = vsub.s32 %v1906, %v1908
      %v1910 = vrot.slane %v1896, %v1909
      %v1911 = vcombine.high %v1903, %v1903
      %v1912 = vcombine.high %v1910, %v1910
      %v1914 = vunpack.c.l.s4 1966171168
      %v1915 = vunpack.c.0.s8 %v1914
      %v1916 = vlaneseq
      %v1917 = vshrl.u32 %v1916, 7
      %v1918 = vsub.s32 %v1915, %v1917
      %v1919 = vrot.slane %v1903, %v1918
      %v1921 = vunpack.c.l.s4 1966171168
      %v1922 = vunpack.c.0.s8 %v1921
      %v1923 = vlaneseq
      %v1924 = vshrl.u32 %v1923, 7
      %v1925 = vsub.s32 %v1922, %v1924
      %v1926 = vrot.slane %v1910, %v1925
      %v1928 = vunpack.c.l.s4 1966171168
      %v1929 = vunpack.c.0.s8 %v1928
      %v1930 = vlaneseq
      %v1931 = vshrl.u32 %v1930, 7
      %v1932 = vsub.s32 %v1929, %v1931
      %v1933 = vrot.slane %v1911, %v1932
      %v1935 = vunpack.c.l.s4 1966171168
      %v1936 = vunpack.c.0.s8 %v1935
      %v1937 = vlaneseq
      %v1938 = vshrl.u32 %v1937, 7
      %v1939 = vsub.s32 %v1936, %v1938
      %v1940 = vrot.slane %v1912, %v1939
      %v1941 = vcombine.high %v1919, %v1919
      %v1942 = vcombine.high %v1926, %v1926
      %v1943 = vcombine.high %v1933, %v1933
      %v1944 = vcombine.high %v1940, %v1940
      %v1945 = vcombine.high %v765, %v765
      %v1947 = vunpack.c.l.s4 1966171168
      %v1948 = vunpack.c.0.s8 %v1947
      %v1949 = vlaneseq
      %v1950 = vshrl.u32 %v1949, 7
      %v1951 = vsub.s32 %v1948, %v1950
      %v1952 = vrot.slane %v765, %v1951
      %v1954 = vunpack.c.l.s4 1966171168
      %v1955 = vunpack.c.0.s8 %v1954
      %v1956 = vlaneseq
      %v1957 = vshrl.u32 %v1956, 7
      %v1958 = vsub.s32 %v1955, %v1957
      %v1959 = vrot.slane %v1945, %v1958
      %v1960 = vcombine.high %v1952, %v1952
      %v1961 = vcombine.high %v1959, %v1959
      %v1963 = vunpack.c.l.s4 1966171168
      %v1964 = vunpack.c.0.s8 %v1963
      %v1965 = vlaneseq
      %v1966 = vshrl.u32 %v1965, 7
      %v1967 = vsub.s32 %v1964, %v1966
      %v1968 = vrot.slane %v1952, %v1967
      %v1970 = vunpack.c.l.s4 1966171168
      %v1971 = vunpack.c.0.s8 %v1970
      %v1972 = vlaneseq
      %v1973 = vshrl.u32 %v1972, 7
      %v1974 = vsub.s32 %v1971, %v1973
      %v1975 = vrot.slane %v1959, %v1974
      %v1977 = vunpack.c.l.s4 1966171168
      %v1978 = vunpack.c.0.s8 %v1977
      %v1979 = vlaneseq
      %v1980 = vshrl.u32 %v1979, 7
      %v1981 = vsub.s32 %v1978, %v1980
      %v1982 = vrot.slane %v1960, %v1981
      %v1984 = vunpack.c.l.s4 1966171168
      %v1985 = vunpack.c.0.s8 %v1984
      %v1986 = vlaneseq
      %v1987 = vshrl.u32 %v1986, 7
      %v1988 = vsub.s32 %v1985, %v1987
      %v1989 = vrot.slane %v1961, %v1988
      %v1990 = vcombine.high %v1968, %v1968
      %v1991 = vcombine.high %v1975, %v1975
      %v1992 = vcombine.high %v1982, %v1982
      %v1993 = vcombine.high %v1989, %v1989
      %v1994 = vcombine.high %v766, %v766
      %v1996 = vunpack.c.l.s4 1966171168
      %v1997 = vunpack.c.0.s8 %v1996
      %v1998 = vlaneseq
      %v1999 = vshrl.u32 %v1998, 7
      %v2000 = vsub.s32 %v1997, %v1999
      %v2001 = vrot.slane %v766, %v2000
      %v2003 = vunpack.c.l.s4 1966171168
      %v2004 = vunpack.c.0.s8 %v2003
      %v2005 = vlaneseq
      %v2006 = vshrl.u32 %v2005, 7
      %v2007 = vsub.s32 %v2004, %v2006
      %v2008 = vrot.slane %v1994, %v2007
      %v2009 = vcombine.high %v2001, %v2001
      %v2010 = vcombine.high %v2008, %v2008
      %v2012 = vunpack.c.l.s4 1966171168
      %v2013 = vunpack.c.0.s8 %v2012
      %v2014 = vlaneseq
      %v2015 = vshrl.u32 %v2014, 7
      %v2016 = vsub.s32 %v2013, %v2015
      %v2017 = vrot.slane %v2001, %v2016
      %v2019 = vunpack.c.l.s4 1966171168
      %v2020 = vunpack.c.0.s8 %v2019
      %v2021 = vlaneseq
      %v2022 = vshrl.u32 %v2021, 7
      %v2023 = vsub.s32 %v2020, %v2022
      %v2024 = vrot.slane %v2008, %v2023
      %v2026 = vunpack.c.l.s4 1966171168
      %v2027 = vunpack.c.0.s8 %v2026
      %v2028 = vlaneseq
      %v2029 = vshrl.u32 %v2028, 7
      %v2030 = vsub.s32 %v2027, %v2029
      %v2031 = vrot.slane %v2009, %v2030
      %v2033 = vunpack.c.l.s4 1966171168
      %v2034 = vunpack.c.0.s8 %v2033
      %v2035 = vlaneseq
      %v2036 = vshrl.u32 %v2035, 7
      %v2037 = vsub.s32 %v2034, %v2036
      %v2038 = vrot.slane %v2010, %v2037
      %v2039 = vcombine.high %v2017, %v2017
      %v2040 = vcombine.high %v2024, %v2024
      %v2041 = vcombine.high %v2031, %v2031
      %v2042 = vcombine.high %v2038, %v2038
      %v2043 = vlaneseq
      %v2044 = vshrl.u32 %v2043, 7
      %v2045 = vsub.s32 0, %v2044
      %v2046 = vrot.slane %v1674, %v2045
      %v2047 = vlaneseq
      %v2048 = vshrl.u32 %v2047, 7
      %v2049 = vsub.s32 0, %v2048
      %v2050 = vrot.slane %v1688, %v2049
      %v2051 = vlaneseq
      %v2052 = vshrl.u32 %v2051, 7
      %v2053 = vsub.s32 0, %v2052
      %v2054 = vrot.slane %v1696, %v2053
      %v2055 = vlaneseq
      %v2056 = vshrl.u32 %v2055, 7
      %v2057 = vsub.s32 0, %v2056
      %v2058 = vrot.slane %v1698, %v2057
      %v2059 = vlaneseq
      %v2060 = vshrl.u32 %v2059, 7
      %v2061 = vsub.s32 0, %v2060
      %v2062 = vrot.slane %v1681, %v2061
      %v2063 = vlaneseq
      %v2064 = vshrl.u32 %v2063, 7
      %v2065 = vsub.s32 0, %v2064
      %v2066 = vrot.slane %v1695, %v2065
      %v2067 = vlaneseq
      %v2068 = vshrl.u32 %v2067, 7
      %v2069 = vsub.s32 0, %v2068
      %v2070 = vrot.slane %v1697, %v2069
      %v2071 = vlaneseq
      %v2072 = vshrl.u32 %v2071, 7
      %v2073 = vsub.s32 0, %v2072
      %v2074 = vrot.slane %v1699, %v2073
      %v2075 = vlaneseq
      %v2076 = vshrl.u32 %v2075, 7
      %v2077 = vsub.s32 0, %v2076
      %v2078 = vrot.slane %v1723, %v2077
      %v2079 = vlaneseq
      %v2080 = vshrl.u32 %v2079, 7
      %v2081 = vsub.s32 0, %v2080
      %v2082 = vrot.slane %v1737, %v2081
      %v2083 = vlaneseq
      %v2084 = vshrl.u32 %v2083, 7
      %v2085 = vsub.s32 0, %v2084
      %v2086 = vrot.slane %v1745, %v2085
      %v2087 = vlaneseq
      %v2088 = vshrl.u32 %v2087, 7
      %v2089 = vsub.s32 0, %v2088
      %v2090 = vrot.slane %v1747, %v2089
      %v2091 = vlaneseq
      %v2092 = vshrl.u32 %v2091, 7
      %v2093 = vsub.s32 0, %v2092
      %v2094 = vrot.slane %v1730, %v2093
      %v2095 = vlaneseq
      %v2096 = vshrl.u32 %v2095, 7
      %v2097 = vsub.s32 0, %v2096
      %v2098 = vrot.slane %v1744, %v2097
      %v2099 = vlaneseq
      %v2100 = vshrl.u32 %v2099, 7
      %v2101 = vsub.s32 0, %v2100
      %v2102 = vrot.slane %v1746, %v2101
      %v2103 = vlaneseq
      %v2104 = vshrl.u32 %v2103, 7
      %v2105 = vsub.s32 0, %v2104
      %v2106 = vrot.slane %v1748, %v2105
      %v2107 = vlaneseq
      %v2108 = vshrl.u32 %v2107, 7
      %v2109 = vsub.s32 0, %v2108
      %v2110 = vrot.slane %v1772, %v2109
      %v2111 = vlaneseq
      %v2112 = vshrl.u32 %v2111, 7
      %v2113 = vsub.s32 0, %v2112
      %v2114 = vrot.slane %v1786, %v2113
      %v2115 = vlaneseq
      %v2116 = vshrl.u32 %v2115, 7
      %v2117 = vsub.s32 0, %v2116
      %v2118 = vrot.slane %v1794, %v2117
      %v2119 = vlaneseq
      %v2120 = vshrl.u32 %v2119, 7
      %v2121 = vsub.s32 0, %v2120
      %v2122 = vrot.slane %v1796, %v2121
      %v2123 = vlaneseq
      %v2124 = vshrl.u32 %v2123, 7
      %v2125 = vsub.s32 0, %v2124
      %v2126 = vrot.slane %v1779, %v2125
      %v2127 = vlaneseq
      %v2128 = vshrl.u32 %v2127, 7
      %v2129 = vsub.s32 0, %v2128
      %v2130 = vrot.slane %v1793, %v2129
      %v2131 = vlaneseq
      %v2132 = vshrl.u32 %v2131, 7
      %v2133 = vsub.s32 0, %v2132
      %v2134 = vrot.slane %v1795, %v2133
      %v2135 = vlaneseq
      %v2136 = vshrl.u32 %v2135, 7
      %v2137 = vsub.s32 0, %v2136
      %v2138 = vrot.slane %v1797, %v2137
      %v2139 = vlaneseq
      %v2140 = vshrl.u32 %v2139, 7
      %v2141 = vsub.s32 0, %v2140
      %v2142 = vrot.slane %v1821, %v2141
      %v2143 = vlaneseq
      %v2144 = vshrl.u32 %v2143, 7
      %v2145 = vsub.s32 0, %v2144
      %v2146 = vrot.slane %v1835, %v2145
      %v2147 = vlaneseq
      %v2148 = vshrl.u32 %v2147, 7
      %v2149 = vsub.s32 0, %v2148
      %v2150 = vrot.slane %v1843, %v2149
      %v2151 = vlaneseq
      %v2152 = vshrl.u32 %v2151, 7
      %v2153 = vsub.s32 0, %v2152
      %v2154 = vrot.slane %v1845, %v2153
      %v2155 = vlaneseq
      %v2156 = vshrl.u32 %v2155, 7
      %v2157 = vsub.s32 0, %v2156
      %v2158 = vrot.slane %v1828, %v2157
      %v2159 = vlaneseq
      %v2160 = vshrl.u32 %v2159, 7
      %v2161 = vsub.s32 0, %v2160
      %v2162 = vrot.slane %v1842, %v2161
      %v2163 = vlaneseq
      %v2164 = vshrl.u32 %v2163, 7
      %v2165 = vsub.s32 0, %v2164
      %v2166 = vrot.slane %v1844, %v2165
      %v2167 = vlaneseq
      %v2168 = vshrl.u32 %v2167, 7
      %v2169 = vsub.s32 0, %v2168
      %v2170 = vrot.slane %v1846, %v2169
      %v2171 = vlaneseq
      %v2172 = vshrl.u32 %v2171, 7
      %v2173 = vsub.s32 0, %v2172
      %v2174 = vrot.slane %v1870, %v2173
      %v2175 = vlaneseq
      %v2176 = vshrl.u32 %v2175, 7
      %v2177 = vsub.s32 0, %v2176
      %v2178 = vrot.slane %v1884, %v2177
      %v2179 = vlaneseq
      %v2180 = vshrl.u32 %v2179, 7
      %v2181 = vsub.s32 0, %v2180
      %v2182 = vrot.slane %v1892, %v2181
      %v2183 = vlaneseq
      %v2184 = vshrl.u32 %v2183, 7
      %v2185 = vsub.s32 0, %v2184
      %v2186 = vrot.slane %v1894, %v2185
      %v2187 = vlaneseq
      %v2188 = vshrl.u32 %v2187, 7
      %v2189 = vsub.s32 0, %v2188
      %v2190 = vrot.slane %v1877, %v2189
      %v2191 = vlaneseq
      %v2192 = vshrl.u32 %v2191, 7
      %v2193 = vsub.s32 0, %v2192
      %v2194 = vrot.slane %v1891, %v2193
      %v2195 = vlaneseq
      %v2196 = vshrl.u32 %v2195, 7
      %v2197 = vsub.s32 0, %v2196
      %v2198 = vrot.slane %v1893, %v2197
      %v2199 = vlaneseq
      %v2200 = vshrl.u32 %v2199, 7
      %v2201 = vsub.s32 0, %v2200
      %v2202 = vrot.slane %v1895, %v2201
      %v2203 = vlaneseq
      %v2204 = vshrl.u32 %v2203, 7
      %v2205 = vsub.s32 0, %v2204
      %v2206 = vrot.slane %v1919, %v2205
      %v2207 = vlaneseq
      %v2208 = vshrl.u32 %v2207, 7
      %v2209 = vsub.s32 0, %v2208
      %v2210 = vrot.slane %v1933, %v2209
      %v2211 = vlaneseq
      %v2212 = vshrl.u32 %v2211, 7
      %v2213 = vsub.s32 0, %v2212
      %v2214 = vrot.slane %v1941, %v2213
      %v2215 = vlaneseq
      %v2216 = vshrl.u32 %v2215, 7
      %v2217 = vsub.s32 0, %v2216
      %v2218 = vrot.slane %v1943, %v2217
      %v2219 = vlaneseq
      %v2220 = vshrl.u32 %v2219, 7
      %v2221 = vsub.s32 0, %v2220
      %v2222 = vrot.slane %v1926, %v2221
      %v2223 = vlaneseq
      %v2224 = vshrl.u32 %v2223, 7
      %v2225 = vsub.s32 0, %v2224
      %v2226 = vrot.slane %v1940, %v2225
      %v2227 = vlaneseq
      %v2228 = vshrl.u32 %v2227, 7
      %v2229 = vsub.s32 0, %v2228
      %v2230 = vrot.slane %v1942, %v2229
      %v2231 = vlaneseq
      %v2232 = vshrl.u32 %v2231, 7
      %v2233 = vsub.s32 0, %v2232
      %v2234 = vrot.slane %v1944, %v2233
      %v2235 = vlaneseq
      %v2236 = vshrl.u32 %v2235, 7
      %v2237 = vsub.s32 0, %v2236
      %v2238 = vrot.slane %v1968, %v2237
      %v2239 = vlaneseq
      %v2240 = vshrl.u32 %v2239, 7
      %v2241 = vsub.s32 0, %v2240
      %v2242 = vrot.slane %v1982, %v2241
      %v2243 = vlaneseq
      %v2244 = vshrl.u32 %v2243, 7
      %v2245 = vsub.s32 0, %v2244
      %v2246 = vrot.slane %v1990, %v2245
      %v2247 = vlaneseq
      %v2248 = vshrl.u32 %v2247, 7
      %v2249 = vsub.s32 0, %v2248
      %v2250 = vrot.slane %v1992, %v2249
      %v2251 = vlaneseq
      %v2252 = vshrl.u32 %v2251, 7
      %v2253 = vsub.s32 0, %v2252
      %v2254 = vrot.slane %v1975, %v2253
      %v2255 = vlaneseq
      %v2256 = vshrl.u32 %v2255, 7
      %v2257 = vsub.s32 0, %v2256
      %v2258 = vrot.slane %v1989, %v2257
      %v2259 = vlaneseq
      %v2260 = vshrl.u32 %v2259, 7
      %v2261 = vsub.s32 0, %v2260
      %v2262 = vrot.slane %v1991, %v2261
      %v2263 = vlaneseq
      %v2264 = vshrl.u32 %v2263, 7
      %v2265 = vsub.s32 0, %v2264
      %v2266 = vrot.slane %v1993, %v2265
      %v2267 = vlaneseq
      %v2268 = vshrl.u32 %v2267, 7
      %v2269 = vsub.s32 0, %v2268
      %v2270 = vrot.slane %v2017, %v2269
      %v2271 = vlaneseq
      %v2272 = vshrl.u32 %v2271, 7
      %v2273 = vsub.s32 0, %v2272
      %v2274 = vrot.slane %v2031, %v2273
      %v2275 = vlaneseq
      %v2276 = vshrl.u32 %v2275, 7
      %v2277 = vsub.s32 0, %v2276
      %v2278 = vrot.slane %v2039, %v2277
      %v2279 = vlaneseq
      %v2280 = vshrl.u32 %v2279, 7
      %v2281 = vsub.s32 0, %v2280
      %v2282 = vrot.slane %v2041, %v2281
      %v2283 = vlaneseq
      %v2284 = vshrl.u32 %v2283, 7
      %v2285 = vsub.s32 0, %v2284
      %v2286 = vrot.slane %v2024, %v2285
      %v2287 = vlaneseq
      %v2288 = vshrl.u32 %v2287, 7
      %v2289 = vsub.s32 0, %v2288
      %v2290 = vrot.slane %v2038, %v2289
      %v2291 = vlaneseq
      %v2292 = vshrl.u32 %v2291, 7
      %v2293 = vsub.s32 0, %v2292
      %v2294 = vrot.slane %v2040, %v2293
      %v2295 = vlaneseq
      %v2296 = vshrl.u32 %v2295, 7
      %v2297 = vsub.s32 0, %v2296
      %v2298 = vrot.slane %v2042, %v2297
      %vm2363 = vcmask 1040384
      %v2364 = vsel %vm2363, %v1210, %v2046
      %v2365 = vsel %vm2363, %v1224, %v2050
      %v2366 = vsel %vm2363, %v1232, %v2054
      %v2367 = vsel %vm2363, %v1234, %v2058
      %v2368 = vsel %vm2363, %v1217, %v2062
      %v2369 = vsel %vm2363, %v1231, %v2066
      %v2370 = vsel %vm2363, %v1233, %v2070
      %v2371 = vsel %vm2363, %v1235, %v2074
      %v2372 = vsel %vm2363, %v1259, %v2078
      %v2373 = vsel %vm2363, %v1273, %v2082
      %v2374 = vsel %vm2363, %v1281, %v2086
      %v2375 = vsel %vm2363, %v1283, %v2090
      %v2376 = vsel %vm2363, %v1266, %v2094
      %v2377 = vsel %vm2363, %v1280, %v2098
      %v2378 = vsel %vm2363, %v1282, %v2102
      %v2379 = vsel %vm2363, %v1284, %v2106
      %v2380 = vsel %vm2363, %v1308, %v2110
      %v2381 = vsel %vm2363, %v1322, %v2114
      %v2382 = vsel %vm2363, %v1330, %v2118
      %v2383 = vsel %vm2363, %v1332, %v2122
      %v2384 = vsel %vm2363, %v1315, %v2126
      %v2385 = vsel %vm2363, %v1329, %v2130
      %v2386 = vsel %vm2363, %v1331, %v2134
      %v2387 = vsel %vm2363, %v1333, %v2138
      %v2388 = vsel %vm2363, %v1357, %v2142
      %v2389 = vsel %vm2363, %v1371, %v2146
      %v2390 = vsel %vm2363, %v1379, %v2150
      %v2391 = vsel %vm2363, %v1381, %v2154
      %v2392 = vsel %vm2363, %v1364, %v2158
      %v2393 = vsel %vm2363, %v1378, %v2162
      %v2394 = vsel %vm2363, %v1380, %v2166
      %v2395 = vsel %vm2363, %v1382, %v2170
      %v2396 = vsel %vm2363, %v1406, %v2174
      %v2397 = vsel %vm2363, %v1420, %v2178
      %v2398 = vsel %vm2363, %v1428, %v2182
      %v2399 = vsel %vm2363, %v1430, %v2186
      %v2400 = vsel %vm2363, %v1413, %v2190
      %v2401 = vsel %vm2363, %v1427, %v2194
      %v2402 = vsel %vm2363, %v1429, %v2198
      %v2403 = vsel %vm2363, %v1431, %v2202
      %v2404 = vsel %vm2363, %v1455, %v2206
      %v2405 = vsel %vm2363, %v1469, %v2210
      %v2406 = vsel %vm2363, %v1477, %v2214
      %v2407 = vsel %vm2363, %v1479, %v2218
      %v2408 = vsel %vm2363, %v1462, %v2222
      %v2409 = vsel %vm2363, %v1476, %v2226
      %v2410 = vsel %vm2363, %v1478, %v2230
      %v2411 = vsel %vm2363, %v1480, %v2234
      %v2412 = vsel %vm2363, %v1504, %v2238
      %v2413 = vsel %vm2363, %v1518, %v2242
      %v2414 = vsel %vm2363, %v1526, %v2246
      %v2415 = vsel %vm2363, %v1528, %v2250
      %v2416 = vsel %vm2363, %v1511, %v2254
      %v2417 = vsel %vm2363, %v1525, %v2258
      %v2418 = vsel %vm2363, %v1527, %v2262
      %v2419 = vsel %vm2363, %v1529, %v2266
      %v2420 = vsel %vm2363, %v1553, %v2270
      %v2421 = vsel %vm2363, %v1567, %v2274
      %v2422 = vsel %vm2363, %v1575, %v2278
      %v2423 = vsel %vm2363, %v1577, %v2282
      %v2424 = vsel %vm2363, %v1560, %v2286
      %v2425 = vsel %vm2363, %v1574, %v2290
      %v2426 = vsel %vm2363, %v1576, %v2294
      %v2427 = vsel %vm2363, %v1578, %v2298
      %v2436 = vcombine.high %v921, %v921
      %v2438 = vunpack.c.l.s4 1966171168
      %v2439 = vunpack.c.0.s8 %v2438
      %v2440 = vlaneseq
      %v2441 = vshrl.u32 %v2440, 7
      %v2442 = vsub.s32 %v2439, %v2441
      %v2443 = vrot.slane %v921, %v2442
      %v2445 = vunpack.c.l.s4 1966171168
      %v2446 = vunpack.c.0.s8 %v2445
      %v2447 = vlaneseq
      %v2448 = vshrl.u32 %v2447, 7
      %v2449 = vsub.s32 %v2446, %v2448
      %v2450 = vrot.slane %v2436, %v2449
      %v2451 = vcombine.high %v2443, %v2443
      %v2452 = vcombine.high %v2450, %v2450
      %v2454 = vunpack.c.l.s4 1966171168
      %v2455 = vunpack.c.0.s8 %v2454
      %v2456 = vlaneseq
      %v2457 = vshrl.u32 %v2456, 7
      %v2458 = vsub.s32 %v2455, %v2457
      %v2459 = vrot.slane %v2443, %v2458
      %v2461 = vunpack.c.l.s4 1966171168
      %v2462 = vunpack.c.0.s8 %v2461
      %v2463 = vlaneseq
      %v2464 = vshrl.u32 %v2463, 7
      %v2465 = vsub.s32 %v2462, %v2464
      %v2466 = vrot.slane %v2450, %v2465
      %v2468 = vunpack.c.l.s4 1966171168
      %v2469 = vunpack.c.0.s8 %v2468
      %v2470 = vlaneseq
      %v2471 = vshrl.u32 %v2470, 7
      %v2472 = vsub.s32 %v2469, %v2471
      %v2473 = vrot.slane %v2451, %v2472
      %v2475 = vunpack.c.l.s4 1966171168
      %v2476 = vunpack.c.0.s8 %v2475
      %v2477 = vlaneseq
      %v2478 = vshrl.u32 %v2477, 7
      %v2479 = vsub.s32 %v2476, %v2478
      %v2480 = vrot.slane %v2452, %v2479
      %v2481 = vcombine.high %v2459, %v2459
      %v2482 = vcombine.high %v2466, %v2466
      %v2483 = vcombine.high %v2473, %v2473
      %v2484 = vcombine.high %v2480, %v2480
      %v2485 = vcombine.high %v922, %v922
      %v2487 = vunpack.c.l.s4 1966171168
      %v2488 = vunpack.c.0.s8 %v2487
      %v2489 = vlaneseq
      %v2490 = vshrl.u32 %v2489, 7
      %v2491 = vsub.s32 %v2488, %v2490
      %v2492 = vrot.slane %v922, %v2491
      %v2494 = vunpack.c.l.s4 1966171168
      %v2495 = vunpack.c.0.s8 %v2494
      %v2496 = vlaneseq
      %v2497 = vshrl.u32 %v2496, 7
      %v2498 = vsub.s32 %v2495, %v2497
      %v2499 = vrot.slane %v2485, %v2498
      %v2500 = vcombine.high %v2492, %v2492
      %v2501 = vcombine.high %v2499, %v2499
      %v2503 = vunpack.c.l.s4 1966171168
      %v2504 = vunpack.c.0.s8 %v2503
      %v2505 = vlaneseq
      %v2506 = vshrl.u32 %v2505, 7
      %v2507 = vsub.s32 %v2504, %v2506
      %v2508 = vrot.slane %v2492, %v2507
      %v2510 = vunpack.c.l.s4 1966171168
      %v2511 = vunpack.c.0.s8 %v2510
      %v2512 = vlaneseq
      %v2513 = vshrl.u32 %v2512, 7
      %v2514 = vsub.s32 %v2511, %v2513
      %v2515 = vrot.slane %v2499, %v2514
      %v2517 = vunpack.c.l.s4 1966171168
      %v2518 = vunpack.c.0.s8 %v2517
      %v2519 = vlaneseq
      %v2520 = vshrl.u32 %v2519, 7
      %v2521 = vsub.s32 %v2518, %v2520
      %v2522 = vrot.slane %v2500, %v2521
      %v2524 = vunpack.c.l.s4 1966171168
      %v2525 = vunpack.c.0.s8 %v2524
      %v2526 = vlaneseq
      %v2527 = vshrl.u32 %v2526, 7
      %v2528 = vsub.s32 %v2525, %v2527
      %v2529 = vrot.slane %v2501, %v2528
      %v2530 = vcombine.high %v2508, %v2508
      %v2531 = vcombine.high %v2515, %v2515
      %v2532 = vcombine.high %v2522, %v2522
      %v2533 = vcombine.high %v2529, %v2529
      %v2534 = vcombine.high %v923, %v923
      %v2536 = vunpack.c.l.s4 1966171168
      %v2537 = vunpack.c.0.s8 %v2536
      %v2538 = vlaneseq
      %v2539 = vshrl.u32 %v2538, 7
      %v2540 = vsub.s32 %v2537, %v2539
      %v2541 = vrot.slane %v923, %v2540
      %v2543 = vunpack.c.l.s4 1966171168
      %v2544 = vunpack.c.0.s8 %v2543
      %v2545 = vlaneseq
      %v2546 = vshrl.u32 %v2545, 7
      %v2547 = vsub.s32 %v2544, %v2546
      %v2548 = vrot.slane %v2534, %v2547
      %v2549 = vcombine.high %v2541, %v2541
      %v2550 = vcombine.high %v2548, %v2548
      %v2552 = vunpack.c.l.s4 1966171168
      %v2553 = vunpack.c.0.s8 %v2552
      %v2554 = vlaneseq
      %v2555 = vshrl.u32 %v2554, 7
      %v2556 = vsub.s32 %v2553, %v2555
      %v2557 = vrot.slane %v2541, %v2556
      %v2559 = vunpack.c.l.s4 1966171168
      %v2560 = vunpack.c.0.s8 %v2559
      %v2561 = vlaneseq
      %v2562 = vshrl.u32 %v2561, 7
      %v2563 = vsub.s32 %v2560, %v2562
      %v2564 = vrot.slane %v2548, %v2563
      %v2566 = vunpack.c.l.s4 1966171168
      %v2567 = vunpack.c.0.s8 %v2566
      %v2568 = vlaneseq
      %v2569 = vshrl.u32 %v2568, 7
      %v2570 = vsub.s32 %v2567, %v2569
      %v2571 = vrot.slane %v2549, %v2570
      %v2573 = vunpack.c.l.s4 1966171168
      %v2574 = vunpack.c.0.s8 %v2573
      %v2575 = vlaneseq
      %v2576 = vshrl.u32 %v2575, 7
      %v2577 = vsub.s32 %v2574, %v2576
      %v2578 = vrot.slane %v2550, %v2577
      %v2579 = vcombine.high %v2557, %v2557
      %v2580 = vcombine.high %v2564, %v2564
      %v2581 = vcombine.high %v2571, %v2571
      %v2582 = vcombine.high %v2578, %v2578
      %v2583 = vcombine.high %v924, %v924
      %v2585 = vunpack.c.l.s4 1966171168
      %v2586 = vunpack.c.0.s8 %v2585
      %v2587 = vlaneseq
      %v2588 = vshrl.u32 %v2587, 7
      %v2589 = vsub.s32 %v2586, %v2588
      %v2590 = vrot.slane %v924, %v2589
      %v2592 = vunpack.c.l.s4 1966171168
      %v2593 = vunpack.c.0.s8 %v2592
      %v2594 = vlaneseq
      %v2595 = vshrl.u32 %v2594, 7
      %v2596 = vsub.s32 %v2593, %v2595
      %v2597 = vrot.slane %v2583, %v2596
      %v2598 = vcombine.high %v2590, %v2590
      %v2599 = vcombine.high %v2597, %v2597
      %v2601 = vunpack.c.l.s4 1966171168
      %v2602 = vunpack.c.0.s8 %v2601
      %v2603 = vlaneseq
      %v2604 = vshrl.u32 %v2603, 7
      %v2605 = vsub.s32 %v2602, %v2604
      %v2606 = vrot.slane %v2590, %v2605
      %v2608 = vunpack.c.l.s4 1966171168
      %v2609 = vunpack.c.0.s8 %v2608
      %v2610 = vlaneseq
      %v2611 = vshrl.u32 %v2610, 7
      %v2612 = vsub.s32 %v2609, %v2611
      %v2613 = vrot.slane %v2597, %v2612
      %v2615 = vunpack.c.l.s4 1966171168
      %v2616 = vunpack.c.0.s8 %v2615
      %v2617 = vlaneseq
      %v2618 = vshrl.u32 %v2617, 7
      %v2619 = vsub.s32 %v2616, %v2618
      %v2620 = vrot.slane %v2598, %v2619
      %v2622 = vunpack.c.l.s4 1966171168
      %v2623 = vunpack.c.0.s8 %v2622
      %v2624 = vlaneseq
      %v2625 = vshrl.u32 %v2624, 7
      %v2626 = vsub.s32 %v2623, %v2625
      %v2627 = vrot.slane %v2599, %v2626
      %v2628 = vcombine.high %v2606, %v2606
      %v2629 = vcombine.high %v2613, %v2613
      %v2630 = vcombine.high %v2620, %v2620
      %v2631 = vcombine.high %v2627, %v2627
      %v2632 = vcombine.high %v925, %v925
      %v2634 = vunpack.c.l.s4 1966171168
      %v2635 = vunpack.c.0.s8 %v2634
      %v2636 = vlaneseq
      %v2637 = vshrl.u32 %v2636, 7
      %v2638 = vsub.s32 %v2635, %v2637
      %v2639 = vrot.slane %v925, %v2638
      %v2641 = vunpack.c.l.s4 1966171168
      %v2642 = vunpack.c.0.s8 %v2641
      %v2643 = vlaneseq
      %v2644 = vshrl.u32 %v2643, 7
      %v2645 = vsub.s32 %v2642, %v2644
      %v2646 = vrot.slane %v2632, %v2645
      %v2647 = vcombine.high %v2639, %v2639
      %v2648 = vcombine.high %v2646, %v2646
      %v2650 = vunpack.c.l.s4 1966171168
      %v2651 = vunpack.c.0.s8 %v2650
      %v2652 = vlaneseq
      %v2653 = vshrl.u32 %v2652, 7
      %v2654 = vsub.s32 %v2651, %v2653
      %v2655 = vrot.slane %v2639, %v2654
      %v2657 = vunpack.c.l.s4 1966171168
      %v2658 = vunpack.c.0.s8 %v2657
      %v2659 = vlaneseq
      %v2660 = vshrl.u32 %v2659, 7
      %v2661 = vsub.s32 %v2658, %v2660
      %v2662 = vrot.slane %v2646, %v2661
      %v2664 = vunpack.c.l.s4 1966171168
      %v2665 = vunpack.c.0.s8 %v2664
      %v2666 = vlaneseq
      %v2667 = vshrl.u32 %v2666, 7
      %v2668 = vsub.s32 %v2665, %v2667
      %v2669 = vrot.slane %v2647, %v2668
      %v2671 = vunpack.c.l.s4 1966171168
      %v2672 = vunpack.c.0.s8 %v2671
      %v2673 = vlaneseq
      %v2674 = vshrl.u32 %v2673, 7
      %v2675 = vsub.s32 %v2672, %v2674
      %v2676 = vrot.slane %v2648, %v2675
      %v2677 = vcombine.high %v2655, %v2655
      %v2678 = vcombine.high %v2662, %v2662
      %v2679 = vcombine.high %v2669, %v2669
      %v2680 = vcombine.high %v2676, %v2676
      %v2681 = vcombine.high %v926, %v926
      %v2683 = vunpack.c.l.s4 1966171168
      %v2684 = vunpack.c.0.s8 %v2683
      %v2685 = vlaneseq
      %v2686 = vshrl.u32 %v2685, 7
      %v2687 = vsub.s32 %v2684, %v2686
      %v2688 = vrot.slane %v926, %v2687
      %v2690 = vunpack.c.l.s4 1966171168
      %v2691 = vunpack.c.0.s8 %v2690
      %v2692 = vlaneseq
      %v2693 = vshrl.u32 %v2692, 7
      %v2694 = vsub.s32 %v2691, %v2693
      %v2695 = vrot.slane %v2681, %v2694
      %v2696 = vcombine.high %v2688, %v2688
      %v2697 = vcombine.high %v2695, %v2695
      %v2699 = vunpack.c.l.s4 1966171168
      %v2700 = vunpack.c.0.s8 %v2699
      %v2701 = vlaneseq
      %v2702 = vshrl.u32 %v2701, 7
      %v2703 = vsub.s32 %v2700, %v2702
      %v2704 = vrot.slane %v2688, %v2703
      %v2706 = vunpack.c.l.s4 1966171168
      %v2707 = vunpack.c.0.s8 %v2706
      %v2708 = vlaneseq
      %v2709 = vshrl.u32 %v2708, 7
      %v2710 = vsub.s32 %v2707, %v2709
      %v2711 = vrot.slane %v2695, %v2710
      %v2713 = vunpack.c.l.s4 1966171168
      %v2714 = vunpack.c.0.s8 %v2713
      %v2715 = vlaneseq
      %v2716 = vshrl.u32 %v2715, 7
      %v2717 = vsub.s32 %v2714, %v2716
      %v2718 = vrot.slane %v2696, %v2717
      %v2720 = vunpack.c.l.s4 1966171168
      %v2721 = vunpack.c.0.s8 %v2720
      %v2722 = vlaneseq
      %v2723 = vshrl.u32 %v2722, 7
      %v2724 = vsub.s32 %v2721, %v2723
      %v2725 = vrot.slane %v2697, %v2724
      %v2726 = vcombine.high %v2704, %v2704
      %v2727 = vcombine.high %v2711, %v2711
      %v2728 = vcombine.high %v2718, %v2718
      %v2729 = vcombine.high %v2725, %v2725
      %v2730 = vcombine.high %v927, %v927
      %v2732 = vunpack.c.l.s4 1966171168
      %v2733 = vunpack.c.0.s8 %v2732
      %v2734 = vlaneseq
      %v2735 = vshrl.u32 %v2734, 7
      %v2736 = vsub.s32 %v2733, %v2735
      %v2737 = vrot.slane %v927, %v2736
      %v2739 = vunpack.c.l.s4 1966171168
      %v2740 = vunpack.c.0.s8 %v2739
      %v2741 = vlaneseq
      %v2742 = vshrl.u32 %v2741, 7
      %v2743 = vsub.s32 %v2740, %v2742
      %v2744 = vrot.slane %v2730, %v2743
      %v2745 = vcombine.high %v2737, %v2737
      %v2746 = vcombine.high %v2744, %v2744
      %v2748 = vunpack.c.l.s4 1966171168
      %v2749 = vunpack.c.0.s8 %v2748
      %v2750 = vlaneseq
      %v2751 = vshrl.u32 %v2750, 7
      %v2752 = vsub.s32 %v2749, %v2751
      %v2753 = vrot.slane %v2737, %v2752
      %v2755 = vunpack.c.l.s4 1966171168
      %v2756 = vunpack.c.0.s8 %v2755
      %v2757 = vlaneseq
      %v2758 = vshrl.u32 %v2757, 7
      %v2759 = vsub.s32 %v2756, %v2758
      %v2760 = vrot.slane %v2744, %v2759
      %v2762 = vunpack.c.l.s4 1966171168
      %v2763 = vunpack.c.0.s8 %v2762
      %v2764 = vlaneseq
      %v2765 = vshrl.u32 %v2764, 7
      %v2766 = vsub.s32 %v2763, %v2765
      %v2767 = vrot.slane %v2745, %v2766
      %v2769 = vunpack.c.l.s4 1966171168
      %v2770 = vunpack.c.0.s8 %v2769
      %v2771 = vlaneseq
      %v2772 = vshrl.u32 %v2771, 7
      %v2773 = vsub.s32 %v2770, %v2772
      %v2774 = vrot.slane %v2746, %v2773
      %v2775 = vcombine.high %v2753, %v2753
      %v2776 = vcombine.high %v2760, %v2760
      %v2777 = vcombine.high %v2767, %v2767
      %v2778 = vcombine.high %v2774, %v2774
      %v2779 = vcombine.high %v928, %v928
      %v2781 = vunpack.c.l.s4 1966171168
      %v2782 = vunpack.c.0.s8 %v2781
      %v2783 = vlaneseq
      %v2784 = vshrl.u32 %v2783, 7
      %v2785 = vsub.s32 %v2782, %v2784
      %v2786 = vrot.slane %v928, %v2785
      %v2788 = vunpack.c.l.s4 1966171168
      %v2789 = vunpack.c.0.s8 %v2788
      %v2790 = vlaneseq
      %v2791 = vshrl.u32 %v2790, 7
      %v2792 = vsub.s32 %v2789, %v2791
      %v2793 = vrot.slane %v2779, %v2792
      %v2794 = vcombine.high %v2786, %v2786
      %v2795 = vcombine.high %v2793, %v2793
      %v2797 = vunpack.c.l.s4 1966171168
      %v2798 = vunpack.c.0.s8 %v2797
      %v2799 = vlaneseq
      %v2800 = vshrl.u32 %v2799, 7
      %v2801 = vsub.s32 %v2798, %v2800
      %v2802 = vrot.slane %v2786, %v2801
      %v2804 = vunpack.c.l.s4 1966171168
      %v2805 = vunpack.c.0.s8 %v2804
      %v2806 = vlaneseq
      %v2807 = vshrl.u32 %v2806, 7
      %v2808 = vsub.s32 %v2805, %v2807
      %v2809 = vrot.slane %v2793, %v2808
      %v2811 = vunpack.c.l.s4 1966171168
      %v2812 = vunpack.c.0.s8 %v2811
      %v2813 = vlaneseq
      %v2814 = vshrl.u32 %v2813, 7
      %v2815 = vsub.s32 %v2812, %v2814
      %v2816 = vrot.slane %v2794, %v2815
      %v2818 = vunpack.c.l.s4 1966171168
      %v2819 = vunpack.c.0.s8 %v2818
      %v2820 = vlaneseq
      %v2821 = vshrl.u32 %v2820, 7
      %v2822 = vsub.s32 %v2819, %v2821
      %v2823 = vrot.slane %v2795, %v2822
      %v2824 = vcombine.high %v2802, %v2802
      %v2825 = vcombine.high %v2809, %v2809
      %v2826 = vcombine.high %v2816, %v2816
      %v2827 = vcombine.high %v2823, %v2823
      %v2900 = vcombine.high %v1171, %v1171
      %v2902 = vunpack.c.l.s4 1966171168
      %v2903 = vunpack.c.0.s8 %v2902
      %v2904 = vlaneseq
      %v2905 = vshrl.u32 %v2904, 7
      %v2906 = vsub.s32 %v2903, %v2905
      %v2907 = vrot.slane %v1171, %v2906
      %v2909 = vunpack.c.l.s4 1966171168
      %v2910 = vunpack.c.0.s8 %v2909
      %v2911 = vlaneseq
      %v2912 = vshrl.u32 %v2911, 7
      %v2913 = vsub.s32 %v2910, %v2912
      %v2914 = vrot.slane %v2900, %v2913
      %v2915 = vcombine.high %v2907, %v2907
      %v2916 = vcombine.high %v2914, %v2914
      %v2918 = vunpack.c.l.s4 1966171168
      %v2919 = vunpack.c.0.s8 %v2918
      %v2920 = vlaneseq
      %v2921 = vshrl.u32 %v2920, 7
      %v2922 = vsub.s32 %v2919, %v2921
      %v2923 = vrot.slane %v2907, %v2922
      %v2925 = vunpack.c.l.s4 1966171168
      %v2926 = vunpack.c.0.s8 %v2925
      %v2927 = vlaneseq
      %v2928 = vshrl.u32 %v2927, 7
      %v2929 = vsub.s32 %v2926, %v2928
      %v2930 = vrot.slane %v2914, %v2929
      %v2932 = vunpack.c.l.s4 1966171168
      %v2933 = vunpack.c.0.s8 %v2932
      %v2934 = vlaneseq
      %v2935 = vshrl.u32 %v2934, 7
      %v2936 = vsub.s32 %v2933, %v2935
      %v2937 = vrot.slane %v2915, %v2936
      %v2939 = vunpack.c.l.s4 1966171168
      %v2940 = vunpack.c.0.s8 %v2939
      %v2941 = vlaneseq
      %v2942 = vshrl.u32 %v2941, 7
      %v2943 = vsub.s32 %v2940, %v2942
      %v2944 = vrot.slane %v2916, %v2943
      %v2945 = vcombine.high %v2923, %v2923
      %v2946 = vcombine.high %v2930, %v2930
      %v2947 = vcombine.high %v2937, %v2937
      %v2948 = vcombine.high %v2944, %v2944
      %v2949 = vcombine.high %v1172, %v1172
      %v2951 = vunpack.c.l.s4 1966171168
      %v2952 = vunpack.c.0.s8 %v2951
      %v2953 = vlaneseq
      %v2954 = vshrl.u32 %v2953, 7
      %v2955 = vsub.s32 %v2952, %v2954
      %v2956 = vrot.slane %v1172, %v2955
      %v2958 = vunpack.c.l.s4 1966171168
      %v2959 = vunpack.c.0.s8 %v2958
      %v2960 = vlaneseq
      %v2961 = vshrl.u32 %v2960, 7
      %v2962 = vsub.s32 %v2959, %v2961
      %v2963 = vrot.slane %v2949, %v2962
      %v2964 = vcombine.high %v2956, %v2956
      %v2965 = vcombine.high %v2963, %v2963
      %v2967 = vunpack.c.l.s4 1966171168
      %v2968 = vunpack.c.0.s8 %v2967
      %v2969 = vlaneseq
      %v2970 = vshrl.u32 %v2969, 7
      %v2971 = vsub.s32 %v2968, %v2970
      %v2972 = vrot.slane %v2956, %v2971
      %v2974 = vunpack.c.l.s4 1966171168
      %v2975 = vunpack.c.0.s8 %v2974
      %v2976 = vlaneseq
      %v2977 = vshrl.u32 %v2976, 7
      %v2978 = vsub.s32 %v2975, %v2977
      %v2979 = vrot.slane %v2963, %v2978
      %v2981 = vunpack.c.l.s4 1966171168
      %v2982 = vunpack.c.0.s8 %v2981
      %v2983 = vlaneseq
      %v2984 = vshrl.u32 %v2983, 7
      %v2985 = vsub.s32 %v2982, %v2984
      %v2986 = vrot.slane %v2964, %v2985
      %v2988 = vunpack.c.l.s4 1966171168
      %v2989 = vunpack.c.0.s8 %v2988
      %v2990 = vlaneseq
      %v2991 = vshrl.u32 %v2990, 7
      %v2992 = vsub.s32 %v2989, %v2991
      %v2993 = vrot.slane %v2965, %v2992
      %v2994 = vcombine.high %v2972, %v2972
      %v2995 = vcombine.high %v2979, %v2979
      %v2996 = vcombine.high %v2986, %v2986
      %v2997 = vcombine.high %v2993, %v2993
      %v2998 = vcombine.high %v1173, %v1173
      %v3000 = vunpack.c.l.s4 1966171168
      %v3001 = vunpack.c.0.s8 %v3000
      %v3002 = vlaneseq
      %v3003 = vshrl.u32 %v3002, 7
      %v3004 = vsub.s32 %v3001, %v3003
      %v3005 = vrot.slane %v1173, %v3004
      %v3007 = vunpack.c.l.s4 1966171168
      %v3008 = vunpack.c.0.s8 %v3007
      %v3009 = vlaneseq
      %v3010 = vshrl.u32 %v3009, 7
      %v3011 = vsub.s32 %v3008, %v3010
      %v3012 = vrot.slane %v2998, %v3011
      %v3013 = vcombine.high %v3005, %v3005
      %v3014 = vcombine.high %v3012, %v3012
      %v3016 = vunpack.c.l.s4 1966171168
      %v3017 = vunpack.c.0.s8 %v3016
      %v3018 = vlaneseq
      %v3019 = vshrl.u32 %v3018, 7
      %v3020 = vsub.s32 %v3017, %v3019
      %v3021 = vrot.slane %v3005, %v3020
      %v3023 = vunpack.c.l.s4 1966171168
      %v3024 = vunpack.c.0.s8 %v3023
      %v3025 = vlaneseq
      %v3026 = vshrl.u32 %v3025, 7
      %v3027 = vsub.s32 %v3024, %v3026
      %v3028 = vrot.slane %v3012, %v3027
      %v3030 = vunpack.c.l.s4 1966171168
      %v3031 = vunpack.c.0.s8 %v3030
      %v3032 = vlaneseq
      %v3033 = vshrl.u32 %v3032, 7
      %v3034 = vsub.s32 %v3031, %v3033
      %v3035 = vrot.slane %v3013, %v3034
      %v3037 = vunpack.c.l.s4 1966171168
      %v3038 = vunpack.c.0.s8 %v3037
      %v3039 = vlaneseq
      %v3040 = vshrl.u32 %v3039, 7
      %v3041 = vsub.s32 %v3038, %v3040
      %v3042 = vrot.slane %v3014, %v3041
      %v3043 = vcombine.high %v3021, %v3021
      %v3044 = vcombine.high %v3028, %v3028
      %v3045 = vcombine.high %v3035, %v3035
      %v3046 = vcombine.high %v3042, %v3042
      %v3047 = vcombine.high %v1174, %v1174
      %v3049 = vunpack.c.l.s4 1966171168
      %v3050 = vunpack.c.0.s8 %v3049
      %v3051 = vlaneseq
      %v3052 = vshrl.u32 %v3051, 7
      %v3053 = vsub.s32 %v3050, %v3052
      %v3054 = vrot.slane %v1174, %v3053
      %v3056 = vunpack.c.l.s4 1966171168
      %v3057 = vunpack.c.0.s8 %v3056
      %v3058 = vlaneseq
      %v3059 = vshrl.u32 %v3058, 7
      %v3060 = vsub.s32 %v3057, %v3059
      %v3061 = vrot.slane %v3047, %v3060
      %v3062 = vcombine.high %v3054, %v3054
      %v3063 = vcombine.high %v3061, %v3061
      %v3065 = vunpack.c.l.s4 1966171168
      %v3066 = vunpack.c.0.s8 %v3065
      %v3067 = vlaneseq
      %v3068 = vshrl.u32 %v3067, 7
      %v3069 = vsub.s32 %v3066, %v3068
      %v3070 = vrot.slane %v3054, %v3069
      %v3072 = vunpack.c.l.s4 1966171168
      %v3073 = vunpack.c.0.s8 %v3072
      %v3074 = vlaneseq
      %v3075 = vshrl.u32 %v3074, 7
      %v3076 = vsub.s32 %v3073, %v3075
      %v3077 = vrot.slane %v3061, %v3076
      %v3079 = vunpack.c.l.s4 1966171168
      %v3080 = vunpack.c.0.s8 %v3079
      %v3081 = vlaneseq
      %v3082 = vshrl.u32 %v3081, 7
      %v3083 = vsub.s32 %v3080, %v3082
      %v3084 = vrot.slane %v3062, %v3083
      %v3086 = vunpack.c.l.s4 1966171168
      %v3087 = vunpack.c.0.s8 %v3086
      %v3088 = vlaneseq
      %v3089 = vshrl.u32 %v3088, 7
      %v3090 = vsub.s32 %v3087, %v3089
      %v3091 = vrot.slane %v3063, %v3090
      %v3092 = vcombine.high %v3070, %v3070
      %v3093 = vcombine.high %v3077, %v3077
      %v3094 = vcombine.high %v3084, %v3084
      %v3095 = vcombine.high %v3091, %v3091
      %v3096 = vcombine.high %v1175, %v1175
      %v3098 = vunpack.c.l.s4 1966171168
      %v3099 = vunpack.c.0.s8 %v3098
      %v3100 = vlaneseq
      %v3101 = vshrl.u32 %v3100, 7
      %v3102 = vsub.s32 %v3099, %v3101
      %v3103 = vrot.slane %v1175, %v3102
      %v3105 = vunpack.c.l.s4 1966171168
      %v3106 = vunpack.c.0.s8 %v3105
      %v3107 = vlaneseq
      %v3108 = vshrl.u32 %v3107, 7
      %v3109 = vsub.s32 %v3106, %v3108
      %v3110 = vrot.slane %v3096, %v3109
      %v3111 = vcombine.high %v3103, %v3103
      %v3112 = vcombine.high %v3110, %v3110
      %v3114 = vunpack.c.l.s4 1966171168
      %v3115 = vunpack.c.0.s8 %v3114
      %v3116 = vlaneseq
      %v3117 = vshrl.u32 %v3116, 7
      %v3118 = vsub.s32 %v3115, %v3117
      %v3119 = vrot.slane %v3103, %v3118
      %v3121 = vunpack.c.l.s4 1966171168
      %v3122 = vunpack.c.0.s8 %v3121
      %v3123 = vlaneseq
      %v3124 = vshrl.u32 %v3123, 7
      %v3125 = vsub.s32 %v3122, %v3124
      %v3126 = vrot.slane %v3110, %v3125
      %v3128 = vunpack.c.l.s4 1966171168
      %v3129 = vunpack.c.0.s8 %v3128
      %v3130 = vlaneseq
      %v3131 = vshrl.u32 %v3130, 7
      %v3132 = vsub.s32 %v3129, %v3131
      %v3133 = vrot.slane %v3111, %v3132
      %v3135 = vunpack.c.l.s4 1966171168
      %v3136 = vunpack.c.0.s8 %v3135
      %v3137 = vlaneseq
      %v3138 = vshrl.u32 %v3137, 7
      %v3139 = vsub.s32 %v3136, %v3138
      %v3140 = vrot.slane %v3112, %v3139
      %v3141 = vcombine.high %v3119, %v3119
      %v3142 = vcombine.high %v3126, %v3126
      %v3143 = vcombine.high %v3133, %v3133
      %v3144 = vcombine.high %v3140, %v3140
      %v3145 = vcombine.high %v1176, %v1176
      %v3147 = vunpack.c.l.s4 1966171168
      %v3148 = vunpack.c.0.s8 %v3147
      %v3149 = vlaneseq
      %v3150 = vshrl.u32 %v3149, 7
      %v3151 = vsub.s32 %v3148, %v3150
      %v3152 = vrot.slane %v1176, %v3151
      %v3154 = vunpack.c.l.s4 1966171168
      %v3155 = vunpack.c.0.s8 %v3154
      %v3156 = vlaneseq
      %v3157 = vshrl.u32 %v3156, 7
      %v3158 = vsub.s32 %v3155, %v3157
      %v3159 = vrot.slane %v3145, %v3158
      %v3160 = vcombine.high %v3152, %v3152
      %v3161 = vcombine.high %v3159, %v3159
      %v3163 = vunpack.c.l.s4 1966171168
      %v3164 = vunpack.c.0.s8 %v3163
      %v3165 = vlaneseq
      %v3166 = vshrl.u32 %v3165, 7
      %v3167 = vsub.s32 %v3164, %v3166
      %v3168 = vrot.slane %v3152, %v3167
      %v3170 = vunpack.c.l.s4 1966171168
      %v3171 = vunpack.c.0.s8 %v3170
      %v3172 = vlaneseq
      %v3173 = vshrl.u32 %v3172, 7
      %v3174 = vsub.s32 %v3171, %v3173
      %v3175 = vrot.slane %v3159, %v3174
      %v3177 = vunpack.c.l.s4 1966171168
      %v3178 = vunpack.c.0.s8 %v3177
      %v3179 = vlaneseq
      %v3180 = vshrl.u32 %v3179, 7
      %v3181 = vsub.s32 %v3178, %v3180
      %v3182 = vrot.slane %v3160, %v3181
      %v3184 = vunpack.c.l.s4 1966171168
      %v3185 = vunpack.c.0.s8 %v3184
      %v3186 = vlaneseq
      %v3187 = vshrl.u32 %v3186, 7
      %v3188 = vsub.s32 %v3185, %v3187
      %v3189 = vrot.slane %v3161, %v3188
      %v3190 = vcombine.high %v3168, %v3168
      %v3191 = vcombine.high %v3175, %v3175
      %v3192 = vcombine.high %v3182, %v3182
      %v3193 = vcombine.high %v3189, %v3189
      %v3194 = vcombine.high %v1177, %v1177
      %v3196 = vunpack.c.l.s4 1966171168
      %v3197 = vunpack.c.0.s8 %v3196
      %v3198 = vlaneseq
      %v3199 = vshrl.u32 %v3198, 7
      %v3200 = vsub.s32 %v3197, %v3199
      %v3201 = vrot.slane %v1177, %v3200
      %v3203 = vunpack.c.l.s4 1966171168
      %v3204 = vunpack.c.0.s8 %v3203
      %v3205 = vlaneseq
      %v3206 = vshrl.u32 %v3205, 7
      %v3207 = vsub.s32 %v3204, %v3206
      %v3208 = vrot.slane %v3194, %v3207
      %v3209 = vcombine.high %v3201, %v3201
      %v3210 = vcombine.high %v3208, %v3208
      %v3212 = vunpack.c.l.s4 1966171168
      %v3213 = vunpack.c.0.s8 %v3212
      %v3214 = vlaneseq
      %v3215 = vshrl.u32 %v3214, 7
      %v3216 = vsub.s32 %v3213, %v3215
      %v3217 = vrot.slane %v3201, %v3216
      %v3219 = vunpack.c.l.s4 1966171168
      %v3220 = vunpack.c.0.s8 %v3219
      %v3221 = vlaneseq
      %v3222 = vshrl.u32 %v3221, 7
      %v3223 = vsub.s32 %v3220, %v3222
      %v3224 = vrot.slane %v3208, %v3223
      %v3226 = vunpack.c.l.s4 1966171168
      %v3227 = vunpack.c.0.s8 %v3226
      %v3228 = vlaneseq
      %v3229 = vshrl.u32 %v3228, 7
      %v3230 = vsub.s32 %v3227, %v3229
      %v3231 = vrot.slane %v3209, %v3230
      %v3233 = vunpack.c.l.s4 1966171168
      %v3234 = vunpack.c.0.s8 %v3233
      %v3235 = vlaneseq
      %v3236 = vshrl.u32 %v3235, 7
      %v3237 = vsub.s32 %v3234, %v3236
      %v3238 = vrot.slane %v3210, %v3237
      %v3239 = vcombine.high %v3217, %v3217
      %v3240 = vcombine.high %v3224, %v3224
      %v3241 = vcombine.high %v3231, %v3231
      %v3242 = vcombine.high %v3238, %v3238
      %v3243 = vcombine.high %v1178, %v1178
      %v3245 = vunpack.c.l.s4 1966171168
      %v3246 = vunpack.c.0.s8 %v3245
      %v3247 = vlaneseq
      %v3248 = vshrl.u32 %v3247, 7
      %v3249 = vsub.s32 %v3246, %v3248
      %v3250 = vrot.slane %v1178, %v3249
      %v3252 = vunpack.c.l.s4 1966171168
      %v3253 = vunpack.c.0.s8 %v3252
      %v3254 = vlaneseq
      %v3255 = vshrl.u32 %v3254, 7
      %v3256 = vsub.s32 %v3253, %v3255
      %v3257 = vrot.slane %v3243, %v3256
      %v3258 = vcombine.high %v3250, %v3250
      %v3259 = vcombine.high %v3257, %v3257
      %v3261 = vunpack.c.l.s4 1966171168
      %v3262 = vunpack.c.0.s8 %v3261
      %v3263 = vlaneseq
      %v3264 = vshrl.u32 %v3263, 7
      %v3265 = vsub.s32 %v3262, %v3264
      %v3266 = vrot.slane %v3250, %v3265
      %v3268 = vunpack.c.l.s4 1966171168
      %v3269 = vunpack.c.0.s8 %v3268
      %v3270 = vlaneseq
      %v3271 = vshrl.u32 %v3270, 7
      %v3272 = vsub.s32 %v3269, %v3271
      %v3273 = vrot.slane %v3257, %v3272
      %v3275 = vunpack.c.l.s4 1966171168
      %v3276 = vunpack.c.0.s8 %v3275
      %v3277 = vlaneseq
      %v3278 = vshrl.u32 %v3277, 7
      %v3279 = vsub.s32 %v3276, %v3278
      %v3280 = vrot.slane %v3258, %v3279
      %v3282 = vunpack.c.l.s4 1966171168
      %v3283 = vunpack.c.0.s8 %v3282
      %v3284 = vlaneseq
      %v3285 = vshrl.u32 %v3284, 7
      %v3286 = vsub.s32 %v3283, %v3285
      %v3287 = vrot.slane %v3259, %v3286
      %v3288 = vcombine.high %v3266, %v3266
      %v3289 = vcombine.high %v3273, %v3273
      %v3290 = vcombine.high %v3280, %v3280
      %v3291 = vcombine.high %v3287, %v3287
      %v3292 = vlaneseq
      %v3293 = vshrl.u32 %v3292, 7
      %v3294 = vsub.s32 0, %v3293
      %v3295 = vrot.slane %v2923, %v3294
      %v3296 = vlaneseq
      %v3297 = vshrl.u32 %v3296, 7
      %v3298 = vsub.s32 0, %v3297
      %v3299 = vrot.slane %v2937, %v3298
      %v3300 = vlaneseq
      %v3301 = vshrl.u32 %v3300, 7
      %v3302 = vsub.s32 0, %v3301
      %v3303 = vrot.slane %v2945, %v3302
      %v3304 = vlaneseq
      %v3305 = vshrl.u32 %v3304, 7
      %v3306 = vsub.s32 0, %v3305
      %v3307 = vrot.slane %v2947, %v3306
      %v3308 = vlaneseq
      %v3309 = vshrl.u32 %v3308, 7
      %v3310 = vsub.s32 0, %v3309
      %v3311 = vrot.slane %v2930, %v3310
      %v3312 = vlaneseq
      %v3313 = vshrl.u32 %v3312, 7
      %v3314 = vsub.s32 0, %v3313
      %v3315 = vrot.slane %v2944, %v3314
      %v3316 = vlaneseq
      %v3317 = vshrl.u32 %v3316, 7
      %v3318 = vsub.s32 0, %v3317
      %v3319 = vrot.slane %v2946, %v3318
      %v3320 = vlaneseq
      %v3321 = vshrl.u32 %v3320, 7
      %v3322 = vsub.s32 0, %v3321
      %v3323 = vrot.slane %v2948, %v3322
      %v3324 = vlaneseq
      %v3325 = vshrl.u32 %v3324, 7
      %v3326 = vsub.s32 0, %v3325
      %v3327 = vrot.slane %v2972, %v3326
      %v3328 = vlaneseq
      %v3329 = vshrl.u32 %v3328, 7
      %v3330 = vsub.s32 0, %v3329
      %v3331 = vrot.slane %v2986, %v3330
      %v3332 = vlaneseq
      %v3333 = vshrl.u32 %v3332, 7
      %v3334 = vsub.s32 0, %v3333
      %v3335 = vrot.slane %v2994, %v3334
      %v3336 = vlaneseq
      %v3337 = vshrl.u32 %v3336, 7
      %v3338 = vsub.s32 0, %v3337
      %v3339 = vrot.slane %v2996, %v3338
      %v3340 = vlaneseq
      %v3341 = vshrl.u32 %v3340, 7
      %v3342 = vsub.s32 0, %v3341
      %v3343 = vrot.slane %v2979, %v3342
      %v3344 = vlaneseq
      %v3345 = vshrl.u32 %v3344, 7
      %v3346 = vsub.s32 0, %v3345
      %v3347 = vrot.slane %v2993, %v3346
      %v3348 = vlaneseq
      %v3349 = vshrl.u32 %v3348, 7
      %v3350 = vsub.s32 0, %v3349
      %v3351 = vrot.slane %v2995, %v3350
      %v3352 = vlaneseq
      %v3353 = vshrl.u32 %v3352, 7
      %v3354 = vsub.s32 0, %v3353
      %v3355 = vrot.slane %v2997, %v3354
      %v3356 = vlaneseq
      %v3357 = vshrl.u32 %v3356, 7
      %v3358 = vsub.s32 0, %v3357
      %v3359 = vrot.slane %v3021, %v3358
      %v3360 = vlaneseq
      %v3361 = vshrl.u32 %v3360, 7
      %v3362 = vsub.s32 0, %v3361
      %v3363 = vrot.slane %v3035, %v3362
      %v3364 = vlaneseq
      %v3365 = vshrl.u32 %v3364, 7
      %v3366 = vsub.s32 0, %v3365
      %v3367 = vrot.slane %v3043, %v3366
      %v3368 = vlaneseq
      %v3369 = vshrl.u32 %v3368, 7
      %v3370 = vsub.s32 0, %v3369
      %v3371 = vrot.slane %v3045, %v3370
      %v3372 = vlaneseq
      %v3373 = vshrl.u32 %v3372, 7
      %v3374 = vsub.s32 0, %v3373
      %v3375 = vrot.slane %v3028, %v3374
      %v3376 = vlaneseq
      %v3377 = vshrl.u32 %v3376, 7
      %v3378 = vsub.s32 0, %v3377
      %v3379 = vrot.slane %v3042, %v3378
      %v3380 = vlaneseq
      %v3381 = vshrl.u32 %v3380, 7
      %v3382 = vsub.s32 0, %v3381
      %v3383 = vrot.slane %v3044, %v3382
      %v3384 = vlaneseq
      %v3385 = vshrl.u32 %v3384, 7
      %v3386 = vsub.s32 0, %v3385
      %v3387 = vrot.slane %v3046, %v3386
      %v3388 = vlaneseq
      %v3389 = vshrl.u32 %v3388, 7
      %v3390 = vsub.s32 0, %v3389
      %v3391 = vrot.slane %v3070, %v3390
      %v3392 = vlaneseq
      %v3393 = vshrl.u32 %v3392, 7
      %v3394 = vsub.s32 0, %v3393
      %v3395 = vrot.slane %v3084, %v3394
      %v3396 = vlaneseq
      %v3397 = vshrl.u32 %v3396, 7
      %v3398 = vsub.s32 0, %v3397
      %v3399 = vrot.slane %v3092, %v3398
      %v3400 = vlaneseq
      %v3401 = vshrl.u32 %v3400, 7
      %v3402 = vsub.s32 0, %v3401
      %v3403 = vrot.slane %v3094, %v3402
      %v3404 = vlaneseq
      %v3405 = vshrl.u32 %v3404, 7
      %v3406 = vsub.s32 0, %v3405
      %v3407 = vrot.slane %v3077, %v3406
      %v3408 = vlaneseq
      %v3409 = vshrl.u32 %v3408, 7
      %v3410 = vsub.s32 0, %v3409
      %v3411 = vrot.slane %v3091, %v3410
      %v3412 = vlaneseq
      %v3413 = vshrl.u32 %v3412, 7
      %v3414 = vsub.s32 0, %v3413
      %v3415 = vrot.slane %v3093, %v3414
      %v3416 = vlaneseq
      %v3417 = vshrl.u32 %v3416, 7
      %v3418 = vsub.s32 0, %v3417
      %v3419 = vrot.slane %v3095, %v3418
      %v3420 = vlaneseq
      %v3421 = vshrl.u32 %v3420, 7
      %v3422 = vsub.s32 0, %v3421
      %v3423 = vrot.slane %v3119, %v3422
      %v3424 = vlaneseq
      %v3425 = vshrl.u32 %v3424, 7
      %v3426 = vsub.s32 0, %v3425
      %v3427 = vrot.slane %v3133, %v3426
      %v3428 = vlaneseq
      %v3429 = vshrl.u32 %v3428, 7
      %v3430 = vsub.s32 0, %v3429
      %v3431 = vrot.slane %v3141, %v3430
      %v3432 = vlaneseq
      %v3433 = vshrl.u32 %v3432, 7
      %v3434 = vsub.s32 0, %v3433
      %v3435 = vrot.slane %v3143, %v3434
      %v3436 = vlaneseq
      %v3437 = vshrl.u32 %v3436, 7
      %v3438 = vsub.s32 0, %v3437
      %v3439 = vrot.slane %v3126, %v3438
      %v3440 = vlaneseq
      %v3441 = vshrl.u32 %v3440, 7
      %v3442 = vsub.s32 0, %v3441
      %v3443 = vrot.slane %v3140, %v3442
      %v3444 = vlaneseq
      %v3445 = vshrl.u32 %v3444, 7
      %v3446 = vsub.s32 0, %v3445
      %v3447 = vrot.slane %v3142, %v3446
      %v3448 = vlaneseq
      %v3449 = vshrl.u32 %v3448, 7
      %v3450 = vsub.s32 0, %v3449
      %v3451 = vrot.slane %v3144, %v3450
      %v3452 = vlaneseq
      %v3453 = vshrl.u32 %v3452, 7
      %v3454 = vsub.s32 0, %v3453
      %v3455 = vrot.slane %v3168, %v3454
      %v3456 = vlaneseq
      %v3457 = vshrl.u32 %v3456, 7
      %v3458 = vsub.s32 0, %v3457
      %v3459 = vrot.slane %v3182, %v3458
      %v3460 = vlaneseq
      %v3461 = vshrl.u32 %v3460, 7
      %v3462 = vsub.s32 0, %v3461
      %v3463 = vrot.slane %v3190, %v3462
      %v3464 = vlaneseq
      %v3465 = vshrl.u32 %v3464, 7
      %v3466 = vsub.s32 0, %v3465
      %v3467 = vrot.slane %v3192, %v3466
      %v3468 = vlaneseq
      %v3469 = vshrl.u32 %v3468, 7
      %v3470 = vsub.s32 0, %v3469
      %v3471 = vrot.slane %v3175, %v3470
      %v3472 = vlaneseq
      %v3473 = vshrl.u32 %v3472, 7
      %v3474 = vsub.s32 0, %v3473
      %v3475 = vrot.slane %v3189, %v3474
      %v3476 = vlaneseq
      %v3477 = vshrl.u32 %v3476, 7
      %v3478 = vsub.s32 0, %v3477
      %v3479 = vrot.slane %v3191, %v3478
      %v3480 = vlaneseq
      %v3481 = vshrl.u32 %v3480, 7
      %v3482 = vsub.s32 0, %v3481
      %v3483 = vrot.slane %v3193, %v3482
      %v3484 = vlaneseq
      %v3485 = vshrl.u32 %v3484, 7
      %v3486 = vsub.s32 0, %v3485
      %v3487 = vrot.slane %v3217, %v3486
      %v3488 = vlaneseq
      %v3489 = vshrl.u32 %v3488, 7
      %v3490 = vsub.s32 0, %v3489
      %v3491 = vrot.slane %v3231, %v3490
      %v3492 = vlaneseq
      %v3493 = vshrl.u32 %v3492, 7
      %v3494 = vsub.s32 0, %v3493
      %v3495 = vrot.slane %v3239, %v3494
      %v3496 = vlaneseq
      %v3497 = vshrl.u32 %v3496, 7
      %v3498 = vsub.s32 0, %v3497
      %v3499 = vrot.slane %v3241, %v3498
      %v3500 = vlaneseq
      %v3501 = vshrl.u32 %v3500, 7
      %v3502 = vsub.s32 0, %v3501
      %v3503 = vrot.slane %v3224, %v3502
      %v3504 = vlaneseq
      %v3505 = vshrl.u32 %v3504, 7
      %v3506 = vsub.s32 0, %v3505
      %v3507 = vrot.slane %v3238, %v3506
      %v3508 = vlaneseq
      %v3509 = vshrl.u32 %v3508, 7
      %v3510 = vsub.s32 0, %v3509
      %v3511 = vrot.slane %v3240, %v3510
      %v3512 = vlaneseq
      %v3513 = vshrl.u32 %v3512, 7
      %v3514 = vsub.s32 0, %v3513
      %v3515 = vrot.slane %v3242, %v3514
      %v3516 = vlaneseq
      %v3517 = vshrl.u32 %v3516, 7
      %v3518 = vsub.s32 0, %v3517
      %v3519 = vrot.slane %v3266, %v3518
      %v3520 = vlaneseq
      %v3521 = vshrl.u32 %v3520, 7
      %v3522 = vsub.s32 0, %v3521
      %v3523 = vrot.slane %v3280, %v3522
      %v3524 = vlaneseq
      %v3525 = vshrl.u32 %v3524, 7
      %v3526 = vsub.s32 0, %v3525
      %v3527 = vrot.slane %v3288, %v3526
      %v3528 = vlaneseq
      %v3529 = vshrl.u32 %v3528, 7
      %v3530 = vsub.s32 0, %v3529
      %v3531 = vrot.slane %v3290, %v3530
      %v3532 = vlaneseq
      %v3533 = vshrl.u32 %v3532, 7
      %v3534 = vsub.s32 0, %v3533
      %v3535 = vrot.slane %v3273, %v3534
      %v3536 = vlaneseq
      %v3537 = vshrl.u32 %v3536, 7
      %v3538 = vsub.s32 0, %v3537
      %v3539 = vrot.slane %v3287, %v3538
      %v3540 = vlaneseq
      %v3541 = vshrl.u32 %v3540, 7
      %v3542 = vsub.s32 0, %v3541
      %v3543 = vrot.slane %v3289, %v3542
      %v3544 = vlaneseq
      %v3545 = vshrl.u32 %v3544, 7
      %v3546 = vsub.s32 0, %v3545
      %v3547 = vrot.slane %v3291, %v3546
      %v3612 = vsel %vm2363, %v2459, %v3295
      %v3613 = vsel %vm2363, %v2473, %v3299
      %v3614 = vsel %vm2363, %v2481, %v3303
      %v3615 = vsel %vm2363, %v2483, %v3307
      %v3616 = vsel %vm2363, %v2466, %v3311
      %v3617 = vsel %vm2363, %v2480, %v3315
      %v3618 = vsel %vm2363, %v2482, %v3319
      %v3619 = vsel %vm2363, %v2484, %v3323
      %v3620 = vsel %vm2363, %v2508, %v3327
      %v3621 = vsel %vm2363, %v2522, %v3331
      %v3622 = vsel %vm2363, %v2530, %v3335
      %v3623 = vsel %vm2363, %v2532, %v3339
      %v3624 = vsel %vm2363, %v2515, %v3343
      %v3625 = vsel %vm2363, %v2529, %v3347
      %v3626 = vsel %vm2363, %v2531, %v3351
      %v3627 = vsel %vm2363, %v2533, %v3355
      %v3628 = vsel %vm2363, %v2557, %v3359
      %v3629 = vsel %vm2363, %v2571, %v3363
      %v3630 = vsel %vm2363, %v2579, %v3367
      %v3631 = vsel %vm2363, %v2581, %v3371
      %v3632 = vsel %vm2363, %v2564, %v3375
      %v3633 = vsel %vm2363, %v2578, %v3379
      %v3634 = vsel %vm2363, %v2580, %v3383
      %v3635 = vsel %vm2363, %v2582, %v3387
      %v3636 = vsel %vm2363, %v2606, %v3391
      %v3637 = vsel %vm2363, %v2620, %v3395
      %v3638 = vsel %vm2363, %v2628, %v3399
      %v3639 = vsel %vm2363, %v2630, %v3403
      %v3640 = vsel %vm2363, %v2613, %v3407
      %v3641 = vsel %vm2363, %v2627, %v3411
      %v3642 = vsel %vm2363, %v2629, %v3415
      %v3643 = vsel %vm2363, %v2631, %v3419
      %v3644 = vsel %vm2363, %v2655, %v3423
      %v3645 = vsel %vm2363, %v2669, %v3427
      %v3646 = vsel %vm2363, %v2677, %v3431
      %v3647 = vsel %vm2363, %v2679, %v3435
      %v3648 = vsel %vm2363, %v2662, %v3439
      %v3649 = vsel %vm2363, %v2676, %v3443
      %v3650 = vsel %vm2363, %v2678, %v3447
      %v3651 = vsel %vm2363, %v2680, %v3451
      %v3652 = vsel %vm2363, %v2704, %v3455
      %v3653 = vsel %vm2363, %v2718, %v3459
      %v3654 = vsel %vm2363, %v2726, %v3463
      %v3655 = vsel %vm2363, %v2728, %v3467
      %v3656 = vsel %vm2363, %v2711, %v3471
      %v3657 = vsel %vm2363, %v2725, %v3475
      %v3658 = vsel %vm2363, %v2727, %v3479
      %v3659 = vsel %vm2363, %v2729, %v3483
      %v3660 = vsel %vm2363, %v2753, %v3487
      %v3661 = vsel %vm2363, %v2767, %v3491
      %v3662 = vsel %vm2363, %v2775, %v3495
      %v3663 = vsel %vm2363, %v2777, %v3499
      %v3664 = vsel %vm2363, %v2760, %v3503
      %v3665 = vsel %vm2363, %v2774, %v3507
      %v3666 = vsel %vm2363, %v2776, %v3511
      %v3667 = vsel %vm2363, %v2778, %v3515
      %v3668 = vsel %vm2363, %v2802, %v3519
      %v3669 = vsel %vm2363, %v2816, %v3523
      %v3670 = vsel %vm2363, %v2824, %v3527
      %v3671 = vsel %vm2363, %v2826, %v3531
      %v3672 = vsel %vm2363, %v2809, %v3535
      %v3673 = vsel %vm2363, %v2823, %v3539
      %v3674 = vsel %vm2363, %v2825, %v3543
      %v3675 = vsel %vm2363, %v2827, %v3547
      %vm3676 = vcmask 130048
      %3677 = vst.msk [vmem:[#allocation3] sm:$0xff] %vm3676, 0.0
      %3678 = vst.msk [vmem:[#allocation3 + $0x8] sm:$0xff] %vm3676, 0.0
      %vm3679 = vcmask 122880
      %3680 = vst.msk [vmem:[#allocation3 + $0x10] sm:$0x1] %vm3679, 0.0
      %3681 = vst.msk [vmem:[#allocation3 + $0x18] sm:$0xff] %vm3676, 0.0
      %3682 = vst.msk [vmem:[#allocation3 + $0x20] sm:$0xff] %vm3676, 0.0
      %3683 = vst.msk [vmem:[#allocation3 + $0x28] sm:$0x1] %vm3679, 0.0
      %3684 = vst.msk [vmem:[#allocation3 + $0x30] sm:$0xff] %vm3676, 0.0
      %3685 = vst.msk [vmem:[#allocation3 + $0x38] sm:$0xff] %vm3676, 0.0
      %3686 = vst.msk [vmem:[#allocation3 + $0x40] sm:$0x1] %vm3679, 0.0
      %3687 = vst.msk [vmem:[#allocation3 + $0x48] sm:$0xff] %vm3676, 0.0
      %3688 = vst.msk [vmem:[#allocation3 + $0x50] sm:$0xff] %vm3676, 0.0
      %3689 = vst.msk [vmem:[#allocation3 + $0x58] sm:$0x1] %vm3679, 0.0
      %3690 = vst.msk [vmem:[#allocation3 + $0x60] sm:$0xff] %vm3676, 0.0
      %3691 = vst.msk [vmem:[#allocation3 + $0x68] sm:$0xff] %vm3676, 0.0
      %3692 = vst.msk [vmem:[#allocation3 + $0x70] sm:$0x1] %vm3679, 0.0
      %3693 = vst.msk [vmem:[#allocation3 + $0x78] sm:$0xff] %vm3676, 0.0
      %3694 = vst.msk [vmem:[#allocation3 + $0x80] sm:$0xff] %vm3676, 0.0
      %3695 = vst.msk [vmem:[#allocation3 + $0x88] sm:$0x1] %vm3679, 0.0
      %3696 = vst.msk [vmem:[#allocation3 + $0x90] sm:$0xff] %vm3676, 0.0
      %3697 = vst.msk [vmem:[#allocation3 + $0x98] sm:$0xff] %vm3676, 0.0
      %3698 = vst.msk [vmem:[#allocation3 + $0xa0] sm:$0x1] %vm3679, 0.0
      %3699 = vst.msk [vmem:[#allocation3 + $0xa8] sm:$0xff] %vm3676, 0.0
      %3700 = vst.msk [vmem:[#allocation3 + $0xb0] sm:$0xff] %vm3676, 0.0
      %3701 = vst.msk [vmem:[#allocation3 + $0xb8] sm:$0x1] %vm3679, 0.0
      %3702 = vst.msk [vmem:[#allocation3 + $0xc0] sm:$0xff] %vm3676, 0.0
      %3703 = vst.msk [vmem:[#allocation3 + $0xc8] sm:$0xff] %vm3676, 0.0
      %3704 = vst.msk [vmem:[#allocation3 + $0xd0] sm:$0x1] %vm3679, 0.0
      %3705 = vst.msk [vmem:[#allocation3 + $0xd8] sm:$0xff] %vm3676, 0.0
      %3706 = vst.msk [vmem:[#allocation3 + $0xe0] sm:$0xff] %vm3676, 0.0
      %3707 = vst.msk [vmem:[#allocation3 + $0xe8] sm:$0x1] %vm3679, 0.0
      %3708 = vst.msk [vmem:[#allocation3 + $0xf0] sm:$0xff] %vm3676, 0.0
      %3709 = vst.msk [vmem:[#allocation3 + $0xf8] sm:$0xff] %vm3676, 0.0
      %3710 = vst.msk [vmem:[#allocation3 + $0x100] sm:$0x1] %vm3679, 0.0
      %3711 = vst.msk [vmem:[#allocation3 + $0x108] sm:$0xff] %vm3676, 0.0
      %3712 = vst.msk [vmem:[#allocation3 + $0x110] sm:$0xff] %vm3676, 0.0
      %3713 = vst.msk [vmem:[#allocation3 + $0x118] sm:$0x1] %vm3679, 0.0
      %3714 = vst.msk [vmem:[#allocation3 + $0x120] sm:$0xff] %vm3676, 0.0
      %3715 = vst.msk [vmem:[#allocation3 + $0x128] sm:$0xff] %vm3676, 0.0
      %3716 = vst.msk [vmem:[#allocation3 + $0x130] sm:$0x1] %vm3679, 0.0
      %3717 = vst.msk [vmem:[#allocation3 + $0x138] sm:$0xff] %vm3676, 0.0
      %3718 = vst.msk [vmem:[#allocation3 + $0x140] sm:$0xff] %vm3676, 0.0
      %3719 = vst.msk [vmem:[#allocation3 + $0x148] sm:$0x1] %vm3679, 0.0
      %3720 = vst.msk [vmem:[#allocation3 + $0x150] sm:$0xff] %vm3676, 0.0
      %3721 = vst.msk [vmem:[#allocation3 + $0x158] sm:$0xff] %vm3676, 0.0
      %3722 = vst.msk [vmem:[#allocation3 + $0x160] sm:$0x1] %vm3679, 0.0
      %3723 = vst.msk [vmem:[#allocation3 + $0x168] sm:$0xff] %vm3676, 0.0
      %3724 = vst.msk [vmem:[#allocation3 + $0x170] sm:$0xff] %vm3676, 0.0
      %3725 = vst.msk [vmem:[#allocation3 + $0x178] sm:$0x1] %vm3679, 0.0
      %3726 = vst.msk [vmem:[#allocation3 + $0x180] sm:$0xff] %vm3676, 0.0
      %3727 = vst.msk [vmem:[#allocation3 + $0x188] sm:$0xff] %vm3676, 0.0
      %3728 = vst.msk [vmem:[#allocation3 + $0x190] sm:$0x1] %vm3679, 0.0
      %v3857 = vcombine.low %v2364, %v2365
      %v3858 = vcombine.low %v2366, %v2367
      %v3860 = vunpack.c.l.s4 1983009808
      %v3861 = vunpack.c.0.s8 %v3860
      %v3862 = vlaneseq
      %v3863 = vshrl.u32 %v3862, 7
      %v3864 = vsub.s32 %v3861, %v3863
      %v3865 = vrot.slane %v3857, %v3864
      %v3867 = vunpack.c.l.s4 1983009808
      %v3868 = vunpack.c.0.s8 %v3867
      %v3869 = vlaneseq
      %v3870 = vshrl.u32 %v3869, 7
      %v3871 = vsub.s32 %v3868, %v3870
      %v3872 = vrot.slane %v3858, %v3871
      %v3873 = vcombine.low %v3865, %v3872
      %v3874 = vcombine.low %v2368, %v2369
      %v3875 = vcombine.low %v2370, %v2371
      %v3877 = vunpack.c.l.s4 1983009808
      %v3878 = vunpack.c.0.s8 %v3877
      %v3879 = vlaneseq
      %v3880 = vshrl.u32 %v3879, 7
      %v3881 = vsub.s32 %v3878, %v3880
      %v3882 = vrot.slane %v3874, %v3881
      %v3884 = vunpack.c.l.s4 1983009808
      %v3885 = vunpack.c.0.s8 %v3884
      %v3886 = vlaneseq
      %v3887 = vshrl.u32 %v3886, 7
      %v3888 = vsub.s32 %v3885, %v3887
      %v3889 = vrot.slane %v3875, %v3888
      %v3890 = vcombine.low %v3882, %v3889
      %v3891 = vcombine.low %v3612, %v3613
      %v3892 = vcombine.low %v3614, %v3615
      %v3894 = vunpack.c.l.s4 1983009808
      %v3895 = vunpack.c.0.s8 %v3894
      %v3896 = vlaneseq
      %v3897 = vshrl.u32 %v3896, 7
      %v3898 = vsub.s32 %v3895, %v3897
      %v3899 = vrot.slane %v3891, %v3898
      %v3901 = vunpack.c.l.s4 1983009808
      %v3902 = vunpack.c.0.s8 %v3901
      %v3903 = vlaneseq
      %v3904 = vshrl.u32 %v3903, 7
      %v3905 = vsub.s32 %v3902, %v3904
      %v3906 = vrot.slane %v3892, %v3905
      %v3907 = vcombine.low %v3899, %v3906
      %v3908 = vcombine.low %v3616, %v3617
      %v3909 = vcombine.low %v3618, %v3619
      %v3911 = vunpack.c.l.s4 1983009808
      %v3912 = vunpack.c.0.s8 %v3911
      %v3913 = vlaneseq
      %v3914 = vshrl.u32 %v3913, 7
      %v3915 = vsub.s32 %v3912, %v3914
      %v3916 = vrot.slane %v3908, %v3915
      %v3918 = vunpack.c.l.s4 1983009808
      %v3919 = vunpack.c.0.s8 %v3918
      %v3920 = vlaneseq
      %v3921 = vshrl.u32 %v3920, 7
      %v3922 = vsub.s32 %v3919, %v3921
      %v3923 = vrot.slane %v3909, %v3922
      %v3924 = vcombine.low %v3916, %v3923
      %v3925 = vcombine.low %v2372, %v2373
      %v3926 = vcombine.low %v2374, %v2375
      %v3928 = vunpack.c.l.s4 1983009808
      %v3929 = vunpack.c.0.s8 %v3928
      %v3930 = vlaneseq
      %v3931 = vshrl.u32 %v3930, 7
      %v3932 = vsub.s32 %v3929, %v3931
      %v3933 = vrot.slane %v3925, %v3932
      %v3935 = vunpack.c.l.s4 1983009808
      %v3936 = vunpack.c.0.s8 %v3935
      %v3937 = vlaneseq
      %v3938 = vshrl.u32 %v3937, 7
      %v3939 = vsub.s32 %v3936, %v3938
      %v3940 = vrot.slane %v3926, %v3939
      %v3941 = vcombine.low %v3933, %v3940
      %v3942 = vcombine.low %v2376, %v2377
      %v3943 = vcombine.low %v2378, %v2379
      %v3945 = vunpack.c.l.s4 1983009808
      %v3946 = vunpack.c.0.s8 %v3945
      %v3947 = vlaneseq
      %v3948 = vshrl.u32 %v3947, 7
      %v3949 = vsub.s32 %v3946, %v3948
      %v3950 = vrot.slane %v3942, %v3949
      %v3952 = vunpack.c.l.s4 1983009808
      %v3953 = vunpack.c.0.s8 %v3952
      %v3954 = vlaneseq
      %v3955 = vshrl.u32 %v3954, 7
      %v3956 = vsub.s32 %v3953, %v3955
      %v3957 = vrot.slane %v3943, %v3956
      %v3958 = vcombine.low %v3950, %v3957
      %v3959 = vcombine.low %v3620, %v3621
      %v3960 = vcombine.low %v3622, %v3623
      %v3962 = vunpack.c.l.s4 1983009808
      %v3963 = vunpack.c.0.s8 %v3962
      %v3964 = vlaneseq
      %v3965 = vshrl.u32 %v3964, 7
      %v3966 = vsub.s32 %v3963, %v3965
      %v3967 = vrot.slane %v3959, %v3966
      %v3969 = vunpack.c.l.s4 1983009808
      %v3970 = vunpack.c.0.s8 %v3969
      %v3971 = vlaneseq
      %v3972 = vshrl.u32 %v3971, 7
      %v3973 = vsub.s32 %v3970, %v3972
      %v3974 = vrot.slane %v3960, %v3973
      %v3975 = vcombine.low %v3967, %v3974
      %v3976 = vcombine.low %v3624, %v3625
      %v3977 = vcombine.low %v3626, %v3627
      %v3979 = vunpack.c.l.s4 1983009808
      %v3980 = vunpack.c.0.s8 %v3979
      %v3981 = vlaneseq
      %v3982 = vshrl.u32 %v3981, 7
      %v3983 = vsub.s32 %v3980, %v3982
      %v3984 = vrot.slane %v3976, %v3983
      %v3986 = vunpack.c.l.s4 1983009808
      %v3987 = vunpack.c.0.s8 %v3986
      %v3988 = vlaneseq
      %v3989 = vshrl.u32 %v3988, 7
      %v3990 = vsub.s32 %v3987, %v3989
      %v3991 = vrot.slane %v3977, %v3990
      %v3992 = vcombine.low %v3984, %v3991
      %v3993 = vcombine.low %v2380, %v2381
      %v3994 = vcombine.low %v2382, %v2383
      %v3996 = vunpack.c.l.s4 1983009808
      %v3997 = vunpack.c.0.s8 %v3996
      %v3998 = vlaneseq
      %v3999 = vshrl.u32 %v3998, 7
      %v4000 = vsub.s32 %v3997, %v3999
      %v4001 = vrot.slane %v3993, %v4000
      %v4003 = vunpack.c.l.s4 1983009808
      %v4004 = vunpack.c.0.s8 %v4003
      %v4005 = vlaneseq
      %v4006 = vshrl.u32 %v4005, 7
      %v4007 = vsub.s32 %v4004, %v4006
      %v4008 = vrot.slane %v3994, %v4007
      %v4009 = vcombine.low %v4001, %v4008
      %v4010 = vcombine.low %v2384, %v2385
      %v4011 = vcombine.low %v2386, %v2387
      %v4013 = vunpack.c.l.s4 1983009808
      %v4014 = vunpack.c.0.s8 %v4013
      %v4015 = vlaneseq
      %v4016 = vshrl.u32 %v4015, 7
      %v4017 = vsub.s32 %v4014, %v4016
      %v4018 = vrot.slane %v4010, %v4017
      %v4020 = vunpack.c.l.s4 1983009808
      %v4021 = vunpack.c.0.s8 %v4020
      %v4022 = vlaneseq
      %v4023 = vshrl.u32 %v4022, 7
      %v4024 = vsub.s32 %v4021, %v4023
      %v4025 = vrot.slane %v4011, %v4024
      %v4026 = vcombine.low %v4018, %v4025
      %v4027 = vcombine.low %v3628, %v3629
      %v4028 = vcombine.low %v3630, %v3631
      %v4030 = vunpack.c.l.s4 1983009808
      %v4031 = vunpack.c.0.s8 %v4030
      %v4032 = vlaneseq
      %v4033 = vshrl.u32 %v4032, 7
      %v4034 = vsub.s32 %v4031, %v4033
      %v4035 = vrot.slane %v4027, %v4034
      %v4037 = vunpack.c.l.s4 1983009808
      %v4038 = vunpack.c.0.s8 %v4037
      %v4039 = vlaneseq
      %v4040 = vshrl.u32 %v4039, 7
      %v4041 = vsub.s32 %v4038, %v4040
      %v4042 = vrot.slane %v4028, %v4041
      %v4043 = vcombine.low %v4035, %v4042
      %v4044 = vcombine.low %v3632, %v3633
      %v4045 = vcombine.low %v3634, %v3635
      %v4047 = vunpack.c.l.s4 1983009808
      %v4048 = vunpack.c.0.s8 %v4047
      %v4049 = vlaneseq
      %v4050 = vshrl.u32 %v4049, 7
      %v4051 = vsub.s32 %v4048, %v4050
      %v4052 = vrot.slane %v4044, %v4051
      %v4054 = vunpack.c.l.s4 1983009808
      %v4055 = vunpack.c.0.s8 %v4054
      %v4056 = vlaneseq
      %v4057 = vshrl.u32 %v4056, 7
      %v4058 = vsub.s32 %v4055, %v4057
      %v4059 = vrot.slane %v4045, %v4058
      %v4060 = vcombine.low %v4052, %v4059
      %v4061 = vcombine.low %v2388, %v2389
      %v4062 = vcombine.low %v2390, %v2391
      %v4064 = vunpack.c.l.s4 1983009808
      %v4065 = vunpack.c.0.s8 %v4064
      %v4066 = vlaneseq
      %v4067 = vshrl.u32 %v4066, 7
      %v4068 = vsub.s32 %v4065, %v4067
      %v4069 = vrot.slane %v4061, %v4068
      %v4071 = vunpack.c.l.s4 1983009808
      %v4072 = vunpack.c.0.s8 %v4071
      %v4073 = vlaneseq
      %v4074 = vshrl.u32 %v4073, 7
      %v4075 = vsub.s32 %v4072, %v4074
      %v4076 = vrot.slane %v4062, %v4075
      %v4077 = vcombine.low %v4069, %v4076
      %v4078 = vcombine.low %v2392, %v2393
      %v4079 = vcombine.low %v2394, %v2395
      %v4081 = vunpack.c.l.s4 1983009808
      %v4082 = vunpack.c.0.s8 %v4081
      %v4083 = vlaneseq
      %v4084 = vshrl.u32 %v4083, 7
      %v4085 = vsub.s32 %v4082, %v4084
      %v4086 = vrot.slane %v4078, %v4085
      %v4088 = vunpack.c.l.s4 1983009808
      %v4089 = vunpack.c.0.s8 %v4088
      %v4090 = vlaneseq
      %v4091 = vshrl.u32 %v4090, 7
      %v4092 = vsub.s32 %v4089, %v4091
      %v4093 = vrot.slane %v4079, %v4092
      %v4094 = vcombine.low %v4086, %v4093
      %v4095 = vcombine.low %v3636, %v3637
      %v4096 = vcombine.low %v3638, %v3639
      %v4098 = vunpack.c.l.s4 1983009808
      %v4099 = vunpack.c.0.s8 %v4098
      %v4100 = vlaneseq
      %v4101 = vshrl.u32 %v4100, 7
      %v4102 = vsub.s32 %v4099, %v4101
      %v4103 = vrot.slane %v4095, %v4102
      %v4105 = vunpack.c.l.s4 1983009808
      %v4106 = vunpack.c.0.s8 %v4105
      %v4107 = vlaneseq
      %v4108 = vshrl.u32 %v4107, 7
      %v4109 = vsub.s32 %v4106, %v4108
      %v4110 = vrot.slane %v4096, %v4109
      %v4111 = vcombine.low %v4103, %v4110
      %v4112 = vcombine.low %v3640, %v3641
      %v4113 = vcombine.low %v3642, %v3643
      %v4115 = vunpack.c.l.s4 1983009808
      %v4116 = vunpack.c.0.s8 %v4115
      %v4117 = vlaneseq
      %v4118 = vshrl.u32 %v4117, 7
      %v4119 = vsub.s32 %v4116, %v4118
      %v4120 = vrot.slane %v4112, %v4119
      %v4122 = vunpack.c.l.s4 1983009808
      %v4123 = vunpack.c.0.s8 %v4122
      %v4124 = vlaneseq
      %v4125 = vshrl.u32 %v4124, 7
      %v4126 = vsub.s32 %v4123, %v4125
      %v4127 = vrot.slane %v4113, %v4126
      %v4128 = vcombine.low %v4120, %v4127
      %v4129 = vcombine.low %v2396, %v2397
      %v4130 = vcombine.low %v2398, %v2399
      %v4132 = vunpack.c.l.s4 1983009808
      %v4133 = vunpack.c.0.s8 %v4132
      %v4134 = vlaneseq
      %v4135 = vshrl.u32 %v4134, 7
      %v4136 = vsub.s32 %v4133, %v4135
      %v4137 = vrot.slane %v4129, %v4136
      %v4139 = vunpack.c.l.s4 1983009808
      %v4140 = vunpack.c.0.s8 %v4139
      %v4141 = vlaneseq
      %v4142 = vshrl.u32 %v4141, 7
      %v4143 = vsub.s32 %v4140, %v4142
      %v4144 = vrot.slane %v4130, %v4143
      %v4145 = vcombine.low %v4137, %v4144
      %v4146 = vcombine.low %v2400, %v2401
      %v4147 = vcombine.low %v2402, %v2403
      %v4149 = vunpack.c.l.s4 1983009808
      %v4150 = vunpack.c.0.s8 %v4149
      %v4151 = vlaneseq
      %v4152 = vshrl.u32 %v4151, 7
      %v4153 = vsub.s32 %v4150, %v4152
      %v4154 = vrot.slane %v4146, %v4153
      %v4156 = vunpack.c.l.s4 1983009808
      %v4157 = vunpack.c.0.s8 %v4156
      %v4158 = vlaneseq
      %v4159 = vshrl.u32 %v4158, 7
      %v4160 = vsub.s32 %v4157, %v4159
      %v4161 = vrot.slane %v4147, %v4160
      %v4162 = vcombine.low %v4154, %v4161
      %v4163 = vcombine.low %v3644, %v3645
      %v4164 = vcombine.low %v3646, %v3647
      %v4166 = vunpack.c.l.s4 1983009808
      %v4167 = vunpack.c.0.s8 %v4166
      %v4168 = vlaneseq
      %v4169 = vshrl.u32 %v4168, 7
      %v4170 = vsub.s32 %v4167, %v4169
      %v4171 = vrot.slane %v4163, %v4170
      %v4173 = vunpack.c.l.s4 1983009808
      %v4174 = vunpack.c.0.s8 %v4173
      %v4175 = vlaneseq
      %v4176 = vshrl.u32 %v4175, 7
      %v4177 = vsub.s32 %v4174, %v4176
      %v4178 = vrot.slane %v4164, %v4177
      %v4179 = vcombine.low %v4171, %v4178
      %v4180 = vcombine.low %v3648, %v3649
      %v4181 = vcombine.low %v3650, %v3651
      %v4183 = vunpack.c.l.s4 1983009808
      %v4184 = vunpack.c.0.s8 %v4183
      %v4185 = vlaneseq
      %v4186 = vshrl.u32 %v4185, 7
      %v4187 = vsub.s32 %v4184, %v4186
      %v4188 = vrot.slane %v4180, %v4187
      %v4190 = vunpack.c.l.s4 1983009808
      %v4191 = vunpack.c.0.s8 %v4190
      %v4192 = vlaneseq
      %v4193 = vshrl.u32 %v4192, 7
      %v4194 = vsub.s32 %v4191, %v4193
      %v4195 = vrot.slane %v4181, %v4194
      %v4196 = vcombine.low %v4188, %v4195
      %v4197 = vcombine.low %v2404, %v2405
      %v4198 = vcombine.low %v2406, %v2407
      %v4200 = vunpack.c.l.s4 1983009808
      %v4201 = vunpack.c.0.s8 %v4200
      %v4202 = vlaneseq
      %v4203 = vshrl.u32 %v4202, 7
      %v4204 = vsub.s32 %v4201, %v4203
      %v4205 = vrot.slane %v4197, %v4204
      %v4207 = vunpack.c.l.s4 1983009808
      %v4208 = vunpack.c.0.s8 %v4207
      %v4209 = vlaneseq
      %v4210 = vshrl.u32 %v4209, 7
      %v4211 = vsub.s32 %v4208, %v4210
      %v4212 = vrot.slane %v4198, %v4211
      %v4213 = vcombine.low %v4205, %v4212
      %v4214 = vcombine.low %v2408, %v2409
      %v4215 = vcombine.low %v2410, %v2411
      %v4217 = vunpack.c.l.s4 1983009808
      %v4218 = vunpack.c.0.s8 %v4217
      %v4219 = vlaneseq
      %v4220 = vshrl.u32 %v4219, 7
      %v4221 = vsub.s32 %v4218, %v4220
      %v4222 = vrot.slane %v4214, %v4221
      %v4224 = vunpack.c.l.s4 1983009808
      %v4225 = vunpack.c.0.s8 %v4224
      %v4226 = vlaneseq
      %v4227 = vshrl.u32 %v4226, 7
      %v4228 = vsub.s32 %v4225, %v4227
      %v4229 = vrot.slane %v4215, %v4228
      %v4230 = vcombine.low %v4222, %v4229
      %v4231 = vcombine.low %v3652, %v3653
      %v4232 = vcombine.low %v3654, %v3655
      %v4234 = vunpack.c.l.s4 1983009808
      %v4235 = vunpack.c.0.s8 %v4234
      %v4236 = vlaneseq
      %v4237 = vshrl.u32 %v4236, 7
      %v4238 = vsub.s32 %v4235, %v4237
      %v4239 = vrot.slane %v4231, %v4238
      %v4241 = vunpack.c.l.s4 1983009808
      %v4242 = vunpack.c.0.s8 %v4241
      %v4243 = vlaneseq
      %v4244 = vshrl.u32 %v4243, 7
      %v4245 = vsub.s32 %v4242, %v4244
      %v4246 = vrot.slane %v4232, %v4245
      %v4247 = vcombine.low %v4239, %v4246
      %v4248 = vcombine.low %v3656, %v3657
      %v4249 = vcombine.low %v3658, %v3659
      %v4251 = vunpack.c.l.s4 1983009808
      %v4252 = vunpack.c.0.s8 %v4251
      %v4253 = vlaneseq
      %v4254 = vshrl.u32 %v4253, 7
      %v4255 = vsub.s32 %v4252, %v4254
      %v4256 = vrot.slane %v4248, %v4255
      %v4258 = vunpack.c.l.s4 1983009808
      %v4259 = vunpack.c.0.s8 %v4258
      %v4260 = vlaneseq
      %v4261 = vshrl.u32 %v4260, 7
      %v4262 = vsub.s32 %v4259, %v4261
      %v4263 = vrot.slane %v4249, %v4262
      %v4264 = vcombine.low %v4256, %v4263
      %v4265 = vcombine.low %v2412, %v2413
      %v4266 = vcombine.low %v2414, %v2415
      %v4268 = vunpack.c.l.s4 1983009808
      %v4269 = vunpack.c.0.s8 %v4268
      %v4270 = vlaneseq
      %v4271 = vshrl.u32 %v4270, 7
      %v4272 = vsub.s32 %v4269, %v4271
      %v4273 = vrot.slane %v4265, %v4272
      %v4275 = vunpack.c.l.s4 1983009808
      %v4276 = vunpack.c.0.s8 %v4275
      %v4277 = vlaneseq
      %v4278 = vshrl.u32 %v4277, 7
      %v4279 = vsub.s32 %v4276, %v4278
      %v4280 = vrot.slane %v4266, %v4279
      %v4281 = vcombine.low %v4273, %v4280
      %v4282 = vcombine.low %v2416, %v2417
      %v4283 = vcombine.low %v2418, %v2419
      %v4285 = vunpack.c.l.s4 1983009808
      %v4286 = vunpack.c.0.s8 %v4285
      %v4287 = vlaneseq
      %v4288 = vshrl.u32 %v4287, 7
      %v4289 = vsub.s32 %v4286, %v4288
      %v4290 = vrot.slane %v4282, %v4289
      %v4292 = vunpack.c.l.s4 1983009808
      %v4293 = vunpack.c.0.s8 %v4292
      %v4294 = vlaneseq
      %v4295 = vshrl.u32 %v4294, 7
      %v4296 = vsub.s32 %v4293, %v4295
      %v4297 = vrot.slane %v4283, %v4296
      %v4298 = vcombine.low %v4290, %v4297
      %v4299 = vcombine.low %v3660, %v3661
      %v4300 = vcombine.low %v3662, %v3663
      %v4302 = vunpack.c.l.s4 1983009808
      %v4303 = vunpack.c.0.s8 %v4302
      %v4304 = vlaneseq
      %v4305 = vshrl.u32 %v4304, 7
      %v4306 = vsub.s32 %v4303, %v4305
      %v4307 = vrot.slane %v4299, %v4306
      %v4309 = vunpack.c.l.s4 1983009808
      %v4310 = vunpack.c.0.s8 %v4309
      %v4311 = vlaneseq
      %v4312 = vshrl.u32 %v4311, 7
      %v4313 = vsub.s32 %v4310, %v4312
      %v4314 = vrot.slane %v4300, %v4313
      %v4315 = vcombine.low %v4307, %v4314
      %v4316 = vcombine.low %v3664, %v3665
      %v4317 = vcombine.low %v3666, %v3667
      %v4319 = vunpack.c.l.s4 1983009808
      %v4320 = vunpack.c.0.s8 %v4319
      %v4321 = vlaneseq
      %v4322 = vshrl.u32 %v4321, 7
      %v4323 = vsub.s32 %v4320, %v4322
      %v4324 = vrot.slane %v4316, %v4323
      %v4326 = vunpack.c.l.s4 1983009808
      %v4327 = vunpack.c.0.s8 %v4326
      %v4328 = vlaneseq
      %v4329 = vshrl.u32 %v4328, 7
      %v4330 = vsub.s32 %v4327, %v4329
      %v4331 = vrot.slane %v4317, %v4330
      %v4332 = vcombine.low %v4324, %v4331
      %v4333 = vcombine.low %v2420, %v2421
      %v4334 = vcombine.low %v2422, %v2423
      %v4336 = vunpack.c.l.s4 1983009808
      %v4337 = vunpack.c.0.s8 %v4336
      %v4338 = vlaneseq
      %v4339 = vshrl.u32 %v4338, 7
      %v4340 = vsub.s32 %v4337, %v4339
      %v4341 = vrot.slane %v4333, %v4340
      %v4343 = vunpack.c.l.s4 1983009808
      %v4344 = vunpack.c.0.s8 %v4343
      %v4345 = vlaneseq
      %v4346 = vshrl.u32 %v4345, 7
      %v4347 = vsub.s32 %v4344, %v4346
      %v4348 = vrot.slane %v4334, %v4347
      %v4349 = vcombine.low %v4341, %v4348
      %v4350 = vcombine.low %v2424, %v2425
      %v4351 = vcombine.low %v2426, %v2427
      %v4353 = vunpack.c.l.s4 1983009808
      %v4354 = vunpack.c.0.s8 %v4353
      %v4355 = vlaneseq
      %v4356 = vshrl.u32 %v4355, 7
      %v4357 = vsub.s32 %v4354, %v4356
      %v4358 = vrot.slane %v4350, %v4357
      %v4360 = vunpack.c.l.s4 1983009808
      %v4361 = vunpack.c.0.s8 %v4360
      %v4362 = vlaneseq
      %v4363 = vshrl.u32 %v4362, 7
      %v4364 = vsub.s32 %v4361, %v4363
      %v4365 = vrot.slane %v4351, %v4364
      %v4366 = vcombine.low %v4358, %v4365
      %v4367 = vcombine.low %v3668, %v3669
      %v4368 = vcombine.low %v3670, %v3671
      %v4370 = vunpack.c.l.s4 1983009808
      %v4371 = vunpack.c.0.s8 %v4370
      %v4372 = vlaneseq
      %v4373 = vshrl.u32 %v4372, 7
      %v4374 = vsub.s32 %v4371, %v4373
      %v4375 = vrot.slane %v4367, %v4374
      %v4377 = vunpack.c.l.s4 1983009808
      %v4378 = vunpack.c.0.s8 %v4377
      %v4379 = vlaneseq
      %v4380 = vshrl.u32 %v4379, 7
      %v4381 = vsub.s32 %v4378, %v4380
      %v4382 = vrot.slane %v4368, %v4381
      %v4383 = vcombine.low %v4375, %v4382
      %v4384 = vcombine.low %v3672, %v3673
      %v4385 = vcombine.low %v3674, %v3675
      %v4387 = vunpack.c.l.s4 1983009808
      %v4388 = vunpack.c.0.s8 %v4387
      %v4389 = vlaneseq
      %v4390 = vshrl.u32 %v4389, 7
      %v4391 = vsub.s32 %v4388, %v4390
      %v4392 = vrot.slane %v4384, %v4391
      %v4394 = vunpack.c.l.s4 1983009808
      %v4395 = vunpack.c.0.s8 %v4394
      %v4396 = vlaneseq
      %v4397 = vshrl.u32 %v4396, 7
      %v4398 = vsub.s32 %v4395, %v4397
      %v4399 = vrot.slane %v4385, %v4398
      %v4400 = vcombine.low %v4392, %v4399
      %4433 = vst.msk [vmem:[#allocation3] sm:$0xff] %vm3676, %v3873
      %4434 = vst.msk [vmem:[#allocation3 + $0x8] sm:$0xff] %vm3676, %v3890
      %4435 = vst.msk [vmem:[#allocation3 + $0x18] sm:$0xff] %vm3676, %v3907
      %4436 = vst.msk [vmem:[#allocation3 + $0x20] sm:$0xff] %vm3676, %v3924
      %4437 = vst.msk [vmem:[#allocation3 + $0x30] sm:$0xff] %vm3676, %v3941
      %4438 = vst.msk [vmem:[#allocation3 + $0x38] sm:$0xff] %vm3676, %v3958
      %4439 = vst.msk [vmem:[#allocation3 + $0x48] sm:$0xff] %vm3676, %v3975
      %4440 = vst.msk [vmem:[#allocation3 + $0x50] sm:$0xff] %vm3676, %v3992
      %4441 = vst.msk [vmem:[#allocation3 + $0x60] sm:$0xff] %vm3676, %v4009
      %4442 = vst.msk [vmem:[#allocation3 + $0x68] sm:$0xff] %vm3676, %v4026
      %4443 = vst.msk [vmem:[#allocation3 + $0x78] sm:$0xff] %vm3676, %v4043
      %4444 = vst.msk [vmem:[#allocation3 + $0x80] sm:$0xff] %vm3676, %v4060
      %4445 = vst.msk [vmem:[#allocation3 + $0x90] sm:$0xff] %vm3676, %v4077
      %4446 = vst.msk [vmem:[#allocation3 + $0x98] sm:$0xff] %vm3676, %v4094
      %4447 = vst.msk [vmem:[#allocation3 + $0xa8] sm:$0xff] %vm3676, %v4111
      %4448 = vst.msk [vmem:[#allocation3 + $0xb0] sm:$0xff] %vm3676, %v4128
      %4449 = vst.msk [vmem:[#allocation3 + $0xc0] sm:$0xff] %vm3676, %v4145
      %4450 = vst.msk [vmem:[#allocation3 + $0xc8] sm:$0xff] %vm3676, %v4162
      %4451 = vst.msk [vmem:[#allocation3 + $0xd8] sm:$0xff] %vm3676, %v4179
      %4452 = vst.msk [vmem:[#allocation3 + $0xe0] sm:$0xff] %vm3676, %v4196
      %4453 = vst.msk [vmem:[#allocation3 + $0xf0] sm:$0xff] %vm3676, %v4213
      %4454 = vst.msk [vmem:[#allocation3 + $0xf8] sm:$0xff] %vm3676, %v4230
      %4455 = vst.msk [vmem:[#allocation3 + $0x108] sm:$0xff] %vm3676, %v4247
      %4456 = vst.msk [vmem:[#allocation3 + $0x110] sm:$0xff] %vm3676, %v4264
      %4457 = vst.msk [vmem:[#allocation3 + $0x120] sm:$0xff] %vm3676, %v4281
      %4458 = vst.msk [vmem:[#allocation3 + $0x128] sm:$0xff] %vm3676, %v4298
      %4459 = vst.msk [vmem:[#allocation3 + $0x138] sm:$0xff] %vm3676, %v4315
      %4460 = vst.msk [vmem:[#allocation3 + $0x140] sm:$0xff] %vm3676, %v4332
      %4461 = vst.msk [vmem:[#allocation3 + $0x150] sm:$0xff] %vm3676, %v4349
      %4462 = vst.msk [vmem:[#allocation3 + $0x158] sm:$0xff] %vm3676, %v4366
      %4463 = vst.msk [vmem:[#allocation3 + $0x168] sm:$0xff] %vm3676, %v4383
      %4464 = vst.msk [vmem:[#allocation3 + $0x170] sm:$0xff] %vm3676, %v4400
      %v4465 = vld [vmem:[#allocation3] sm:$0xff]
      %v4466 = vld [vmem:[#allocation3 + $0x8] sm:$0xff]
      %v4467 = vld [vmem:[#allocation3 + $0x18] sm:$0xff]
      %v4468 = vld [vmem:[#allocation3 + $0x20] sm:$0xff]
      %v4469 = vld [vmem:[#allocation3 + $0x30] sm:$0xff]
      %v4470 = vld [vmem:[#allocation3 + $0x38] sm:$0xff]
      %v4471 = vld [vmem:[#allocation3 + $0x48] sm:$0xff]
      %v4472 = vld [vmem:[#allocation3 + $0x50] sm:$0xff]
      %v4473 = vld [vmem:[#allocation3 + $0x60] sm:$0xff]
      %v4474 = vld [vmem:[#allocation3 + $0x68] sm:$0xff]
      %v4475 = vld [vmem:[#allocation3 + $0x78] sm:$0xff]
      %v4476 = vld [vmem:[#allocation3 + $0x80] sm:$0xff]
      %v4477 = vld [vmem:[#allocation3 + $0x90] sm:$0xff]
      %v4478 = vld [vmem:[#allocation3 + $0x98] sm:$0xff]
      %v4479 = vld [vmem:[#allocation3 + $0xa8] sm:$0xff]
      %v4480 = vld [vmem:[#allocation3 + $0xb0] sm:$0xff]
      %v4481 = vld [vmem:[#allocation3 + $0xc0] sm:$0xff]
      %v4482 = vld [vmem:[#allocation3 + $0xc8] sm:$0xff]
      %v4483 = vld [vmem:[#allocation3 + $0xd8] sm:$0xff]
      %v4484 = vld [vmem:[#allocation3 + $0xe0] sm:$0xff]
      %v4485 = vld [vmem:[#allocation3 + $0xf0] sm:$0xff]
      %v4486 = vld [vmem:[#allocation3 + $0xf8] sm:$0xff]
      %v4487 = vld [vmem:[#allocation3 + $0x108] sm:$0xff]
      %v4488 = vld [vmem:[#allocation3 + $0x110] sm:$0xff]
      %v4489 = vld [vmem:[#allocation3 + $0x120] sm:$0xff]
      %v4490 = vld [vmem:[#allocation3 + $0x128] sm:$0xff]
      %v4491 = vld [vmem:[#allocation3 + $0x138] sm:$0xff]
      %v4492 = vld [vmem:[#allocation3 + $0x140] sm:$0xff]
      %v4493 = vld [vmem:[#allocation3 + $0x150] sm:$0xff]
      %v4494 = vld [vmem:[#allocation3 + $0x158] sm:$0xff]
      %v4495 = vld [vmem:[#allocation3 + $0x168] sm:$0xff]
      %v4496 = vld [vmem:[#allocation3 + $0x170] sm:$0xff]
      %v4497 = vld [vmem:[%s6] sm:$0x1]
      %v4498 = vld [vmem:[#allocation4] sm:$0x1]
      %4500 = vset.pattern.permute.xlu0 0
      %4501 = vperm.xlu0 %4500, %v4498
      %v4502 = vpop.permute.xlu0 %4501
      %v4504 = vlaneseq
      %v4505 = vshrl.u32 %v4504, 7
      %v4506 = vsub.s32 0, %v4505
      %v4507 = vrot.slane %v4502, %v4506
      %v4509 = vsel %vm3676, %v4497, 0
      %v4512 = vsel %vm3676, %v4465, 0
      %v4515 = vsel %vm3676, %v4466, 0
      %v4518 = vsel %vm3676, %v4467, 0
      %v4521 = vsel %vm3676, %v4468, 0
      %v4524 = vsel %vm3676, %v4469, 0
      %v4527 = vsel %vm3676, %v4470, 0
      %v4530 = vsel %vm3676, %v4471, 0
      %v4533 = vsel %vm3676, %v4472, 0
      %v4536 = vsel %vm3676, %v4473, 0
      %v4539 = vsel %vm3676, %v4474, 0
      %v4542 = vsel %vm3676, %v4475, 0
      %v4545 = vsel %vm3676, %v4476, 0
      %v4548 = vsel %vm3676, %v4477, 0
      %v4551 = vsel %vm3676, %v4478, 0
      %v4554 = vsel %vm3676, %v4479, 0
      %v4557 = vsel %vm3676, %v4480, 0
      %v4560 = vsel %vm3676, %v4481, 0
      %v4563 = vsel %vm3676, %v4482, 0
      %v4566 = vsel %vm3676, %v4483, 0
      %v4569 = vsel %vm3676, %v4484, 0
      %v4572 = vsel %vm3676, %v4485, 0
      %v4575 = vsel %vm3676, %v4486, 0
      %v4578 = vsel %vm3676, %v4487, 0
      %v4581 = vsel %vm3676, %v4488, 0
      %v4584 = vsel %vm3676, %v4489, 0
      %v4587 = vsel %vm3676, %v4490, 0
      %v4590 = vsel %vm3676, %v4491, 0
      %v4593 = vsel %vm3676, %v4492, 0
      %v4596 = vsel %vm3676, %v4493, 0
      %v4599 = vsel %vm3676, %v4494, 0
      %v4602 = vsel %vm3676, %v4495, 0
      %v4605 = vsel %vm3676, %v4496, 0
      %4607 = vmatprep.subr.mxu0 0.0
      %4608 = vmatpush1.xpose.msra.mxu0 %v4512
      %4609 = vmatprep.subr.mxu0 0.0
      %4610 = vmatpush1.xpose.msra.mxu0 %v4515
      %4611 = vmatprep.subr.mxu0 0.0
      %4612 = vmatpush1.xpose.msra.mxu0 %v4518
      %4613 = vmatprep.subr.mxu0 0.0
      %4614 = vmatpush1.xpose.msra.mxu0 %v4521
      %4615 = vmatprep.subr.mxu0 0.0
      %4616 = vmatpush1.xpose.msra.mxu0 %v4524
      %4617 = vmatprep.subr.mxu0 0.0
      %4618 = vmatpush1.xpose.msra.mxu0 %v4527
      %4619 = vmatprep.subr.mxu0 0.0
      %4620 = vmatpush1.xpose.msra.mxu0 %v4530
      %4621 = vmatprep.subr.mxu0 0.0
      %4622 = vmatpush1.xpose.msra.mxu0 %v4533
      %4623 = vmatprep.subr.mxu0 0.0
      %4624 = vmatpush1.xpose.msra.mxu0 %v4536
      %4625 = vmatprep.subr.mxu0 0.0
      %4626 = vmatpush1.xpose.msra.mxu0 %v4539
      %4627 = vmatprep.subr.mxu0 0.0
      %4628 = vmatpush1.xpose.msra.mxu0 %v4542
      %4629 = vmatprep.subr.mxu0 0.0
      %4630 = vmatpush1.xpose.msra.mxu0 %v4545
      %4631 = vmatprep.subr.mxu0 0.0
      %4632 = vmatpush1.xpose.msra.mxu0 %v4548
      %4633 = vmatprep.subr.mxu0 0.0
      %4634 = vmatpush1.xpose.msra.mxu0 %v4551
      %4635 = vmatprep.subr.mxu0 0.0
      %4636 = vmatpush1.xpose.msra.mxu0 %v4554
      %4637 = vmatprep.subr.mxu0 0.0
      %4638 = vmatpush1.xpose.msra.mxu0 %v4557
      %4639 = vmatprep.subr.mxu0 0.0
      %4640 = vmatpush1.xpose.msra.mxu0 %v4560
      %4641 = vmatprep.subr.mxu0 0.0
      %4642 = vmatpush1.xpose.msra.mxu0 %v4563
      %4643 = vmatprep.subr.mxu0 0.0
      %4644 = vmatpush1.xpose.msra.mxu0 %v4566
      %4645 = vmatprep.subr.mxu0 0.0
      %4646 = vmatpush1.xpose.msra.mxu0 %v4569
      %4647 = vmatprep.subr.mxu0 0.0
      %4648 = vmatpush1.xpose.msra.mxu0 %v4572
      %4649 = vmatprep.subr.mxu0 0.0
      %4650 = vmatpush1.xpose.msra.mxu0 %v4575
      %4651 = vmatprep.subr.mxu0 0.0
      %4652 = vmatpush1.xpose.msra.mxu0 %v4578
      %4653 = vmatprep.subr.mxu0 0.0
      %4654 = vmatpush1.xpose.msra.mxu0 %v4581
      %4655 = vmatprep.subr.mxu0 0.0
      %4656 = vmatpush1.xpose.msra.mxu0 %v4584
      %4657 = vmatprep.subr.mxu0 0.0
      %4658 = vmatpush1.xpose.msra.mxu0 %v4587
      %4659 = vmatprep.subr.mxu0 0.0
      %4660 = vmatpush1.xpose.msra.mxu0 %v4590
      %4661 = vmatprep.subr.mxu0 0.0
      %4662 = vmatpush1.xpose.msra.mxu0 %v4593
      %4663 = vmatprep.subr.mxu0 0.0
      %4664 = vmatpush1.xpose.msra.mxu0 %v4596
      %4665 = vmatprep.subr.mxu0 0.0
      %4666 = vmatpush1.xpose.msra.mxu0 %v4599
      %4667 = vmatprep.subr.mxu0 0.0
      %4668 = vmatpush1.xpose.msra.mxu0 %v4602
      %4669 = vmatprep.subr.mxu0 0.0
      %4670 = vmatpush1.xpose.msra.mxu0 %v4605
      %4671 = vmatprep.mubr.f32.mxu0 0.0
      %4672 = vmatmul.mubr.f32.gmra.mrb[0].mxu0 %v4509
      %v4673 = vpop.f32.mrb[0].mxu0
      %v4674 = vadd.f32 %v4507, %v4673
      %v4675 = vpop.f32.mrb[0].mxu0
      %v4676 = vadd.f32 %v4507, %v4675
      %4677 = vdwg.mxu0
      %v4678 = vsub.f32 0.0, %v4674
      %v4679 = vsub.f32 0.0, %v4676
      %v4680 = vmul.f32 %v4678, 1.442695
      %v4681 = vpow.pop %v4680
      %v4682 = vmul.f32 %v4679, 1.442695
      %v4683 = vpow.pop %v4682
      %v4684 = vadd.f32 %v4681, 1.0
      %v4685 = vadd.f32 %v4683, 1.0
      %v4686 = vrcp.pop %v4684
      %v4687 = vrcp.pop %v4685
      %v4688 = vld [vmem:[#allocation3 + $0x1] sm:$0xff]
      %v4689 = vld [vmem:[#allocation3 + $0x9] sm:$0xff]
      %v4690 = vld [vmem:[#allocation3 + $0x19] sm:$0xff]
      %v4691 = vld [vmem:[#allocation3 + $0x21] sm:$0xff]
      %v4692 = vld [vmem:[#allocation3 + $0x31] sm:$0xff]
      %v4693 = vld [vmem:[#allocation3 + $0x39] sm:$0xff]
      %v4694 = vld [vmem:[#allocation3 + $0x49] sm:$0xff]
      %v4695 = vld [vmem:[#allocation3 + $0x51] sm:$0xff]
      %v4696 = vld [vmem:[#allocation3 + $0x61] sm:$0xff]
      %v4697 = vld [vmem:[#allocation3 + $0x69] sm:$0xff]
      %v4698 = vld [vmem:[#allocation3 + $0x79] sm:$0xff]
      %v4699 = vld [vmem:[#allocation3 + $0x81] sm:$0xff]
      %v4700 = vld [vmem:[#allocation3 + $0x91] sm:$0xff]
      %v4701 = vld [vmem:[#allocation3 + $0x99] sm:$0xff]
      %v4702 = vld [vmem:[#allocation3 + $0xa9] sm:$0xff]
      %v4703 = vld [vmem:[#allocation3 + $0xb1] sm:$0xff]
      %v4704 = vld [vmem:[#allocation3 + $0xc1] sm:$0xff]
      %v4705 = vld [vmem:[#allocation3 + $0xc9] sm:$0xff]
      %v4706 = vld [vmem:[#allocation3 + $0xd9] sm:$0xff]
      %v4707 = vld [vmem:[#allocation3 + $0xe1] sm:$0xff]
      %v4708 = vld [vmem:[#allocation3 + $0xf1] sm:$0xff]
      %v4709 = vld [vmem:[#allocation3 + $0xf9] sm:$0xff]
      %v4710 = vld [vmem:[#allocation3 + $0x109] sm:$0xff]
      %v4711 = vld [vmem:[#allocation3 + $0x111] sm:$0xff]
      %v4712 = vld [vmem:[#allocation3 + $0x121] sm:$0xff]
      %v4713 = vld [vmem:[#allocation3 + $0x129] sm:$0xff]
      %v4714 = vld [vmem:[#allocation3 + $0x139] sm:$0xff]
      %v4715 = vld [vmem:[#allocation3 + $0x141] sm:$0xff]
      %v4716 = vld [vmem:[#allocation3 + $0x151] sm:$0xff]
      %v4717 = vld [vmem:[#allocation3 + $0x159] sm:$0xff]
      %v4718 = vld [vmem:[#allocation3 + $0x169] sm:$0xff]
      %v4719 = vld [vmem:[#allocation3 + $0x171] sm:$0xff]
      %4720 = vrot.lane.b32.xlu0 %v4465, 16
      %v4721 = vpop.permute.xlu0 %4720
      %4722 = vrot.lane.b32.xlu0 %v4466, 16
      %v4723 = vpop.permute.xlu0 %4722
      %4724 = vrot.lane.b32.xlu0 %v4467, 16
      %v4725 = vpop.permute.xlu0 %4724
      %4726 = vrot.lane.b32.xlu0 %v4468, 16
      %v4727 = vpop.permute.xlu0 %4726
      %4728 = vrot.lane.b32.xlu0 %v4469, 16
      %v4729 = vpop.permute.xlu0 %4728
      %4730 = vrot.lane.b32.xlu0 %v4470, 16
      %v4731 = vpop.permute.xlu0 %4730
      %4732 = vrot.lane.b32.xlu0 %v4471, 16
      %v4733 = vpop.permute.xlu0 %4732
      %4734 = vrot.lane.b32.xlu0 %v4472, 16
      %v4735 = vpop.permute.xlu0 %4734
      %4736 = vrot.lane.b32.xlu0 %v4473, 16
      %v4737 = vpop.permute.xlu0 %4736
      %4738 = vrot.lane.b32.xlu0 %v4474, 16
      %v4739 = vpop.permute.xlu0 %4738
      %4740 = vrot.lane.b32.xlu0 %v4475, 16
      %v4741 = vpop.permute.xlu0 %4740
      %4742 = vrot.lane.b32.xlu0 %v4476, 16
      %v4743 = vpop.permute.xlu0 %4742
      %4744 = vrot.lane.b32.xlu0 %v4477, 16
      %v4745 = vpop.permute.xlu0 %4744
      %4746 = vrot.lane.b32.xlu0 %v4478, 16
      %v4747 = vpop.permute.xlu0 %4746
      %4748 = vrot.lane.b32.xlu0 %v4479, 16
      %v4749 = vpop.permute.xlu0 %4748
      %4750 = vrot.lane.b32.xlu0 %v4480, 16
      %v4751 = vpop.permute.xlu0 %4750
      %4752 = vrot.lane.b32.xlu0 %v4481, 16
      %v4753 = vpop.permute.xlu0 %4752
      %4754 = vrot.lane.b32.xlu0 %v4482, 16
      %v4755 = vpop.permute.xlu0 %4754
      %4756 = vrot.lane.b32.xlu0 %v4483, 16
      %v4757 = vpop.permute.xlu0 %4756
      %4758 = vrot.lane.b32.xlu0 %v4484, 16
      %v4759 = vpop.permute.xlu0 %4758
      %4760 = vrot.lane.b32.xlu0 %v4485, 16
      %v4761 = vpop.permute.xlu0 %4760
      %4762 = vrot.lane.b32.xlu0 %v4486, 16
      %v4763 = vpop.permute.xlu0 %4762
      %4764 = vrot.lane.b32.xlu0 %v4487, 16
      %v4765 = vpop.permute.xlu0 %4764
      %4766 = vrot.lane.b32.xlu0 %v4488, 16
      %v4767 = vpop.permute.xlu0 %4766
      %4768 = vrot.lane.b32.xlu0 %v4489, 16
      %v4769 = vpop.permute.xlu0 %4768
      %4770 = vrot.lane.b32.xlu0 %v4490, 16
      %v4771 = vpop.permute.xlu0 %4770
      %4772 = vrot.lane.b32.xlu0 %v4491, 16
      %v4773 = vpop.permute.xlu0 %4772
      %4774 = vrot.lane.b32.xlu0 %v4492, 16
      %v4775 = vpop.permute.xlu0 %4774
      %4776 = vrot.lane.b32.xlu0 %v4493, 16
      %v4777 = vpop.permute.xlu0 %4776
      %4778 = vrot.lane.b32.xlu0 %v4494, 16
      %v4779 = vpop.permute.xlu0 %4778
      %4780 = vrot.lane.b32.xlu0 %v4495, 16
      %v4781 = vpop.permute.xlu0 %4780
      %4782 = vrot.lane.b32.xlu0 %v4496, 16
      %v4783 = vpop.permute.xlu0 %4782
      %v4816 = vsel %vm3676, %v4688, %v4721
      %v4817 = vsel %vm3676, %v4689, %v4723
      %v4818 = vsel %vm3676, %v4690, %v4725
      %v4819 = vsel %vm3676, %v4691, %v4727
      %v4820 = vsel %vm3676, %v4692, %v4729
      %v4821 = vsel %vm3676, %v4693, %v4731
      %v4822 = vsel %vm3676, %v4694, %v4733
      %v4823 = vsel %vm3676, %v4695, %v4735
      %v4824 = vsel %vm3676, %v4696, %v4737
      %v4825 = vsel %vm3676, %v4697, %v4739
      %v4826 = vsel %vm3676, %v4698, %v4741
      %v4827 = vsel %vm3676, %v4699, %v4743
      %v4828 = vsel %vm3676, %v4700, %v4745
      %v4829 = vsel %vm3676, %v4701, %v4747
      %v4830 = vsel %vm3676, %v4702, %v4749
      %v4831 = vsel %vm3676, %v4703, %v4751
      %v4832 = vsel %vm3676, %v4704, %v4753
      %v4833 = vsel %vm3676, %v4705, %v4755
      %v4834 = vsel %vm3676, %v4706, %v4757
      %v4835 = vsel %vm3676, %v4707, %v4759
      %v4836 = vsel %vm3676, %v4708, %v4761
      %v4837 = vsel %vm3676, %v4709, %v4763
      %v4838 = vsel %vm3676, %v4710, %v4765
      %v4839 = vsel %vm3676, %v4711, %v4767
      %v4840 = vsel %vm3676, %v4712, %v4769
      %v4841 = vsel %vm3676, %v4713, %v4771
      %v4842 = vsel %vm3676, %v4714, %v4773
      %v4843 = vsel %vm3676, %v4715, %v4775
      %v4844 = vsel %vm3676, %v4716, %v4777
      %v4845 = vsel %vm3676, %v4717, %v4779
      %v4846 = vsel %vm3676, %v4718, %v4781
      %v4847 = vsel %vm3676, %v4719, %v4783
      %v4848 = vld [vmem:[%s7] sm:$0x1]
      %v4850 = vsel %vm389, %v4848, 0
      %v4853 = vsel %vm389, %v4816, 0
      %v4856 = vsel %vm389, %v4817, 0
      %v4859 = vsel %vm389, %v4818, 0
      %v4862 = vsel %vm389, %v4819, 0
      %v4865 = vsel %vm389, %v4820, 0
      %v4868 = vsel %vm389, %v4821, 0
      %v4871 = vsel %vm389, %v4822, 0
      %v4874 = vsel %vm389, %v4823, 0
      %v4877 = vsel %vm389, %v4824, 0
      %v4880 = vsel %vm389, %v4825, 0
      %v4883 = vsel %vm389, %v4826, 0
      %v4886 = vsel %vm389, %v4827, 0
      %v4889 = vsel %vm389, %v4828, 0
      %v4892 = vsel %vm389, %v4829, 0
      %v4895 = vsel %vm389, %v4830, 0
      %v4898 = vsel %vm389, %v4831, 0
      %v4901 = vsel %vm389, %v4832, 0
      %v4904 = vsel %vm389, %v4833, 0
      %v4907 = vsel %vm389, %v4834, 0
      %v4910 = vsel %vm389, %v4835, 0
      %v4913 = vsel %vm389, %v4836, 0
      %v4916 = vsel %vm389, %v4837, 0
      %v4919 = vsel %vm389, %v4838, 0
      %v4922 = vsel %vm389, %v4839, 0
      %v4925 = vsel %vm389, %v4840, 0
      %v4928 = vsel %vm389, %v4841, 0
      %v4931 = vsel %vm389, %v4842, 0
      %v4934 = vsel %vm389, %v4843, 0
      %v4937 = vsel %vm389, %v4844, 0
      %v4940 = vsel %vm389, %v4845, 0
      %v4943 = vsel %vm389, %v4846, 0
      %v4946 = vsel %vm389, %v4847, 0
      %4948 = vmatprep.subr.mxu0 0.0
      %4949 = vmatpush1.xpose.msra.mxu0 %v4853
      %4950 = vmatprep.subr.mxu0 0.0
      %4951 = vmatpush1.xpose.msra.mxu0 %v4856
      %4952 = vmatprep.subr.mxu0 0.0
      %4953 = vmatpush1.xpose.msra.mxu0 %v4859
      %4954 = vmatprep.subr.mxu0 0.0
      %4955 = vmatpush1.xpose.msra.mxu0 %v4862
      %4956 = vmatprep.subr.mxu0 0.0
      %4957 = vmatpush1.xpose.msra.mxu0 %v4865
      %4958 = vmatprep.subr.mxu0 0.0
      %4959 = vmatpush1.xpose.msra.mxu0 %v4868
      %4960 = vmatprep.subr.mxu0 0.0
      %4961 = vmatpush1.xpose.msra.mxu0 %v4871
      %4962 = vmatprep.subr.mxu0 0.0
      %4963 = vmatpush1.xpose.msra.mxu0 %v4874
      %4964 = vmatprep.subr.mxu0 0.0
      %4965 = vmatpush1.xpose.msra.mxu0 %v4877
      %4966 = vmatprep.subr.mxu0 0.0
      %4967 = vmatpush1.xpose.msra.mxu0 %v4880
      %4968 = vmatprep.subr.mxu0 0.0
      %4969 = vmatpush1.xpose.msra.mxu0 %v4883
      %4970 = vmatprep.subr.mxu0 0.0
      %4971 = vmatpush1.xpose.msra.mxu0 %v4886
      %4972 = vmatprep.subr.mxu0 0.0
      %4973 = vmatpush1.xpose.msra.mxu0 %v4889
      %4974 = vmatprep.subr.mxu0 0.0
      %4975 = vmatpush1.xpose.msra.mxu0 %v4892
      %4976 = vmatprep.subr.mxu0 0.0
      %4977 = vmatpush1.xpose.msra.mxu0 %v4895
      %4978 = vmatprep.subr.mxu0 0.0
      %4979 = vmatpush1.xpose.msra.mxu0 %v4898
      %4980 = vmatprep.subr.mxu0 0.0
      %4981 = vmatpush1.xpose.msra.mxu0 %v4901
      %4982 = vmatprep.subr.mxu0 0.0
      %4983 = vmatpush1.xpose.msra.mxu0 %v4904
      %4984 = vmatprep.subr.mxu0 0.0
      %4985 = vmatpush1.xpose.msra.mxu0 %v4907
      %4986 = vmatprep.subr.mxu0 0.0
      %4987 = vmatpush1.xpose.msra.mxu0 %v4910
      %4988 = vmatprep.subr.mxu0 0.0
      %4989 = vmatpush1.xpose.msra.mxu0 %v4913
      %4990 = vmatprep.subr.mxu0 0.0
      %4991 = vmatpush1.xpose.msra.mxu0 %v4916
      %4992 = vmatprep.subr.mxu0 0.0
      %4993 = vmatpush1.xpose.msra.mxu0 %v4919
      %4994 = vmatprep.subr.mxu0 0.0
      %4995 = vmatpush1.xpose.msra.mxu0 %v4922
      %4996 = vmatprep.subr.mxu0 0.0
      %4997 = vmatpush1.xpose.msra.mxu0 %v4925
      %4998 = vmatprep.subr.mxu0 0.0
      %4999 = vmatpush1.xpose.msra.mxu0 %v4928
      %5000 = vmatprep.subr.mxu0 0.0
      %5001 = vmatpush1.xpose.msra.mxu0 %v4931
      %5002 = vmatprep.subr.mxu0 0.0
      %5003 = vmatpush1.xpose.msra.mxu0 %v4934
      %5004 = vmatprep.subr.mxu0 0.0
      %5005 = vmatpush1.xpose.msra.mxu0 %v4937
      %5006 = vmatprep.subr.mxu0 0.0
      %5007 = vmatpush1.xpose.msra.mxu0 %v4940
      %5008 = vmatprep.subr.mxu0 0.0
      %5009 = vmatpush1.xpose.msra.mxu0 %v4943
      %5010 = vmatprep.subr.mxu0 0.0
      %5011 = vmatpush1.xpose.msra.mxu0 %v4946
      %5012 = vmatprep.mubr.f32.mxu0 0.0
      %5013 = vmatmul.mubr.f32.gmra.mrb[0].mxu0 %v4850
      %v5014 = vpop.f32.mrb[0].mxu0
      %v5015 = vadd.f32 %v4507, %v5014
      %v5016 = vpop.f32.mrb[0].mxu0
      %v5017 = vadd.f32 %v4507, %v5016
      %5018 = vdwg.mxu0
      %v5019 = vsub.f32 0.0, %v5015
      %v5020 = vsub.f32 0.0, %v5017
      %v5021 = vmul.f32 %v5019, 1.442695
      %v5022 = vpow.pop %v5021
      %v5023 = vmul.f32 %v5020, 1.442695
      %v5024 = vpow.pop %v5023
      %v5025 = vadd.f32 %v5022, 1.0
      %v5026 = vadd.f32 %v5024, 1.0
      %v5027 = vrcp.pop %v5025
      %v5028 = vrcp.pop %v5026
      %s5029 = scalar_lea.vmem [#allocation3], 24
      %v5030 = vld [vmem:[%s5029] sm:$0xff]
      %v5031 = vld [vmem:[%s5029 + $0x8] sm:$0xff]
      %v5032 = vld [vmem:[%s5029 + $0x18] sm:$0xff]
      %v5033 = vld [vmem:[%s5029 + $0x20] sm:$0xff]
      %v5034 = vld [vmem:[%s5029 + $0x30] sm:$0xff]
      %v5035 = vld [vmem:[%s5029 + $0x38] sm:$0xff]
      %v5036 = vld [vmem:[%s5029 + $0x48] sm:$0xff]
      %v5037 = vld [vmem:[%s5029 + $0x50] sm:$0xff]
      %v5038 = vld [vmem:[%s5029 + $0x60] sm:$0xff]
      %v5039 = vld [vmem:[%s5029 + $0x68] sm:$0xff]
      %v5040 = vld [vmem:[%s5029 + $0x78] sm:$0xff]
      %v5041 = vld [vmem:[%s5029 + $0x80] sm:$0xff]
      %v5042 = vld [vmem:[%s5029 + $0x90] sm:$0xff]
      %v5043 = vld [vmem:[%s5029 + $0x98] sm:$0xff]
      %v5044 = vld [vmem:[%s5029 + $0xa8] sm:$0xff]
      %v5045 = vld [vmem:[%s5029 + $0xb0] sm:$0xff]
      %v5046 = vld [vmem:[%s5029 + $0xc0] sm:$0xff]
      %v5047 = vld [vmem:[%s5029 + $0xc8] sm:$0xff]
      %v5048 = vld [vmem:[%s5029 + $0xd8] sm:$0xff]
      %v5049 = vld [vmem:[%s5029 + $0xe0] sm:$0xff]
      %v5050 = vld [vmem:[%s5029 + $0xf0] sm:$0xff]
      %v5051 = vld [vmem:[%s5029 + $0xf8] sm:$0xff]
      %v5052 = vld [vmem:[%s5029 + $0x108] sm:$0xff]
      %v5053 = vld [vmem:[%s5029 + $0x110] sm:$0xff]
      %v5054 = vld [vmem:[%s5029 + $0x120] sm:$0xff]
      %v5055 = vld [vmem:[%s5029 + $0x128] sm:$0xff]
      %v5056 = vld [vmem:[%s5029 + $0x138] sm:$0xff]
      %v5057 = vld [vmem:[%s5029 + $0x140] sm:$0xff]
      %v5058 = vld [vmem:[%s5029 + $0x150] sm:$0xff]
      %v5059 = vld [vmem:[%s5029 + $0x158] sm:$0xff]
      %v5060 = vld [vmem:[%s5029 + $0x168] sm:$0xff]
      %v5061 = vld [vmem:[%s5029 + $0x170] sm:$0xff]
      %v5062 = vsel %vm3676, %v5030, %v4721
      %v5063 = vsel %vm3676, %v5031, %v4723
      %v5064 = vsel %vm3676, %v5032, %v4725
      %v5065 = vsel %vm3676, %v5033, %v4727
      %v5066 = vsel %vm3676, %v5034, %v4729
      %v5067 = vsel %vm3676, %v5035, %v4731
      %v5068 = vsel %vm3676, %v5036, %v4733
      %v5069 = vsel %vm3676, %v5037, %v4735
      %v5070 = vsel %vm3676, %v5038, %v4737
      %v5071 = vsel %vm3676, %v5039, %v4739
      %v5072 = vsel %vm3676, %v5040, %v4741
      %v5073 = vsel %vm3676, %v5041, %v4743
      %v5074 = vsel %vm3676, %v5042, %v4745
      %v5075 = vsel %vm3676, %v5043, %v4747
      %v5076 = vsel %vm3676, %v5044, %v4749
      %v5077 = vsel %vm3676, %v5045, %v4751
      %v5078 = vsel %vm3676, %v5046, %v4753
      %v5079 = vsel %vm3676, %v5047, %v4755
      %v5080 = vsel %vm3676, %v5048, %v4757
      %v5081 = vsel %vm3676, %v5049, %v4759
      %v5082 = vsel %vm3676, %v5050, %v4761
      %v5083 = vsel %vm3676, %v5051, %v4763
      %v5084 = vsel %vm3676, %v5052, %v4765
      %v5085 = vsel %vm3676, %v5053, %v4767
      %v5086 = vsel %vm3676, %v5054, %v4769
      %v5087 = vsel %vm3676, %v5055, %v4771
      %v5088 = vsel %vm3676, %v5056, %v4773
      %v5089 = vsel %vm3676, %v5057, %v4775
      %v5090 = vsel %vm3676, %v5058, %v4777
      %v5091 = vsel %vm3676, %v5059, %v4779
      %v5092 = vsel %vm3676, %v5060, %v4781
      %v5093 = vsel %vm3676, %v5061, %v4783
      %v5094 = vld [vmem:[%s8] sm:$0x1]
      %v5096 = vsel %vm389, %v5094, 0
      %v5099 = vsel %vm389, %v5062, 0
      %v5102 = vsel %vm389, %v5063, 0
      %v5105 = vsel %vm389, %v5064, 0
      %v5108 = vsel %vm389, %v5065, 0
      %v5111 = vsel %vm389, %v5066, 0
      %v5114 = vsel %vm389, %v5067, 0
      %v5117 = vsel %vm389, %v5068, 0
      %v5120 = vsel %vm389, %v5069, 0
      %v5123 = vsel %vm389, %v5070, 0
      %v5126 = vsel %vm389, %v5071, 0
      %v5129 = vsel %vm389, %v5072, 0
      %v5132 = vsel %vm389, %v5073, 0
      %v5135 = vsel %vm389, %v5074, 0
      %v5138 = vsel %vm389, %v5075, 0
      %v5141 = vsel %vm389, %v5076, 0
      %v5144 = vsel %vm389, %v5077, 0
      %v5147 = vsel %vm389, %v5078, 0
      %v5150 = vsel %vm389, %v5079, 0
      %v5153 = vsel %vm389, %v5080, 0
      %v5156 = vsel %vm389, %v5081, 0
      %v5159 = vsel %vm389, %v5082, 0
      %v5162 = vsel %vm389, %v5083, 0
      %v5165 = vsel %vm389, %v5084, 0
      %v5168 = vsel %vm389, %v5085, 0
      %v5171 = vsel %vm389, %v5086, 0
      %v5174 = vsel %vm389, %v5087, 0
      %v5177 = vsel %vm389, %v5088, 0
      %v5180 = vsel %vm389, %v5089, 0
      %v5183 = vsel %vm389, %v5090, 0
      %v5186 = vsel %vm389, %v5091, 0
      %v5189 = vsel %vm389, %v5092, 0
      %v5192 = vsel %vm389, %v5093, 0
      %5194 = vmatprep.subr.mxu0 0.0
      %5195 = vmatpush1.xpose.msra.mxu0 %v5099
      %5196 = vmatprep.subr.mxu0 0.0
      %5197 = vmatpush1.xpose.msra.mxu0 %v5102
      %5198 = vmatprep.subr.mxu0 0.0
      %5199 = vmatpush1.xpose.msra.mxu0 %v5105
      %5200 = vmatprep.subr.mxu0 0.0
      %5201 = vmatpush1.xpose.msra.mxu0 %v5108
      %5202 = vmatprep.subr.mxu0 0.0
      %5203 = vmatpush1.xpose.msra.mxu0 %v5111
      %5204 = vmatprep.subr.mxu0 0.0
      %5205 = vmatpush1.xpose.msra.mxu0 %v5114
      %5206 = vmatprep.subr.mxu0 0.0
      %5207 = vmatpush1.xpose.msra.mxu0 %v5117
      %5208 = vmatprep.subr.mxu0 0.0
      %5209 = vmatpush1.xpose.msra.mxu0 %v5120
      %5210 = vmatprep.subr.mxu0 0.0
      %5211 = vmatpush1.xpose.msra.mxu0 %v5123
      %5212 = vmatprep.subr.mxu0 0.0
      %5213 = vmatpush1.xpose.msra.mxu0 %v5126
      %5214 = vmatprep.subr.mxu0 0.0
      %5215 = vmatpush1.xpose.msra.mxu0 %v5129
      %5216 = vmatprep.subr.mxu0 0.0
      %5217 = vmatpush1.xpose.msra.mxu0 %v5132
      %5218 = vmatprep.subr.mxu0 0.0
      %5219 = vmatpush1.xpose.msra.mxu0 %v5135
      %5220 = vmatprep.subr.mxu0 0.0
      %5221 = vmatpush1.xpose.msra.mxu0 %v5138
      %5222 = vmatprep.subr.mxu0 0.0
      %5223 = vmatpush1.xpose.msra.mxu0 %v5141
      %5224 = vmatprep.subr.mxu0 0.0
      %5225 = vmatpush1.xpose.msra.mxu0 %v5144
      %5226 = vmatprep.subr.mxu0 0.0
      %5227 = vmatpush1.xpose.msra.mxu0 %v5147
      %5228 = vmatprep.subr.mxu0 0.0
      %5229 = vmatpush1.xpose.msra.mxu0 %v5150
      %5230 = vmatprep.subr.mxu0 0.0
      %5231 = vmatpush1.xpose.msra.mxu0 %v5153
      %5232 = vmatprep.subr.mxu0 0.0
      %5233 = vmatpush1.xpose.msra.mxu0 %v5156
      %5234 = vmatprep.subr.mxu0 0.0
      %5235 = vmatpush1.xpose.msra.mxu0 %v5159
      %5236 = vmatprep.subr.mxu0 0.0
      %5237 = vmatpush1.xpose.msra.mxu0 %v5162
      %5238 = vmatprep.subr.mxu0 0.0
      %5239 = vmatpush1.xpose.msra.mxu0 %v5165
      %5240 = vmatprep.subr.mxu0 0.0
      %5241 = vmatpush1.xpose.msra.mxu0 %v5168
      %5242 = vmatprep.subr.mxu0 0.0
      %5243 = vmatpush1.xpose.msra.mxu0 %v5171
      %5244 = vmatprep.subr.mxu0 0.0
      %5245 = vmatpush1.xpose.msra.mxu0 %v5174
      %5246 = vmatprep.subr.mxu0 0.0
      %5247 = vmatpush1.xpose.msra.mxu0 %v5177
      %5248 = vmatprep.subr.mxu0 0.0
      %5249 = vmatpush1.xpose.msra.mxu0 %v5180
      %5250 = vmatprep.subr.mxu0 0.0
      %5251 = vmatpush1.xpose.msra.mxu0 %v5183
      %5252 = vmatprep.subr.mxu0 0.0
      %5253 = vmatpush1.xpose.msra.mxu0 %v5186
      %5254 = vmatprep.subr.mxu0 0.0
      %5255 = vmatpush1.xpose.msra.mxu0 %v5189
      %5256 = vmatprep.subr.mxu0 0.0
      %5257 = vmatpush1.xpose.msra.mxu0 %v5192
      %5258 = vmatprep.mubr.f32.mxu0 0.0
      %5259 = vmatmul.mubr.f32.gmra.mrb[0].mxu0 %v5096
      %v5260 = vpop.f32.mrb[0].mxu0
      %v5261 = vadd.f32 %v4507, %v5260
      %v5262 = vpop.f32.mrb[0].mxu0
      %v5263 = vadd.f32 %v4507, %v5262
      %5264 = vdwg.mxu0
      %v5265 = vsub.f32 0.0, %v5261
      %v5266 = vsub.f32 0.0, %v5263
      %v5267 = vmul.f32 %v5265, 1.442695
      %v5268 = vpow.pop %v5267
      %v5269 = vmul.f32 %v5266, 1.442695
      %v5270 = vpow.pop %v5269
      %v5271 = vadd.f32 %v5268, 1.0
      %v5272 = vadd.f32 %v5270, 1.0
      %v5273 = vrcp.pop %v5271
      %v5274 = vrcp.pop %v5272
      %v5275 = vld [vmem:[%s5029 + $0x1] sm:$0xff]
      %v5276 = vld [vmem:[%s5029 + $0x9] sm:$0xff]
      %v5277 = vld [vmem:[%s5029 + $0x19] sm:$0xff]
      %v5278 = vld [vmem:[%s5029 + $0x21] sm:$0xff]
      %v5279 = vld [vmem:[%s5029 + $0x31] sm:$0xff]
      %v5280 = vld [vmem:[%s5029 + $0x39] sm:$0xff]
      %v5281 = vld [vmem:[%s5029 + $0x49] sm:$0xff]
      %v5282 = vld [vmem:[%s5029 + $0x51] sm:$0xff]
      %v5283 = vld [vmem:[%s5029 + $0x61] sm:$0xff]
      %v5284 = vld [vmem:[%s5029 + $0x69] sm:$0xff]
      %v5285 = vld [vmem:[%s5029 + $0x79] sm:$0xff]
      %v5286 = vld [vmem:[%s5029 + $0x81] sm:$0xff]
      %v5287 = vld [vmem:[%s5029 + $0x91] sm:$0xff]
      %v5288 = vld [vmem:[%s5029 + $0x99] sm:$0xff]
      %v5289 = vld [vmem:[%s5029 + $0xa9] sm:$0xff]
      %v5290 = vld [vmem:[%s5029 + $0xb1] sm:$0xff]
      %v5291 = vld [vmem:[%s5029 + $0xc1] sm:$0xff]
      %v5292 = vld [vmem:[%s5029 + $0xc9] sm:$0xff]
      %v5293 = vld [vmem:[%s5029 + $0xd9] sm:$0xff]
      %v5294 = vld [vmem:[%s5029 + $0xe1] sm:$0xff]
      %v5295 = vld [vmem:[%s5029 + $0xf1] sm:$0xff]
      %v5296 = vld [vmem:[%s5029 + $0xf9] sm:$0xff]
      %v5297 = vld [vmem:[%s5029 + $0x109] sm:$0xff]
      %v5298 = vld [vmem:[%s5029 + $0x111] sm:$0xff]
      %v5299 = vld [vmem:[%s5029 + $0x121] sm:$0xff]
      %v5300 = vld [vmem:[%s5029 + $0x129] sm:$0xff]
      %v5301 = vld [vmem:[%s5029 + $0x139] sm:$0xff]
      %v5302 = vld [vmem:[%s5029 + $0x141] sm:$0xff]
      %v5303 = vld [vmem:[%s5029 + $0x151] sm:$0xff]
      %v5304 = vld [vmem:[%s5029 + $0x159] sm:$0xff]
      %v5305 = vld [vmem:[%s5029 + $0x169] sm:$0xff]
      %v5306 = vld [vmem:[%s5029 + $0x171] sm:$0xff]
      %5339 = vrot.lane.b32.xlu0 %v5030, 16
      %v5340 = vpop.permute.xlu0 %5339
      %5341 = vrot.lane.b32.xlu0 %v5031, 16
      %v5342 = vpop.permute.xlu0 %5341
      %5343 = vrot.lane.b32.xlu0 %v5032, 16
      %v5344 = vpop.permute.xlu0 %5343
      %5345 = vrot.lane.b32.xlu0 %v5033, 16
      %v5346 = vpop.permute.xlu0 %5345
      %5347 = vrot.lane.b32.xlu0 %v5034, 16
      %v5348 = vpop.permute.xlu0 %5347
      %5349 = vrot.lane.b32.xlu0 %v5035, 16
      %v5350 = vpop.permute.xlu0 %5349
      %5351 = vrot.lane.b32.xlu0 %v5036, 16
      %v5352 = vpop.permute.xlu0 %5351
      %5353 = vrot.lane.b32.xlu0 %v5037, 16
      %v5354 = vpop.permute.xlu0 %5353
      %5355 = vrot.lane.b32.xlu0 %v5038, 16
      %v5356 = vpop.permute.xlu0 %5355
      %5357 = vrot.lane.b32.xlu0 %v5039, 16
      %v5358 = vpop.permute.xlu0 %5357
      %5359 = vrot.lane.b32.xlu0 %v5040, 16
      %v5360 = vpop.permute.xlu0 %5359
      %5361 = vrot.lane.b32.xlu0 %v5041, 16
      %v5362 = vpop.permute.xlu0 %5361
      %5363 = vrot.lane.b32.xlu0 %v5042, 16
      %v5364 = vpop.permute.xlu0 %5363
      %5365 = vrot.lane.b32.xlu0 %v5043, 16
      %v5366 = vpop.permute.xlu0 %5365
      %5367 = vrot.lane.b32.xlu0 %v5044, 16
      %v5368 = vpop.permute.xlu0 %5367
      %5369 = vrot.lane.b32.xlu0 %v5045, 16
      %v5370 = vpop.permute.xlu0 %5369
      %5371 = vrot.lane.b32.xlu0 %v5046, 16
      %v5372 = vpop.permute.xlu0 %5371
      %5373 = vrot.lane.b32.xlu0 %v5047, 16
      %v5374 = vpop.permute.xlu0 %5373
      %5375 = vrot.lane.b32.xlu0 %v5048, 16
      %v5376 = vpop.permute.xlu0 %5375
      %5377 = vrot.lane.b32.xlu0 %v5049, 16
      %v5378 = vpop.permute.xlu0 %5377
      %5379 = vrot.lane.b32.xlu0 %v5050, 16
      %v5380 = vpop.permute.xlu0 %5379
      %5381 = vrot.lane.b32.xlu0 %v5051, 16
      %v5382 = vpop.permute.xlu0 %5381
      %5383 = vrot.lane.b32.xlu0 %v5052, 16
      %v5384 = vpop.permute.xlu0 %5383
      %5385 = vrot.lane.b32.xlu0 %v5053, 16
      %v5386 = vpop.permute.xlu0 %5385
      %5387 = vrot.lane.b32.xlu0 %v5054, 16
      %v5388 = vpop.permute.xlu0 %5387
      %5389 = vrot.lane.b32.xlu0 %v5055, 16
      %v5390 = vpop.permute.xlu0 %5389
      %5391 = vrot.lane.b32.xlu0 %v5056, 16
      %v5392 = vpop.permute.xlu0 %5391
      %5393 = vrot.lane.b32.xlu0 %v5057, 16
      %v5394 = vpop.permute.xlu0 %5393
      %5395 = vrot.lane.b32.xlu0 %v5058, 16
      %v5396 = vpop.permute.xlu0 %5395
      %5397 = vrot.lane.b32.xlu0 %v5059, 16
      %v5398 = vpop.permute.xlu0 %5397
      %5399 = vrot.lane.b32.xlu0 %v5060, 16
      %v5400 = vpop.permute.xlu0 %5399
      %5401 = vrot.lane.b32.xlu0 %v5061, 16
      %v5402 = vpop.permute.xlu0 %5401
      %5467 = vrot.lane.b32.xlu0 %v4688, 32
      %v5468 = vpop.permute.xlu0 %5467
      %5469 = vrot.lane.b32.xlu0 %v4689, 32
      %v5470 = vpop.permute.xlu0 %5469
      %5471 = vrot.lane.b32.xlu0 %v4690, 32
      %v5472 = vpop.permute.xlu0 %5471
      %5473 = vrot.lane.b32.xlu0 %v4691, 32
      %v5474 = vpop.permute.xlu0 %5473
      %5475 = vrot.lane.b32.xlu0 %v4692, 32
      %v5476 = vpop.permute.xlu0 %5475
      %5477 = vrot.lane.b32.xlu0 %v4693, 32
      %v5478 = vpop.permute.xlu0 %5477
      %5479 = vrot.lane.b32.xlu0 %v4694, 32
      %v5480 = vpop.permute.xlu0 %5479
      %5481 = vrot.lane.b32.xlu0 %v4695, 32
      %v5482 = vpop.permute.xlu0 %5481
      %5483 = vrot.lane.b32.xlu0 %v4696, 32
      %v5484 = vpop.permute.xlu0 %5483
      %5485 = vrot.lane.b32.xlu0 %v4697, 32
      %v5486 = vpop.permute.xlu0 %5485
      %5487 = vrot.lane.b32.xlu0 %v4698, 32
      %v5488 = vpop.permute.xlu0 %5487
      %5489 = vrot.lane.b32.xlu0 %v4699, 32
      %v5490 = vpop.permute.xlu0 %5489
      %5491 = vrot.lane.b32.xlu0 %v4700, 32
      %v5492 = vpop.permute.xlu0 %5491
      %5493 = vrot.lane.b32.xlu0 %v4701, 32
      %v5494 = vpop.permute.xlu0 %5493
      %5495 = vrot.lane.b32.xlu0 %v4702, 32
      %v5496 = vpop.permute.xlu0 %5495
      %5497 = vrot.lane.b32.xlu0 %v4703, 32
      %v5498 = vpop.permute.xlu0 %5497
      %5499 = vrot.lane.b32.xlu0 %v4704, 32
      %v5500 = vpop.permute.xlu0 %5499
      %5501 = vrot.lane.b32.xlu0 %v4705, 32
      %v5502 = vpop.permute.xlu0 %5501
      %5503 = vrot.lane.b32.xlu0 %v4706, 32
      %v5504 = vpop.permute.xlu0 %5503
      %5505 = vrot.lane.b32.xlu0 %v4707, 32
      %v5506 = vpop.permute.xlu0 %5505
      %5507 = vrot.lane.b32.xlu0 %v4708, 32
      %v5508 = vpop.permute.xlu0 %5507
      %5509 = vrot.lane.b32.xlu0 %v4709, 32
      %v5510 = vpop.permute.xlu0 %5509
      %5511 = vrot.lane.b32.xlu0 %v4710, 32
      %v5512 = vpop.permute.xlu0 %5511
      %5513 = vrot.lane.b32.xlu0 %v4711, 32
      %v5514 = vpop.permute.xlu0 %5513
      %5515 = vrot.lane.b32.xlu0 %v4712, 32
      %v5516 = vpop.permute.xlu0 %5515
      %5517 = vrot.lane.b32.xlu0 %v4713, 32
      %v5518 = vpop.permute.xlu0 %5517
      %5519 = vrot.lane.b32.xlu0 %v4714, 32
      %v5520 = vpop.permute.xlu0 %5519
      %5521 = vrot.lane.b32.xlu0 %v4715, 32
      %v5522 = vpop.permute.xlu0 %5521
      %5523 = vrot.lane.b32.xlu0 %v4716, 32
      %v5524 = vpop.permute.xlu0 %5523
      %5525 = vrot.lane.b32.xlu0 %v4717, 32
      %v5526 = vpop.permute.xlu0 %5525
      %5527 = vrot.lane.b32.xlu0 %v4718, 32
      %v5528 = vpop.permute.xlu0 %5527
      %5529 = vrot.lane.b32.xlu0 %v4719, 32
      %v5530 = vpop.permute.xlu0 %5529
      %5563 = vrot.lane.b32.xlu0 %v4465, 48
      %v5564 = vpop.permute.xlu0 %5563
      %5565 = vrot.lane.b32.xlu0 %v4466, 48
      %v5566 = vpop.permute.xlu0 %5565
      %5567 = vrot.lane.b32.xlu0 %v4467, 48
      %v5568 = vpop.permute.xlu0 %5567
      %5569 = vrot.lane.b32.xlu0 %v4468, 48
      %v5570 = vpop.permute.xlu0 %5569
      %5571 = vrot.lane.b32.xlu0 %v4469, 48
      %v5572 = vpop.permute.xlu0 %5571
      %5573 = vrot.lane.b32.xlu0 %v4470, 48
      %v5574 = vpop.permute.xlu0 %5573
      %5575 = vrot.lane.b32.xlu0 %v4471, 48
      %v5576 = vpop.permute.xlu0 %5575
      %5577 = vrot.lane.b32.xlu0 %v4472, 48
      %v5578 = vpop.permute.xlu0 %5577
      %5579 = vrot.lane.b32.xlu0 %v4473, 48
      %v5580 = vpop.permute.xlu0 %5579
      %5581 = vrot.lane.b32.xlu0 %v4474, 48
      %v5582 = vpop.permute.xlu0 %5581
      %5583 = vrot.lane.b32.xlu0 %v4475, 48
      %v5584 = vpop.permute.xlu0 %5583
      %5585 = vrot.lane.b32.xlu0 %v4476, 48
      %v5586 = vpop.permute.xlu0 %5585
      %5587 = vrot.lane.b32.xlu0 %v4477, 48
      %v5588 = vpop.permute.xlu0 %5587
      %5589 = vrot.lane.b32.xlu0 %v4478, 48
      %v5590 = vpop.permute.xlu0 %5589
      %5591 = vrot.lane.b32.xlu0 %v4479, 48
      %v5592 = vpop.permute.xlu0 %5591
      %5593 = vrot.lane.b32.xlu0 %v4480, 48
      %v5594 = vpop.permute.xlu0 %5593
      %5595 = vrot.lane.b32.xlu0 %v4481, 48
      %v5596 = vpop.permute.xlu0 %5595
      %5597 = vrot.lane.b32.xlu0 %v4482, 48
      %v5598 = vpop.permute.xlu0 %5597
      %5599 = vrot.lane.b32.xlu0 %v4483, 48
      %v5600 = vpop.permute.xlu0 %5599
      %5601 = vrot.lane.b32.xlu0 %v4484, 48
      %v5602 = vpop.permute.xlu0 %5601
      %5603 = vrot.lane.b32.xlu0 %v4485, 48
      %v5604 = vpop.permute.xlu0 %5603
      %5605 = vrot.lane.b32.xlu0 %v4486, 48
      %v5606 = vpop.permute.xlu0 %5605
      %5607 = vrot.lane.b32.xlu0 %v4487, 48
      %v5608 = vpop.permute.xlu0 %5607
      %5609 = vrot.lane.b32.xlu0 %v4488, 48
      %v5610 = vpop.permute.xlu0 %5609
      %5611 = vrot.lane.b32.xlu0 %v4489, 48
      %v5612 = vpop.permute.xlu0 %5611
      %5613 = vrot.lane.b32.xlu0 %v4490, 48
      %v5614 = vpop.permute.xlu0 %5613
      %5615 = vrot.lane.b32.xlu0 %v4491, 48
      %v5616 = vpop.permute.xlu0 %5615
      %5617 = vrot.lane.b32.xlu0 %v4492, 48
      %v5618 = vpop.permute.xlu0 %5617
      %5619 = vrot.lane.b32.xlu0 %v4493, 48
      %v5620 = vpop.permute.xlu0 %5619
      %5621 = vrot.lane.b32.xlu0 %v4494, 48
      %v5622 = vpop.permute.xlu0 %5621
      %5623 = vrot.lane.b32.xlu0 %v4495, 48
      %v5624 = vpop.permute.xlu0 %5623
      %5625 = vrot.lane.b32.xlu0 %v4496, 48
      %v5626 = vpop.permute.xlu0 %5625
      %v5659 = vsel %vm3676, %v5275, %v5340
      %v5660 = vsel %vm3676, %v5276, %v5342
      %v5661 = vsel %vm3676, %v5277, %v5344
      %v5662 = vsel %vm3676, %v5278, %v5346
      %v5663 = vsel %vm3676, %v5279, %v5348
      %v5664 = vsel %vm3676, %v5280, %v5350
      %v5665 = vsel %vm3676, %v5281, %v5352
      %v5666 = vsel %vm3676, %v5282, %v5354
      %v5667 = vsel %vm3676, %v5283, %v5356
      %v5668 = vsel %vm3676, %v5284, %v5358
      %v5669 = vsel %vm3676, %v5285, %v5360
      %v5670 = vsel %vm3676, %v5286, %v5362
      %v5671 = vsel %vm3676, %v5287, %v5364
      %v5672 = vsel %vm3676, %v5288, %v5366
      %v5673 = vsel %vm3676, %v5289, %v5368
      %v5674 = vsel %vm3676, %v5290, %v5370
      %v5675 = vsel %vm3676, %v5291, %v5372
      %v5676 = vsel %vm3676, %v5292, %v5374
      %v5677 = vsel %vm3676, %v5293, %v5376
      %v5678 = vsel %vm3676, %v5294, %v5378
      %v5679 = vsel %vm3676, %v5295, %v5380
      %v5680 = vsel %vm3676, %v5296, %v5382
      %v5681 = vsel %vm3676, %v5297, %v5384
      %v5682 = vsel %vm3676, %v5298, %v5386
      %v5683 = vsel %vm3676, %v5299, %v5388
      %v5684 = vsel %vm3676, %v5300, %v5390
      %v5685 = vsel %vm3676, %v5301, %v5392
      %v5686 = vsel %vm3676, %v5302, %v5394
      %v5687 = vsel %vm3676, %v5303, %v5396
      %v5688 = vsel %vm3676, %v5304, %v5398
      %v5689 = vsel %vm3676, %v5305, %v5400
      %v5690 = vsel %vm3676, %v5306, %v5402
      %v5691 = vsel %vm389, %v5659, %v5468
      %v5692 = vsel %vm389, %v5660, %v5470
      %v5693 = vsel %vm389, %v5661, %v5472
      %v5694 = vsel %vm389, %v5662, %v5474
      %v5695 = vsel %vm389, %v5663, %v5476
      %v5696 = vsel %vm389, %v5664, %v5478
      %v5697 = vsel %vm389, %v5665, %v5480
      %v5698 = vsel %vm389, %v5666, %v5482
      %v5699 = vsel %vm389, %v5667, %v5484
      %v5700 = vsel %vm389, %v5668, %v5486
      %v5701 = vsel %vm389, %v5669, %v5488
      %v5702 = vsel %vm389, %v5670, %v5490
      %v5703 = vsel %vm389, %v5671, %v5492
      %v5704 = vsel %vm389, %v5672, %v5494
      %v5705 = vsel %vm389, %v5673, %v5496
      %v5706 = vsel %vm389, %v5674, %v5498
      %v5707 = vsel %vm389, %v5675, %v5500
      %v5708 = vsel %vm389, %v5676, %v5502
      %v5709 = vsel %vm389, %v5677, %v5504
      %v5710 = vsel %vm389, %v5678, %v5506
      %v5711 = vsel %vm389, %v5679, %v5508
      %v5712 = vsel %vm389, %v5680, %v5510
      %v5713 = vsel %vm389, %v5681, %v5512
      %v5714 = vsel %vm389, %v5682, %v5514
      %v5715 = vsel %vm389, %v5683, %v5516
      %v5716 = vsel %vm389, %v5684, %v5518
      %v5717 = vsel %vm389, %v5685, %v5520
      %v5718 = vsel %vm389, %v5686, %v5522
      %v5719 = vsel %vm389, %v5687, %v5524
      %v5720 = vsel %vm389, %v5688, %v5526
      %v5721 = vsel %vm389, %v5689, %v5528
      %v5722 = vsel %vm389, %v5690, %v5530
      %vm5723 = vcmask 392192
      %v5724 = vsel %vm5723, %v5691, %v5564
      %v5725 = vsel %vm5723, %v5692, %v5566
      %v5726 = vsel %vm5723, %v5693, %v5568
      %v5727 = vsel %vm5723, %v5694, %v5570
      %v5728 = vsel %vm5723, %v5695, %v5572
      %v5729 = vsel %vm5723, %v5696, %v5574
      %v5730 = vsel %vm5723, %v5697, %v5576
      %v5731 = vsel %vm5723, %v5698, %v5578
      %v5732 = vsel %vm5723, %v5699, %v5580
      %v5733 = vsel %vm5723, %v5700, %v5582
      %v5734 = vsel %vm5723, %v5701, %v5584
      %v5735 = vsel %vm5723, %v5702, %v5586
      %v5736 = vsel %vm5723, %v5703, %v5588
      %v5737 = vsel %vm5723, %v5704, %v5590
      %v5738 = vsel %vm5723, %v5705, %v5592
      %v5739 = vsel %vm5723, %v5706, %v5594
      %v5740 = vsel %vm5723, %v5707, %v5596
      %v5741 = vsel %vm5723, %v5708, %v5598
      %v5742 = vsel %vm5723, %v5709, %v5600
      %v5743 = vsel %vm5723, %v5710, %v5602
      %v5744 = vsel %vm5723, %v5711, %v5604
      %v5745 = vsel %vm5723, %v5712, %v5606
      %v5746 = vsel %vm5723, %v5713, %v5608
      %v5747 = vsel %vm5723, %v5714, %v5610
      %v5748 = vsel %vm5723, %v5715, %v5612
      %v5749 = vsel %vm5723, %v5716, %v5614
      %v5750 = vsel %vm5723, %v5717, %v5616
      %v5751 = vsel %vm5723, %v5718, %v5618
      %v5752 = vsel %vm5723, %v5719, %v5620
      %v5753 = vsel %vm5723, %v5720, %v5622
      %v5754 = vsel %vm5723, %v5721, %v5624
      %v5755 = vsel %vm5723, %v5722, %v5626
      %v5756 = vld [vmem:[%s9] sm:$0x1]
      %v5758 = vsel %vm629, %v5756, 0
      %v5761 = vsel %vm629, %v5724, 0
      %v5764 = vsel %vm629, %v5725, 0
      %v5767 = vsel %vm629, %v5726, 0
      %v5770 = vsel %vm629, %v5727, 0
      %v5773 = vsel %vm629, %v5728, 0
      %v5776 = vsel %vm629, %v5729, 0
      %v5779 = vsel %vm629, %v5730, 0
      %v5782 = vsel %vm629, %v5731, 0
      %v5785 = vsel %vm629, %v5732, 0
      %v5788 = vsel %vm629, %v5733, 0
      %v5791 = vsel %vm629, %v5734, 0
      %v5794 = vsel %vm629, %v5735, 0
      %v5797 = vsel %vm629, %v5736, 0
      %v5800 = vsel %vm629, %v5737, 0
      %v5803 = vsel %vm629, %v5738, 0
      %v5806 = vsel %vm629, %v5739, 0
      %v5809 = vsel %vm629, %v5740, 0
      %v5812 = vsel %vm629, %v5741, 0
      %v5815 = vsel %vm629, %v5742, 0
      %v5818 = vsel %vm629, %v5743, 0
      %v5821 = vsel %vm629, %v5744, 0
      %v5824 = vsel %vm629, %v5745, 0
      %v5827 = vsel %vm629, %v5746, 0
      %v5830 = vsel %vm629, %v5747, 0
      %v5833 = vsel %vm629, %v5748, 0
      %v5836 = vsel %vm629, %v5749, 0
      %v5839 = vsel %vm629, %v5750, 0
      %v5842 = vsel %vm629, %v5751, 0
      %v5845 = vsel %vm629, %v5752, 0
      %v5848 = vsel %vm629, %v5753, 0
      %v5851 = vsel %vm629, %v5754, 0
      %v5854 = vsel %vm629, %v5755, 0
      %5856 = vmatprep.subr.mxu0 0.0
      %5857 = vmatpush1.xpose.msra.mxu0 %v5761
      %5858 = vmatprep.subr.mxu0 0.0
      %5859 = vmatpush1.xpose.msra.mxu0 %v5764
      %5860 = vmatprep.subr.mxu0 0.0
      %5861 = vmatpush1.xpose.msra.mxu0 %v5767
      %5862 = vmatprep.subr.mxu0 0.0
      %5863 = vmatpush1.xpose.msra.mxu0 %v5770
      %5864 = vmatprep.subr.mxu0 0.0
      %5865 = vmatpush1.xpose.msra.mxu0 %v5773
      %5866 = vmatprep.subr.mxu0 0.0
      %5867 = vmatpush1.xpose.msra.mxu0 %v5776
      %5868 = vmatprep.subr.mxu0 0.0
      %5869 = vmatpush1.xpose.msra.mxu0 %v5779
      %5870 = vmatprep.subr.mxu0 0.0
      %5871 = vmatpush1.xpose.msra.mxu0 %v5782
      %5872 = vmatprep.subr.mxu0 0.0
      %5873 = vmatpush1.xpose.msra.mxu0 %v5785
      %5874 = vmatprep.subr.mxu0 0.0
      %5875 = vmatpush1.xpose.msra.mxu0 %v5788
      %5876 = vmatprep.subr.mxu0 0.0
      %5877 = vmatpush1.xpose.msra.mxu0 %v5791
      %5878 = vmatprep.subr.mxu0 0.0
      %5879 = vmatpush1.xpose.msra.mxu0 %v5794
      %5880 = vmatprep.subr.mxu0 0.0
      %5881 = vmatpush1.xpose.msra.mxu0 %v5797
      %5882 = vmatprep.subr.mxu0 0.0
      %5883 = vmatpush1.xpose.msra.mxu0 %v5800
      %5884 = vmatprep.subr.mxu0 0.0
      %5885 = vmatpush1.xpose.msra.mxu0 %v5803
      %5886 = vmatprep.subr.mxu0 0.0
      %5887 = vmatpush1.xpose.msra.mxu0 %v5806
      %5888 = vmatprep.subr.mxu0 0.0
      %5889 = vmatpush1.xpose.msra.mxu0 %v5809
      %5890 = vmatprep.subr.mxu0 0.0
      %5891 = vmatpush1.xpose.msra.mxu0 %v5812
      %5892 = vmatprep.subr.mxu0 0.0
      %5893 = vmatpush1.xpose.msra.mxu0 %v5815
      %5894 = vmatprep.subr.mxu0 0.0
      %5895 = vmatpush1.xpose.msra.mxu0 %v5818
      %5896 = vmatprep.subr.mxu0 0.0
      %5897 = vmatpush1.xpose.msra.mxu0 %v5821
      %5898 = vmatprep.subr.mxu0 0.0
      %5899 = vmatpush1.xpose.msra.mxu0 %v5824
      %5900 = vmatprep.subr.mxu0 0.0
      %5901 = vmatpush1.xpose.msra.mxu0 %v5827
      %5902 = vmatprep.subr.mxu0 0.0
      %5903 = vmatpush1.xpose.msra.mxu0 %v5830
      %5904 = vmatprep.subr.mxu0 0.0
      %5905 = vmatpush1.xpose.msra.mxu0 %v5833
      %5906 = vmatprep.subr.mxu0 0.0
      %5907 = vmatpush1.xpose.msra.mxu0 %v5836
      %5908 = vmatprep.subr.mxu0 0.0
      %5909 = vmatpush1.xpose.msra.mxu0 %v5839
      %5910 = vmatprep.subr.mxu0 0.0
      %5911 = vmatpush1.xpose.msra.mxu0 %v5842
      %5912 = vmatprep.subr.mxu0 0.0
      %5913 = vmatpush1.xpose.msra.mxu0 %v5845
      %5914 = vmatprep.subr.mxu0 0.0
      %5915 = vmatpush1.xpose.msra.mxu0 %v5848
      %5916 = vmatprep.subr.mxu0 0.0
      %5917 = vmatpush1.xpose.msra.mxu0 %v5851
      %5918 = vmatprep.subr.mxu0 0.0
      %5919 = vmatpush1.xpose.msra.mxu0 %v5854
      %5920 = vmatprep.mubr.f32.mxu0 0.0
      %5921 = vmatmul.mubr.f32.gmra.mrb[0].mxu0 %v5758
      %v5922 = vpop.f32.mrb[0].mxu0
      %v5923 = vadd.f32 %v4507, %v5922
      %v5924 = vpop.f32.mrb[0].mxu0
      %v5925 = vadd.f32 %v4507, %v5924
      %5926 = vdwg.mxu0
      %v5927 = vsub.f32 0.0, %v5923
      %v5928 = vsub.f32 0.0, %v5925
      %v5929 = vmul.f32 %v5927, 1.442695
      %v5930 = vpow.pop %v5929
      %v5931 = vmul.f32 %v5928, 1.442695
      %v5932 = vpow.pop %v5931
      %v5933 = vadd.f32 %v5930, 1.0
      %v5934 = vadd.f32 %v5932, 1.0
      %v5935 = vrcp.pop %v5933
      %v5936 = vrcp.pop %v5934
      %v5939 = vrot.slane %v5027, 7
      %v5940 = vrot.slane %v5028, 7
      %v5945 = vrot.slane %v5273, 6
      %v5946 = vrot.slane %v5274, 6
      %v5951 = vrot.slane %v5935, 5
      %v5952 = vrot.slane %v5936, 5
      %v5955 = vsel %vm2363, %v4686, %v5939
      %v5956 = vsel %vm2363, %v4687, %v5940
      %vm5957 = vcmask 1041408
      %v5958 = vsel %vm5957, %v5955, %v5945
      %v5959 = vsel %vm5957, %v5956, %v5946
      %vm5960 = vcmask 1042432
      %v5961 = vsel %vm5960, %v5958, %v5951
      %v5962 = vsel %vm5960, %v5959, %v5952
      %v5965 = vcombine.low %v5961, %v5962
      %5967 = vst [vmem:[%s388] sm:$0xff] %v5965
      %p5968 = scmp.lt.s32.totalorder %s24, 1
      %s5969 = scalar_select %p5968, %s24, 1
      %s5970 = smul.addr %s5969, 2
      %s5971 = smul.addr %s5970, 4
      %s5972 = scalar_lea.vmem %s11, %s5971
      // Predicated region
      $region65: #{decoder_forward.1} parent=63 // pred_check
        %p5973 = pneg %p278
      $region66: #{decoder_forward.1} parent=63 // pred_check_branch
        %5975 = sbr.rel (%p5973) target = $region68
      $region67: #{decoder_forward.1} parent=63 // pred_region
        _
      $region68: #{decoder_forward.1} parent=63 // pred_fallthru
        _
    $region64: #{decoder_forward.1} parent=5 // pred_fallthru
      _
    %p5976 = scmp.le.s32.totalorder 2, %s19
    // Predicated region
    $region69: #{decoder_forward.1} parent=5 // pred_check
      %p5977 = pneg %p5976
    $region70: #{decoder_forward.1} parent=5 // pred_check_branch
      %5979 = sbr.rel (%p5977) target = $region72
    $region71: #{decoder_forward.1} parent=5 // pred_region
      %s5980 = ssub.s32 %s19, 2
      // Predicated region
      $region73: #{decoder_forward.1} parent=71 // pred_check
        %p5981 = pneg %p284
      $region74: #{decoder_forward.1} parent=71 // pred_check_branch
        %5983 = sbr.rel (%p5981) target = $region76
      $region75: #{decoder_forward.1} parent=71 // pred_region
        %p5984 = scmp.lt.s32.totalorder %s25, 1
        %s5985 = scalar_select %p5984, %s25, 1
        %s5986 = smul.addr %s5985, 2
        %s5987 = smul.addr %s5986, 4
        %s5988 = scalar_lea.vmem %s11, %s5987
      $region76: #{decoder_forward.1} parent=71 // pred_fallthru
        _
    $region72: #{decoder_forward.1} parent=5 // pred_fallthru
      _
  $region6: #{decoder_forward.1} parent=0 // loop_footer
    %s23 = sadd.s32 1, %s19
  $region7: #{decoder_forward.1} parent=0 // loop_footer_branch
    %18 = sbr.rel target = $region3
  $region8: #{decoder_forward.1} parent=0 // loop_exit
    _

</llo_original>
